<compile_context>
chip_gen: v5e
topology: v5e:2x2
jax: 0.10.0
libtpu: 0.0.40
codegen_flags: <defaults>
</compile_context>

<pallas_src>
import functools
import math

import jax
import jax.numpy as jnp
from jax import lax
from jax.experimental import pallas as pl
from jax.experimental.pallas import tpu as pltpu


# ---------------------------------------------------------------------------
# Pallas kernel: full MFN chain for a lane-dense stripe of tm coordinate points.
# Everything runs in (features, points) layout. All weights are tiny and fully
# VMEM-resident. The stripe is processed in tc-lane sub-chunks so live vreg
# footprint stays small while the grid-level DMA tile stays large.
# ---------------------------------------------------------------------------
def mfn_kernel(x_ref, fwT_ref, fbT_ref, lwT_ref, lbT_ref, owT_ref, obT_ref,
               o_ref, *, n_layers, hidden, d_in, output_act, tc, n_chunks,
               matmul_dtype):

    def chunk(c, carry):
        off = c * tc
        if not isinstance(off, int):
            off = pl.multiple_of(off, tc)
        xc = x_ref[:, pl.ds(off, tc)].astype(jnp.float32)          # (Din, tc)

        # Filter pre-activation for ALL filters at once: (F*H, tc).
        # Din is tiny, so use VPU broadcast FMAs instead of a K=Din MXU
        # contraction (exact f32, frees the MXU for the hidden linears).
        if d_in <= 8:
            pre = fbT_ref[...] + fwT_ref[:, 0:1] * xc[0:1, :]
            for d in range(1, d_in):
                pre = pre + fwT_ref[:, d:d + 1] * xc[d:d + 1, :]
        else:
            pre = (jnp.dot(fwT_ref[...], xc,
                           preferred_element_type=jnp.float32)
                   + fbT_ref[...])
        filt_all = jnp.sin(pre)                                     # (F*H, tc)

        # out = filters[0](coords)
        out = filt_all[:hidden, :]                                  # (H, tc)

        # out = filters[i](coords) * linear[i-1](out)
        for i in range(1, n_layers + 1):
            lin = (jnp.dot(lwT_ref[i - 1].astype(matmul_dtype),
                           out.astype(matmul_dtype),
                           preferred_element_type=jnp.float32)
                   + lbT_ref[i - 1])                                # (H, tc)
            out = filt_all[i * hidden:(i + 1) * hidden, :] * lin

        # out = output_linear(out)   -> (O, tc), lane-dense store
        y = (jnp.dot(owT_ref[...].astype(matmul_dtype),
                     out.astype(matmul_dtype),
                     preferred_element_type=jnp.float32)
             + obT_ref[...])
        if output_act:
            y = jnp.sin(y)
        o_ref[:, pl.ds(off, tc)] = y.astype(o_ref.dtype)
        return carry

    if n_chunks == 1:
        chunk(0, 0)
    else:
        lax.fori_loop(0, n_chunks, chunk, 0)


def _round_up(x, m):
    return ((x + m - 1) // m) * m


def _pick_tiling(n, tm_max=2048):
    """Pick (tm, n_steps): tm big enough to amortize ~0.35us/step, n_steps even
    so v7x's two TensorCores split the parallel grid axis evenly. VMEM is never
    the limiter for this kernel (weights are tiny, stripes are a few 10s of KiB),
    so tm is sized purely for overhead amortization and TC balance."""
    if n <= 128:
        return 128, 1
    steps = 2 * max(1, -(-n // (2 * tm_max)))          # even step count
    tm = min(tm_max, _round_up(-(-n // steps), 128))   # multiple of 128
    return tm, steps


# ---------------------------------------------------------------------------
# One-time weight repack into the transposed / fused kernel layout.
# (Hoisted out of the per-call path.)
# ---------------------------------------------------------------------------
def pack_params(params):
    fw, fb = params["filt_w"], params["filt_b"]          # (F, Din, H), (F, 1, H)
    lw, lb = params["lin_w"], params["lin_b"]            # (L, H, H),   (L, 1, H)
    ow, ob = params["out_w"], params["out_b"]            # (H, O),      (1, O)
    n_filters, d_in, hidden = fw.shape
    return {
        "fwT": jnp.transpose(fw, (0, 2, 1)).reshape(n_filters * hidden, d_in),
        "fbT": fb.reshape(n_filters * hidden, 1),
        "lwT": jnp.transpose(lw, (0, 2, 1)),             # lwT[l] = lw[l]^T
        "lbT": jnp.transpose(lb, (0, 2, 1)),             # (L, H, 1)
        "owT": ow.T,                                     # (O, H)
        "obT": ob.T,                                     # (O, 1)
        "hidden": hidden,
        "n_layers": lw.shape[0],
        "d_in": d_in,
        "out_size": ow.shape[-1],
    }


def mfn_forward_t(coords_t, packed, *, output_act=False, use_bf16_matmul=True,
                  tm=2048):
    """Transposed entry point: coords_t is (Din, n_pad) with n_pad % tm == 0 and
    tm % 128 == 0; returns (out_size, n_pad). No wrapper-side HBM passes."""
    d_in, n_pad = coords_t.shape
    assert tm % 128 == 0 and n_pad % tm == 0
    hidden, n_layers = packed["hidden"], packed["n_layers"]
    out_size = packed["out_size"]
    assert packed["d_in"] == d_in

    tc = 256 if tm % 256 == 0 else 128
    kernel = functools.partial(
        mfn_kernel, n_layers=n_layers, hidden=hidden, d_in=d_in,
        output_act=output_act, tc=tc, n_chunks=tm // tc,
        matmul_dtype=jnp.bfloat16 if use_bf16_matmul else jnp.float32)

    def full(arr):
        nd = arr.ndim
        return pl.BlockSpec(arr.shape, lambda i, _nd=nd: (0,) * _nd)

    fwT, fbT = packed["fwT"], packed["fbT"]
    lwT, lbT = packed["lwT"], packed["lbT"]
    owT, obT = packed["owT"], packed["obT"]

    return pl.pallas_call(
        kernel,
        out_shape=jax.ShapeDtypeStruct((out_size, n_pad), jnp.float32),
        grid_spec=pltpu.PrefetchScalarGridSpec(
            num_scalar_prefetch=0,
            grid=(n_pad // tm,),
            in_specs=[
                pl.BlockSpec((d_in, tm), lambda i: (0, i)),   # coords stripe
                full(fwT), full(fbT),                          # packed filters
                full(lwT), full(lbT),                          # hidden linears
                full(owT), full(obT),                          # output linear
            ],
            out_specs=pl.BlockSpec((out_size, tm), lambda i: (0, i)),
        ),
        compiler_params=pltpu.CompilerParams(
            dimension_semantics=("parallel",)),
    )(coords_t, fwT, fbT, lwT, lbT, owT, obT)


def mfn_forward(coords, packed, *, output_act=False, use_bf16_matmul=True,
                tm_max=2048):
    """coords: (N, Din) float32; returns (N, out_size) (module contract)."""
    n, _ = coords.shape
    tm, steps = _pick_tiling(n, tm_max)
    n_pad = tm * steps
    # TODO(synk): the pad/transpose passes here (and the final slice/transpose)
    # could be removed entirely by handling the ragged last tile in-kernel and
    # letting the consumer take the (out_size, N) layout (see mfn_forward_t).
    coords_t = jnp.pad(coords.T.astype(jnp.float32), ((0, 0), (0, n_pad - n)))
    out_t = mfn_forward_t(coords_t, packed, output_act=output_act,
                          use_bf16_matmul=use_bf16_matmul, tm=tm)
    return out_t[:, :n].T


# ---------------------------------------------------------------------------
# Deterministic parameter init, mirroring mfn_weights_init + nn.Linear defaults.
#   mfn_weights_init: weight ~ U(-sqrt(6/fan_in), sqrt(6/fan_in))
#   bias (untouched by mfn_weights_init): nn.Linear default U(-1/sqrt(fan_in), 1/sqrt(fan_in))
# ---------------------------------------------------------------------------
def init_params(key, in_size, hidden_size, out_size, n_layers, weight_scale):
    n_filters = n_layers + 1

    def linear_init(k, fan_in, fan_out, w_bound, b_bound):
        kw, kb = jax.random.split(k)
        w = jax.random.uniform(kw, (fan_out, fan_in), jnp.float32, -w_bound, w_bound)
        b = jax.random.uniform(kb, (fan_out,), jnp.float32, -b_bound, b_bound)
        return w.T, b  # store as (in, out)

    keys = jax.random.split(key, n_filters + n_layers + 1)

    scale = weight_scale / math.sqrt(n_filters)
    fws, fbs = [], []
    for i in range(n_filters):
        w, b = linear_init(keys[i], in_size, hidden_size,
                           math.sqrt(6.0 / in_size), 1.0 / math.sqrt(in_size))
        fws.append(w * scale)
        fbs.append(b)
    filt_w = jnp.stack(fws)                       # (F, in, H)
    filt_b = jnp.stack(fbs)[:, None, :]           # (F, 1, H)

    lws, lbs = [], []
    for i in range(n_layers):
        w, b = linear_init(keys[n_filters + i], hidden_size, hidden_size,
                           math.sqrt(6.0 / hidden_size), 1.0 / math.sqrt(hidden_size))
        lws.append(w)
        lbs.append(b)
    lin_w = jnp.stack(lws)                        # (L, H, H)
    lin_b = jnp.stack(lbs)[:, None, :]            # (L, 1, H)

    ow, ob = linear_init(keys[-1], hidden_size, out_size,
                         math.sqrt(6.0 / hidden_size), 1.0 / math.sqrt(hidden_size))

    return {
        "filt_w": filt_w, "filt_b": filt_b,
        "lin_w": lin_w, "lin_b": lin_b,
        "out_w": ow, "out_b": ob[None, :],        # (1, O)
    }


def mfn_apply(model_input, packed, *, output_act=False, use_bf16_matmul=True):
    """Mirrors MFNBase.forward's dict-in / dict-out contract."""
    coords = model_input["coords"]
    out = mfn_forward(coords, packed, output_act=output_act,
                      use_bf16_matmul=use_bf16_matmul)
    return {"model_in": dict(model_input), "model_out": {"output": out}}


def _reference(coords, params, output_act):
    fw, fb = params["filt_w"], params["filt_b"]
    lw, lb = params["lin_w"], params["lin_b"]
    out = jnp.sin(coords @ fw[0] + fb[0])
    for i in range(1, fw.shape[0]):
        out = jnp.sin(coords @ fw[i] + fb[i]) * (out @ lw[i - 1] + lb[i - 1])
    y = out @ params["out_w"] + params["out_b"]
    return jnp.sin(y) if output_act else y


if __name__ == "__main__":
    key = jax.random.PRNGKey(0)
    k_coords, k_params = jax.random.split(key)

    # Small shapes: 300 coordinate points (exercises the pad path) of dim 2,
    # hidden 32, 3 layers (-> 4 filters, F*H = 128), out 3.
    N, in_size, hidden, out_size, n_layers = 300, 2, 32, 3, 3
    weight_scale = 1.0
    output_act = False

    coords = jax.random.uniform(k_coords, (N, in_size), jnp.float32, -1.0, 1.0)
    params = init_params(k_params, in_size, hidden, out_size, n_layers, weight_scale)
    packed = pack_params(params)          # one-time repack (hoisted out of forward)

    ref = _reference(coords, params, output_act)

    # 1) strict-accuracy path: all matmuls in f32 (VPU filter path is exact f32).
    out_f32 = jax.block_until_ready(
        mfn_forward(coords, packed, output_act=output_act, use_bf16_matmul=False))
    assert out_f32.shape == (N, out_size)
    assert jnp.allclose(out_f32, ref, atol=1e-4, rtol=1e-4), "f32 path mismatch"

    # 2) default fast path: bf16 operands on the hidden/output linears
    #    (f32 accumulation); looser tolerance reflects bf16 operand rounding.
    result = mfn_apply({"coords": coords}, packed, output_act=output_act)
    out = jax.block_until_ready(result["model_out"]["output"])
    assert out.shape == (N, out_size)
    assert jnp.allclose(out, ref, atol=5e-2, rtol=5e-2), "bf16 path mismatch"

    print("KERNEL_OK")
</pallas_src>

<mosaic_0001>
module attributes {stable_mosaic.version = 11 : i64} {
  func.func @mfn_kernel(%arg0: i32, %arg1: memref<2x256xf32, #tpu.memory_space<vmem>>, %arg2: memref<128x2xf32, #tpu.memory_space<vmem>>, %arg3: memref<128x1xf32, #tpu.memory_space<vmem>>, %arg4: memref<3x32x32xf32, #tpu.memory_space<vmem>>, %arg5: memref<3x32x1xf32, #tpu.memory_space<vmem>>, %arg6: memref<3x32xf32, #tpu.memory_space<vmem>>, %arg7: memref<3x1xf32, #tpu.memory_space<vmem>>, %arg8: memref<3x256xf32, #tpu.memory_space<vmem>>) attributes {dimension_semantics = [#tpu.dimension_semantics<parallel>], iteration_bounds = array<i64: 2>, scalar_prefetch = 0 : i64, scratch_operands = 0 : i64, tpu.core_type = #tpu.core_type<tc>, window_params = [{transform_indices = @transform_0, window_bounds = array<i64: 2, 256>}, {pipeline_mode = #tpu.pipeline_mode<synchronous>, transform_indices = @transform_1, window_bounds = array<i64: 128, 2>}, {pipeline_mode = #tpu.pipeline_mode<synchronous>, transform_indices = @transform_2, window_bounds = array<i64: 128, 1>}, {pipeline_mode = #tpu.pipeline_mode<synchronous>, transform_indices = @transform_3, window_bounds = array<i64: 3, 32, 32>}, {pipeline_mode = #tpu.pipeline_mode<synchronous>, transform_indices = @transform_4, window_bounds = array<i64: 3, 32, 1>}, {pipeline_mode = #tpu.pipeline_mode<synchronous>, transform_indices = @transform_5, window_bounds = array<i64: 3, 32>}, {pipeline_mode = #tpu.pipeline_mode<synchronous>, transform_indices = @transform_6, window_bounds = array<i64: 3, 1>}, {transform_indices = @transform_7, window_bounds = array<i64: 3, 256>}]} {
    %c0 = arith.constant 0 : index
    %c0_0 = arith.constant 0 : index
    %0 = vector.load %arg1[%c0, %c0_0] : memref<2x256xf32, #tpu.memory_space<vmem>>, vector<2x256xf32>
    %c0_1 = arith.constant 0 : index
    %c0_2 = arith.constant 0 : index
    %1 = vector.load %arg3[%c0_1, %c0_2] : memref<128x1xf32, #tpu.memory_space<vmem>>, vector<128x1xf32>
    %c0_3 = arith.constant 0 : index
    %c0_4 = arith.constant 0 : index
    %2 = vector.load %arg2[%c0_3, %c0_4] : memref<128x2xf32, #tpu.memory_space<vmem>>, vector<128x1xf32>
    %3 = vector.extract_strided_slice %0 {offsets = [0, 0], sizes = [1, 256], strides = [1, 1]} : vector<2x256xf32> to vector<1x256xf32>
    %4 = vector.broadcast %2 : vector<128x1xf32> to vector<128x256xf32>
    %5 = vector.broadcast %3 : vector<1x256xf32> to vector<128x256xf32>
    %6 = arith.mulf %4, %5 : vector<128x256xf32>
    %7 = vector.broadcast %1 : vector<128x1xf32> to vector<128x256xf32>
    %8 = arith.addf %7, %6 : vector<128x256xf32>
    %c0_5 = arith.constant 0 : index
    %c1 = arith.constant 1 : index
    %9 = vector.load %arg2[%c0_5, %c1] : memref<128x2xf32, #tpu.memory_space<vmem>>, vector<128x1xf32>
    %10 = vector.extract_strided_slice %0 {offsets = [1, 0], sizes = [1, 256], strides = [1, 1]} : vector<2x256xf32> to vector<1x256xf32>
    %11 = vector.broadcast %9 : vector<128x1xf32> to vector<128x256xf32>
    %12 = vector.broadcast %10 : vector<1x256xf32> to vector<128x256xf32>
    %13 = arith.mulf %11, %12 : vector<128x256xf32>
    %14 = arith.addf %8, %13 : vector<128x256xf32>
    %15 = math.sin %14 : vector<128x256xf32>
    %16 = vector.extract_strided_slice %15 {offsets = [0, 0], sizes = [32, 256], strides = [1, 1]} : vector<128x256xf32> to vector<32x256xf32>
    %c0_6 = arith.constant 0 : index
    %c0_7 = arith.constant 0 : index
    %c0_8 = arith.constant 0 : index
    %17 = vector.load %arg4[%c0_6, %c0_7, %c0_8] : memref<3x32x32xf32, #tpu.memory_space<vmem>>, vector<1x32x32xf32>
    %18 = vector.shape_cast %17 : vector<1x32x32xf32> to vector<32x32xf32>
    %cst = arith.constant dense<0.000000e+00> : vector<32x256xf32>
    %19 = tpu.matmul %18, %16, %cst {dimension_numbers = #tpu.dot_dimension_numbers<[1], [0], [0], [1], [0, 0, 1, 1], [], []>} : vector<32x32xf32>, vector<32x256xf32>, vector<32x256xf32> -> vector<32x256xf32>
    %c0_9 = arith.constant 0 : index
    %c0_10 = arith.constant 0 : index
    %c0_11 = arith.constant 0 : index
    %20 = vector.load %arg5[%c0_9, %c0_10, %c0_11] : memref<3x32x1xf32, #tpu.memory_space<vmem>>, vector<1x32x1xf32>
    %21 = vector.shape_cast %20 : vector<1x32x1xf32> to vector<32x1xf32>
    %22 = vector.broadcast %21 : vector<32x1xf32> to vector<32x256xf32>
    %23 = arith.addf %19, %22 : vector<32x256xf32>
    %24 = vector.extract_strided_slice %15 {offsets = [32, 0], sizes = [32, 256], strides = [1, 1]} : vector<128x256xf32> to vector<32x256xf32>
    %25 = arith.mulf %24, %23 : vector<32x256xf32>
    %c1_12 = arith.constant 1 : index
    %c0_13 = arith.constant 0 : index
    %c0_14 = arith.constant 0 : index
    %26 = vector.load %arg4[%c1_12, %c0_13, %c0_14] : memref<3x32x32xf32, #tpu.memory_space<vmem>>, vector<1x32x32xf32>
    %27 = vector.shape_cast %26 : vector<1x32x32xf32> to vector<32x32xf32>
    %cst_15 = arith.constant dense<0.000000e+00> : vector<32x256xf32>
    %28 = tpu.matmul %27, %25, %cst_15 {dimension_numbers = #tpu.dot_dimension_numbers<[1], [0], [0], [1], [0, 0, 1, 1], [], []>} : vector<32x32xf32>, vector<32x256xf32>, vector<32x256xf32> -> vector<32x256xf32>
    %c1_16 = arith.constant 1 : index
    %c0_17 = arith.constant 0 : index
    %c0_18 = arith.constant 0 : index
    %29 = vector.load %arg5[%c1_16, %c0_17, %c0_18] : memref<3x32x1xf32, #tpu.memory_space<vmem>>, vector<1x32x1xf32>
    %30 = vector.shape_cast %29 : vector<1x32x1xf32> to vector<32x1xf32>
    %31 = vector.broadcast %30 : vector<32x1xf32> to vector<32x256xf32>
    %32 = arith.addf %28, %31 : vector<32x256xf32>
    %33 = vector.extract_strided_slice %15 {offsets = [64, 0], sizes = [32, 256], strides = [1, 1]} : vector<128x256xf32> to vector<32x256xf32>
    %34 = arith.mulf %33, %32 : vector<32x256xf32>
    %c2 = arith.constant 2 : index
    %c0_19 = arith.constant 0 : index
    %c0_20 = arith.constant 0 : index
    %35 = vector.load %arg4[%c2, %c0_19, %c0_20] : memref<3x32x32xf32, #tpu.memory_space<vmem>>, vector<1x32x32xf32>
    %36 = vector.shape_cast %35 : vector<1x32x32xf32> to vector<32x32xf32>
    %cst_21 = arith.constant dense<0.000000e+00> : vector<32x256xf32>
    %37 = tpu.matmul %36, %34, %cst_21 {dimension_numbers = #tpu.dot_dimension_numbers<[1], [0], [0], [1], [0, 0, 1, 1], [], []>} : vector<32x32xf32>, vector<32x256xf32>, vector<32x256xf32> -> vector<32x256xf32>
    %c2_22 = arith.constant 2 : index
    %c0_23 = arith.constant 0 : index
    %c0_24 = arith.constant 0 : index
    %38 = vector.load %arg5[%c2_22, %c0_23, %c0_24] : memref<3x32x1xf32, #tpu.memory_space<vmem>>, vector<1x32x1xf32>
    %39 = vector.shape_cast %38 : vector<1x32x1xf32> to vector<32x1xf32>
    %40 = vector.broadcast %39 : vector<32x1xf32> to vector<32x256xf32>
    %41 = arith.addf %37, %40 : vector<32x256xf32>
    %42 = vector.extract_strided_slice %15 {offsets = [96, 0], sizes = [32, 256], strides = [1, 1]} : vector<128x256xf32> to vector<32x256xf32>
    %43 = arith.mulf %42, %41 : vector<32x256xf32>
    %c0_25 = arith.constant 0 : index
    %c0_26 = arith.constant 0 : index
    %44 = vector.load %arg6[%c0_25, %c0_26] : memref<3x32xf32, #tpu.memory_space<vmem>>, vector<3x32xf32>
    %cst_27 = arith.constant dense<0.000000e+00> : vector<3x256xf32>
    %45 = tpu.matmul %44, %43, %cst_27 {dimension_numbers = #tpu.dot_dimension_numbers<[1], [0], [0], [1], [0, 0, 1, 1], [], []>} : vector<3x32xf32>, vector<32x256xf32>, vector<3x256xf32> -> vector<3x256xf32>
    %c0_28 = arith.constant 0 : index
    %c0_29 = arith.constant 0 : index
    %46 = vector.load %arg7[%c0_28, %c0_29] : memref<3x1xf32, #tpu.memory_space<vmem>>, vector<3x1xf32>
    %47 = vector.broadcast %46 : vector<3x1xf32> to vector<3x256xf32>
    %48 = arith.addf %45, %47 : vector<3x256xf32>
    %c0_30 = arith.constant 0 : index
    %c0_31 = arith.constant 0 : index
    %49 = vector.load %arg8[%c0_30, %c0_31] : memref<3x256xf32, #tpu.memory_space<vmem>>, vector<3x256xf32>
    tpu.vector_store %arg8[%c0_30, %c0_31], %48 {strides = array<i32>} : memref<3x256xf32, #tpu.memory_space<vmem>>, vector<3x256xf32>,
    return
  }
  func.func @transform_0(%arg0: i32) -> (i32, i32) {
    %c0_i32 = arith.constant 0 : i32
    %c0_i32_0 = arith.constant 0 : i32
    return %c0_i32, %arg0 : i32, i32
  }
  func.func @transform_1(%arg0: i32) -> (i32, i32) {
    %c0_i32 = arith.constant 0 : i32
    %c0_i32_0 = arith.constant 0 : i32
    %c0_i32_1 = arith.constant 0 : i32
    return %c0_i32, %c0_i32_0 : i32, i32
  }
  func.func @transform_2(%arg0: i32) -> (i32, i32) {
    %c0_i32 = arith.constant 0 : i32
    %c0_i32_0 = arith.constant 0 : i32
    %c0_i32_1 = arith.constant 0 : i32
    return %c0_i32, %c0_i32_0 : i32, i32
  }
  func.func @transform_3(%arg0: i32) -> (i32, i32, i32) {
    %c0_i32 = arith.constant 0 : i32
    %c0_i32_0 = arith.constant 0 : i32
    %c0_i32_1 = arith.constant 0 : i32
    %c0_i32_2 = arith.constant 0 : i32
    return %c0_i32, %c0_i32_0, %c0_i32_1 : i32, i32, i32
  }
  func.func @transform_4(%arg0: i32) -> (i32, i32, i32) {
    %c0_i32 = arith.constant 0 : i32
    %c0_i32_0 = arith.constant 0 : i32
    %c0_i32_1 = arith.constant 0 : i32
    %c0_i32_2 = arith.constant 0 : i32
    return %c0_i32, %c0_i32_0, %c0_i32_1 : i32, i32, i32
  }
  func.func @transform_5(%arg0: i32) -> (i32, i32) {
    %c0_i32 = arith.constant 0 : i32
    %c0_i32_0 = arith.constant 0 : i32
    %c0_i32_1 = arith.constant 0 : i32
    return %c0_i32, %c0_i32_0 : i32, i32
  }
  func.func @transform_6(%arg0: i32) -> (i32, i32) {
    %c0_i32 = arith.constant 0 : i32
    %c0_i32_0 = arith.constant 0 : i32
    %c0_i32_1 = arith.constant 0 : i32
    return %c0_i32, %c0_i32_0 : i32, i32
  }
  func.func @transform_7(%arg0: i32) -> (i32, i32) {
    %c0_i32 = arith.constant 0 : i32
    %c0_i32_0 = arith.constant 0 : i32
    return %c0_i32, %arg0 : i32, i32
  }
}

</mosaic_0001>

<llo_original>
// kernel: tpu_custom_call.1
$region0: #{tpu_custom_call.1}
  #allocation0 [shape = 'u32[]', space=smem, size = 0x4, offset = 0x4, fixed_abs, tag = 'smem constant byte address 0x4 - core index']
  #allocation1 [shape = 'u32[72,128]{1,0:T(1,128)}', space=vmem, size = 0x9000, scoped, tag = 'internal scratch']
  %s0 = inlined_call_operand.vmem [shape: f32[2,512], index: 0, kind: input, shape index: {}]
  %s1 = inlined_call_operand.vmem [shape: f32[128,2], index: 1, kind: input, shape index: {}]
  %s2 = inlined_call_operand.vmem [shape: f32[128,1], index: 2, kind: input, shape index: {}]
  %s3 = inlined_call_operand.vmem [shape: f32[3,32,32], index: 3, kind: input, shape index: {}]
  %s4 = inlined_call_operand.vmem [shape: f32[3,32,1], index: 4, kind: input, shape index: {}]
  %s5 = inlined_call_operand.vmem [shape: f32[3,32], index: 5, kind: input, shape index: {}]
  %s6 = inlined_call_operand.vmem [shape: f32[3,1], index: 6, kind: input, shape index: {}]
  %s7 = inlined_call_operand.hbm [shape: f32[3,512], index: 7, kind: output, shape index: {}]
  %s8 = sld [smem:[#allocation0]]
  $region61: #{tpu_custom_call.1} parent=0
    _
  %s10 = ssub.s32 1, %s8
  %s11 = scalar_select 0, %s10, %s8
  $region1: #{tpu_custom_call.1} parent=0
    #allocation2 [shape = 'u8[8192]{0}', space=vmem, size = 0x2000, scoped, tag = 'output window, operand 0']
    #allocation3 [shape = 's32[2]{0}', space=sflag, size = 0x8, scoped, tag = 'scoped memory for tpu_custom_call.1']
    %12 = vsyncpa [#allocation3], 0
    %s13 = scalar_lea.sflag [#allocation3], 1
    %14 = vsyncpa %s13, 0
    loop: start=0, step=1, limit=4
    $region2: #{tpu_custom_call.1} parent=1 // loop_pre_header
      _
    $region3: #{tpu_custom_call.1} parent=1 // loop_header
      %s16 = sphi 0, %s20
      %p17 = scmp.ge.s32.totalorder %s16, 4
      %s26 = sphi 0, %s28
      %s29 = sphi 0, %s26
      %s30 = sphi 0, %s29
      %s46 = sphi 0, %s30
      %s50 = sphi 0, %s50
      %s52 = sphi 0, %s50
      %s53 = sphi 0, %s52
      %s67 = sphi 0, %s53
      %s71 = sphi 0, %s71
      %s73 = sphi 0, %s71
      %s74 = sphi 0, %s73
      %s88 = sphi 0, %s74
      %s92 = sphi 0, %s92
      %s94 = sphi 0, %s92
      %s95 = sphi 0, %s94
      %s109 = sphi 0, %s95
      %s113 = sphi 0, %s113
      %s115 = sphi 0, %s113
      %s116 = sphi 0, %s115
      %s130 = sphi 0, %s116
      %s134 = sphi 0, %s134
      %s136 = sphi 0, %s134
      %s137 = sphi 0, %s136
      %s151 = sphi 0, %s137
      %s155 = sphi 0, %s155
      %s157 = sphi 0, %s155
      %s158 = sphi 0, %s157
      %s172 = sphi 0, %s158
      %s178 = sphi 0, %s180
      %s181 = sphi 0, %s178
      %s182 = sphi 0, %s181
      %s198 = sphi 0, %s182
    $region4: #{tpu_custom_call.1} parent=1 // loop_header_branch
      %19 = sbr.rel (%p17) target = $region8
    $region5: #{tpu_custom_call.1} parent=1 // loop_body
      %s21 = ssub.s32 %s16, 1
      %s22 = ssub.s32 %s16, 2
      %s23 = sadd.s32 %s16, 1
      %s24 = ssub.s32 %s16, %s23
      %p25 = scmp.eq.s32.totalorder %s24, 0
      %s27 = sadd.s32 %s26, 1
      %s28 = scalar_select %p25, %s26, %s27
      %p31 = pneg %p25
      %p32 = scmp.eq.s32.totalorder %s16, 1
      %p33 = por %p31, %p32
      %p34 = scmp.ne.s32.totalorder %s26, %s29
      %p35 = scmp.eq.s32.totalorder %s16, 0
      %p36 = por %p34, %p35
      %p37 = scmp.ne.s32.totalorder %s26, %s29
      %p38 = scmp.eq.s32.totalorder %s21, 1
      %p39 = por %p37, %p38
      %p40 = scmp.ne.s32.totalorder %s29, %s30
      %p41 = scmp.eq.s32.totalorder %s21, 0
      %p42 = por %p40, %p41
      %p43 = scmp.ne.s32.totalorder %s29, %s30
      %p44 = scmp.eq.s32.totalorder %s22, 1
      %p45 = por %p43, %p44
      %p47 = scmp.ne.s32.totalorder %s30, %s46
      %p48 = scmp.eq.s32.totalorder %s22, 0
      %p49 = por %p47, %p48
      %s51 = sadd.s32 %s50, 1
      %p54 = scmp.eq.s32.totalorder %s16, 1
      %p55 = scmp.ne.s32.totalorder %s50, %s52
      %p56 = scmp.eq.s32.totalorder %s16, 0
      %p57 = por %p55, %p56
      %p58 = scmp.ne.s32.totalorder %s50, %s52
      %p59 = scmp.eq.s32.totalorder %s21, 1
      %p60 = por %p58, %p59
      %p61 = scmp.ne.s32.totalorder %s52, %s53
      %p62 = scmp.eq.s32.totalorder %s21, 0
      %p63 = por %p61, %p62
      %p64 = scmp.ne.s32.totalorder %s52, %s53
      %p65 = scmp.eq.s32.totalorder %s22, 1
      %p66 = por %p64, %p65
      %p68 = scmp.ne.s32.totalorder %s53, %s67
      %p69 = scmp.eq.s32.totalorder %s22, 0
      %p70 = por %p68, %p69
      %s72 = sadd.s32 %s71, 1
      %p75 = scmp.eq.s32.totalorder %s16, 1
      %p76 = scmp.ne.s32.totalorder %s71, %s73
      %p77 = scmp.eq.s32.totalorder %s16, 0
      %p78 = por %p76, %p77
      %p79 = scmp.ne.s32.totalorder %s71, %s73
      %p80 = scmp.eq.s32.totalorder %s21, 1
      %p81 = por %p79, %p80
      %p82 = scmp.ne.s32.totalorder %s73, %s74
      %p83 = scmp.eq.s32.totalorder %s21, 0
      %p84 = por %p82, %p83
      %p85 = scmp.ne.s32.totalorder %s73, %s74
      %p86 = scmp.eq.s32.totalorder %s22, 1
      %p87 = por %p85, %p86
      %p89 = scmp.ne.s32.totalorder %s74, %s88
      %p90 = scmp.eq.s32.totalorder %s22, 0
      %p91 = por %p89, %p90
      %s93 = sadd.s32 %s92, 1
      %p96 = scmp.eq.s32.totalorder %s16, 1
      %p97 = scmp.ne.s32.totalorder %s92, %s94
      %p98 = scmp.eq.s32.totalorder %s16, 0
      %p99 = por %p97, %p98
      %p100 = scmp.ne.s32.totalorder %s92, %s94
      %p101 = scmp.eq.s32.totalorder %s21, 1
      %p102 = por %p100, %p101
      %p103 = scmp.ne.s32.totalorder %s94, %s95
      %p104 = scmp.eq.s32.totalorder %s21, 0
      %p105 = por %p103, %p104
      %p106 = scmp.ne.s32.totalorder %s94, %s95
      %p107 = scmp.eq.s32.totalorder %s22, 1
      %p108 = por %p106, %p107
      %p110 = scmp.ne.s32.totalorder %s95, %s109
      %p111 = scmp.eq.s32.totalorder %s22, 0
      %p112 = por %p110, %p111
      %s114 = sadd.s32 %s113, 1
      %p117 = scmp.eq.s32.totalorder %s16, 1
      %p118 = scmp.ne.s32.totalorder %s113, %s115
      %p119 = scmp.eq.s32.totalorder %s16, 0
      %p120 = por %p118, %p119
      %p121 = scmp.ne.s32.totalorder %s113, %s115
      %p122 = scmp.eq.s32.totalorder %s21, 1
      %p123 = por %p121, %p122
      %p124 = scmp.ne.s32.totalorder %s115, %s116
      %p125 = scmp.eq.s32.totalorder %s21, 0
      %p126 = por %p124, %p125
      %p127 = scmp.ne.s32.totalorder %s115, %s116
      %p128 = scmp.eq.s32.totalorder %s22, 1
      %p129 = por %p127, %p128
      %p131 = scmp.ne.s32.totalorder %s116, %s130
      %p132 = scmp.eq.s32.totalorder %s22, 0
      %p133 = por %p131, %p132
      %s135 = sadd.s32 %s134, 1
      %p138 = scmp.eq.s32.totalorder %s16, 1
      %p139 = scmp.ne.s32.totalorder %s134, %s136
      %p140 = scmp.eq.s32.totalorder %s16, 0
      %p141 = por %p139, %p140
      %p142 = scmp.ne.s32.totalorder %s134, %s136
      %p143 = scmp.eq.s32.totalorder %s21, 1
      %p144 = por %p142, %p143
      %p145 = scmp.ne.s32.totalorder %s136, %s137
      %p146 = scmp.eq.s32.totalorder %s21, 0
      %p147 = por %p145, %p146
      %p148 = scmp.ne.s32.totalorder %s136, %s137
      %p149 = scmp.eq.s32.totalorder %s22, 1
      %p150 = por %p148, %p149
      %p152 = scmp.ne.s32.totalorder %s137, %s151
      %p153 = scmp.eq.s32.totalorder %s22, 0
      %p154 = por %p152, %p153
      %s156 = sadd.s32 %s155, 1
      %p159 = scmp.eq.s32.totalorder %s16, 1
      %p160 = scmp.ne.s32.totalorder %s155, %s157
      %p161 = scmp.eq.s32.totalorder %s16, 0
      %p162 = por %p160, %p161
      %p163 = scmp.ne.s32.totalorder %s155, %s157
      %p164 = scmp.eq.s32.totalorder %s21, 1
      %p165 = por %p163, %p164
      %p166 = scmp.ne.s32.totalorder %s157, %s158
      %p167 = scmp.eq.s32.totalorder %s21, 0
      %p168 = por %p166, %p167
      %p169 = scmp.ne.s32.totalorder %s157, %s158
      %p170 = scmp.eq.s32.totalorder %s22, 1
      %p171 = por %p169, %p170
      %p173 = scmp.ne.s32.totalorder %s158, %s172
      %p174 = scmp.eq.s32.totalorder %s22, 0
      %p175 = por %p173, %p174
      %s176 = ssub.s32 %s16, %s23
      %p177 = scmp.eq.s32.totalorder %s176, 0
      %s179 = sadd.s32 %s178, 1
      %s180 = scalar_select %p177, %s178, %s179
      %p183 = pneg %p177
      %p184 = scmp.eq.s32.totalorder %s16, 1
      %p185 = por %p183, %p184
      %p186 = scmp.ne.s32.totalorder %s178, %s181
      %p187 = scmp.eq.s32.totalorder %s16, 0
      %p188 = por %p186, %p187
      %p189 = scmp.ne.s32.totalorder %s178, %s181
      %p190 = scmp.eq.s32.totalorder %s21, 1
      %p191 = por %p189, %p190
      %p192 = scmp.ne.s32.totalorder %s181, %s182
      %p193 = scmp.eq.s32.totalorder %s21, 0
      %p194 = por %p192, %p193
      %p195 = scmp.ne.s32.totalorder %s181, %s182
      %p196 = scmp.eq.s32.totalorder %s22, 1
      %p197 = por %p195, %p196
      %p199 = scmp.ne.s32.totalorder %s182, %s198
      %p200 = scmp.eq.s32.totalorder %s22, 0
      %p201 = por %p199, %p200
      %p202 = scmp.le.s32.totalorder 1, %s16
      %p203 = scmp.lt.s32.totalorder %s16, 3
      %p204 = pnand %p202, %p203
      %p205 = pneg %p204
      // Predicated region
      $region9: #{tpu_custom_call.1} parent=5 // pred_check
        _
      $region10: #{tpu_custom_call.1} parent=5 // pred_check_branch
        %207 = sbr.rel (%p204) target = $region12
      $region11: #{tpu_custom_call.1} parent=5 // pred_region
        %s208 = ssub.s32 %s16, 1
        // Predicated region
        $region13: #{tpu_custom_call.1} parent=11 // pred_check
          %p209 = pneg %p63
        $region14: #{tpu_custom_call.1} parent=11 // pred_check_branch
          %211 = sbr.rel (%p209) target = $region16
        $region15: #{tpu_custom_call.1} parent=11 // pred_region
          _
        $region16: #{tpu_custom_call.1} parent=11 // pred_fallthru
          _
        // Predicated region
        $region17: #{tpu_custom_call.1} parent=11 // pred_check
          %p212 = pneg %p84
        $region18: #{tpu_custom_call.1} parent=11 // pred_check_branch
          %214 = sbr.rel (%p212) target = $region20
        $region19: #{tpu_custom_call.1} parent=11 // pred_region
          _
        $region20: #{tpu_custom_call.1} parent=11 // pred_fallthru
          _
        // Predicated region
        $region21: #{tpu_custom_call.1} parent=11 // pred_check
          %p215 = pneg %p105
        $region22: #{tpu_custom_call.1} parent=11 // pred_check_branch
          %217 = sbr.rel (%p215) target = $region24
        $region23: #{tpu_custom_call.1} parent=11 // pred_region
          _
        $region24: #{tpu_custom_call.1} parent=11 // pred_fallthru
          _
        // Predicated region
        $region25: #{tpu_custom_call.1} parent=11 // pred_check
          %p218 = pneg %p126
        $region26: #{tpu_custom_call.1} parent=11 // pred_check_branch
          %220 = sbr.rel (%p218) target = $region28
        $region27: #{tpu_custom_call.1} parent=11 // pred_region
          _
        $region28: #{tpu_custom_call.1} parent=11 // pred_fallthru
          _
        // Predicated region
        $region29: #{tpu_custom_call.1} parent=11 // pred_check
          %p221 = pneg %p147
        $region30: #{tpu_custom_call.1} parent=11 // pred_check_branch
          %223 = sbr.rel (%p221) target = $region32
        $region31: #{tpu_custom_call.1} parent=11 // pred_region
          _
        $region32: #{tpu_custom_call.1} parent=11 // pred_fallthru
          _
        // Predicated region
        $region33: #{tpu_custom_call.1} parent=11 // pred_check
          %p224 = pneg %p168
        $region34: #{tpu_custom_call.1} parent=11 // pred_check_branch
          %226 = sbr.rel (%p224) target = $region36
        $region35: #{tpu_custom_call.1} parent=11 // pred_region
          _
        $region36: #{tpu_custom_call.1} parent=11 // pred_fallthru
          _
      $region12: #{tpu_custom_call.1} parent=5 // pred_fallthru
        _
      %p227 = scmp.lt.s32.totalorder %s16, 2
      // Predicated region
      $region37: #{tpu_custom_call.1} parent=5 // pred_check
        %p228 = pneg %p227
      $region38: #{tpu_custom_call.1} parent=5 // pred_check_branch
        %230 = sbr.rel (%p228) target = $region40
      $region39: #{tpu_custom_call.1} parent=5 // pred_region
        // Predicated region
        $region41: #{tpu_custom_call.1} parent=39 // pred_check
          %p231 = pneg %p36
        $region42: #{tpu_custom_call.1} parent=39 // pred_check_branch
          %233 = sbr.rel (%p231) target = $region44
        $region43: #{tpu_custom_call.1} parent=39 // pred_region
          %s234 = smul.u32 2, %s16
          %p235 = scmp.lt.s32.totalorder %s234, 3
          %s236 = scalar_select %p235, %s234, 3
          %s237 = smul.addr %s236, 2
          %s238 = scalar_lea.vmem %s0, %s237
          %s239 = smul.u32 2, %s16
        $region44: #{tpu_custom_call.1} parent=39 // pred_fallthru
          _
      $region40: #{tpu_custom_call.1} parent=5 // pred_fallthru
        _
      %p240 = scmp.le.s32.totalorder 1, %s16
      %p241 = scmp.lt.s32.totalorder %s16, 3
      %p242 = pnand %p240, %p241
      %p243 = pneg %p242
      // Predicated region
      $region45: #{tpu_custom_call.1} parent=5 // pred_check
        _
      $region46: #{tpu_custom_call.1} parent=5 // pred_check_branch
        %245 = sbr.rel (%p242) target = $region48
      $region47: #{tpu_custom_call.1} parent=5 // pred_region
        %s246 = ssub.s32 %s16, 1
        %s247 = smul.u32 2, %s21
        %p248 = scmp.lt.s32.totalorder %s247, 3
        %s249 = scalar_select %p248, %s247, 3
        %s250 = smul.addr %s249, 2
        %s251 = scalar_lea.vmem %s0, %s250
        %p252 = pneg %p42
        %p253 = pneg %p39
        %p254 = pneg %p63
        %p255 = pneg %p60
        %p256 = pneg %p84
        %p257 = pneg %p81
        %p258 = pneg %p105
        %p259 = pneg %p102
        %p260 = pneg %p126
        %p261 = pneg %p123
        %p262 = pneg %p147
        %p263 = pneg %p144
        %p264 = pneg %p168
        %p265 = pneg %p165
        %p266 = pneg %p194
        %p267 = pneg %p191
        %s268 = sand.u32 %s181, 1
        %s269 = scalar_lea.sflag [#allocation3], %s268
        %s270 = sand.u32 %s181, 1
        %s271 = smul.addr %s270, 8
        %s272 = scalar_lea.vmem [#allocation2], %s271
        %s273 = smul.u32 2, %s21
        %p274 = scmp.lt.s32.totalorder %s273, 3
        %s275 = scalar_select %p274, %s273, 3
        %s276 = smul.addr %s275, 2
        %s277 = scalar_lea.vmem %s0, %s276
        %s278 = smul.u32 2, %s21
        %s279 = smul.u32 2, %s21
        %v280 = vld [vmem:[%s277] sm:$0xf]
        %v281 = vld [vmem:[%s2] sm:$0xff]
        %v282 = vld [vmem:[%s2 + $0x8] sm:$0xff]
        %v283 = vld [vmem:[%s2 + $0x10] sm:$0xff]
        %v284 = vld [vmem:[%s2 + $0x18] sm:$0xff]
        %v285 = vld [vmem:[%s2 + $0x20] sm:$0xff]
        %v286 = vld [vmem:[%s2 + $0x28] sm:$0xff]
        %v287 = vld [vmem:[%s2 + $0x30] sm:$0xff]
        %v288 = vld [vmem:[%s2 + $0x38] sm:$0xff]
        %v289 = vld [vmem:[%s2 + $0x40] sm:$0xff]
        %v290 = vld [vmem:[%s2 + $0x48] sm:$0xff]
        %v291 = vld [vmem:[%s2 + $0x50] sm:$0xff]
        %v292 = vld [vmem:[%s2 + $0x58] sm:$0xff]
        %v293 = vld [vmem:[%s2 + $0x60] sm:$0xff]
        %v294 = vld [vmem:[%s2 + $0x68] sm:$0xff]
        %v295 = vld [vmem:[%s2 + $0x70] sm:$0xff]
        %v296 = vld [vmem:[%s2 + $0x78] sm:$0xff]
        %v297 = vld [vmem:[%s1] sm:$0xff]
        %v298 = vld [vmem:[%s1 + $0x8] sm:$0xff]
        %v299 = vld [vmem:[%s1 + $0x10] sm:$0xff]
        %v300 = vld [vmem:[%s1 + $0x18] sm:$0xff]
        %v301 = vld [vmem:[%s1 + $0x20] sm:$0xff]
        %v302 = vld [vmem:[%s1 + $0x28] sm:$0xff]
        %v303 = vld [vmem:[%s1 + $0x30] sm:$0xff]
        %v304 = vld [vmem:[%s1 + $0x38] sm:$0xff]
        %v305 = vld [vmem:[%s1 + $0x40] sm:$0xff]
        %v306 = vld [vmem:[%s1 + $0x48] sm:$0xff]
        %v307 = vld [vmem:[%s1 + $0x50] sm:$0xff]
        %v308 = vld [vmem:[%s1 + $0x58] sm:$0xff]
        %v309 = vld [vmem:[%s1 + $0x60] sm:$0xff]
        %v310 = vld [vmem:[%s1 + $0x68] sm:$0xff]
        %v311 = vld [vmem:[%s1 + $0x70] sm:$0xff]
        %v312 = vld [vmem:[%s1 + $0x78] sm:$0xff]
        %314 = vset.pattern.permute.xlu0 0
        %315 = vperm.xlu0 %314, %v297
        %v316 = vpop.permute.xlu0 %315
        %319 = vset.pattern.permute.xlu0 0
        %320 = vperm.xlu0 %319, %v298
        %v321 = vpop.permute.xlu0 %320
        %324 = vset.pattern.permute.xlu0 0
        %325 = vperm.xlu0 %324, %v299
        %v326 = vpop.permute.xlu0 %325
        %329 = vset.pattern.permute.xlu0 0
        %330 = vperm.xlu0 %329, %v300
        %v331 = vpop.permute.xlu0 %330
        %334 = vset.pattern.permute.xlu0 0
        %335 = vperm.xlu0 %334, %v301
        %v336 = vpop.permute.xlu0 %335
        %339 = vset.pattern.permute.xlu0 0
        %340 = vperm.xlu0 %339, %v302
        %v341 = vpop.permute.xlu0 %340
        %344 = vset.pattern.permute.xlu0 0
        %345 = vperm.xlu0 %344, %v303
        %v346 = vpop.permute.xlu0 %345
        %349 = vset.pattern.permute.xlu0 0
        %350 = vperm.xlu0 %349, %v304
        %v351 = vpop.permute.xlu0 %350
        %354 = vset.pattern.permute.xlu0 0
        %355 = vperm.xlu0 %354, %v305
        %v356 = vpop.permute.xlu0 %355
        %359 = vset.pattern.permute.xlu0 0
        %360 = vperm.xlu0 %359, %v306
        %v361 = vpop.permute.xlu0 %360
        %364 = vset.pattern.permute.xlu0 0
        %365 = vperm.xlu0 %364, %v307
        %v366 = vpop.permute.xlu0 %365
        %369 = vset.pattern.permute.xlu0 0
        %370 = vperm.xlu0 %369, %v308
        %v371 = vpop.permute.xlu0 %370
        %374 = vset.pattern.permute.xlu0 0
        %375 = vperm.xlu0 %374, %v309
        %v376 = vpop.permute.xlu0 %375
        %379 = vset.pattern.permute.xlu0 0
        %380 = vperm.xlu0 %379, %v310
        %v381 = vpop.permute.xlu0 %380
        %384 = vset.pattern.permute.xlu0 0
        %385 = vperm.xlu0 %384, %v311
        %v386 = vpop.permute.xlu0 %385
        %389 = vset.pattern.permute.xlu0 0
        %390 = vperm.xlu0 %389, %v312
        %v391 = vpop.permute.xlu0 %390
        %v394 = vperm.slane %v280, 0
        %v395 = vperm.slane %v280, 2
        %v398 = vperm.slane %v394, 0
        %v399 = vperm.slane %v395, 0
        %v400 = vmul.f32 %v316, %v398
        %v401 = vmul.f32 %v316, %v399
        %v402 = vmul.f32 %v321, %v398
        %v403 = vmul.f32 %v321, %v399
        %v404 = vmul.f32 %v326, %v398
        %v405 = vmul.f32 %v326, %v399
        %v406 = vmul.f32 %v331, %v398
        %v407 = vmul.f32 %v331, %v399
        %v408 = vmul.f32 %v336, %v398
        %v409 = vmul.f32 %v336, %v399
        %v410 = vmul.f32 %v341, %v398
        %v411 = vmul.f32 %v341, %v399
        %v412 = vmul.f32 %v346, %v398
        %v413 = vmul.f32 %v346, %v399
        %v414 = vmul.f32 %v351, %v398
        %v415 = vmul.f32 %v351, %v399
        %v416 = vmul.f32 %v356, %v398
        %v417 = vmul.f32 %v356, %v399
        %v418 = vmul.f32 %v361, %v398
        %v419 = vmul.f32 %v361, %v399
        %v420 = vmul.f32 %v366, %v398
        %v421 = vmul.f32 %v366, %v399
        %v422 = vmul.f32 %v371, %v398
        %v423 = vmul.f32 %v371, %v399
        %v424 = vmul.f32 %v376, %v398
        %v425 = vmul.f32 %v376, %v399
        %v426 = vmul.f32 %v381, %v398
        %v427 = vmul.f32 %v381, %v399
        %v428 = vmul.f32 %v386, %v398
        %v429 = vmul.f32 %v386, %v399
        %v430 = vmul.f32 %v391, %v398
        %v431 = vmul.f32 %v391, %v399
        %433 = vset.pattern.permute.xlu0 0
        %434 = vperm.xlu0 %433, %v281
        %v435 = vpop.permute.xlu0 %434
        %438 = vset.pattern.permute.xlu0 0
        %439 = vperm.xlu0 %438, %v282
        %v440 = vpop.permute.xlu0 %439
        %443 = vset.pattern.permute.xlu0 0
        %444 = vperm.xlu0 %443, %v283
        %v445 = vpop.permute.xlu0 %444
        %448 = vset.pattern.permute.xlu0 0
        %449 = vperm.xlu0 %448, %v284
        %v450 = vpop.permute.xlu0 %449
        %453 = vset.pattern.permute.xlu0 0
        %454 = vperm.xlu0 %453, %v285
        %v455 = vpop.permute.xlu0 %454
        %458 = vset.pattern.permute.xlu0 0
        %459 = vperm.xlu0 %458, %v286
        %v460 = vpop.permute.xlu0 %459
        %463 = vset.pattern.permute.xlu0 0
        %464 = vperm.xlu0 %463, %v287
        %v465 = vpop.permute.xlu0 %464
        %468 = vset.pattern.permute.xlu0 0
        %469 = vperm.xlu0 %468, %v288
        %v470 = vpop.permute.xlu0 %469
        %473 = vset.pattern.permute.xlu0 0
        %474 = vperm.xlu0 %473, %v289
        %v475 = vpop.permute.xlu0 %474
        %478 = vset.pattern.permute.xlu0 0
        %479 = vperm.xlu0 %478, %v290
        %v480 = vpop.permute.xlu0 %479
        %483 = vset.pattern.permute.xlu0 0
        %484 = vperm.xlu0 %483, %v291
        %v485 = vpop.permute.xlu0 %484
        %488 = vset.pattern.permute.xlu0 0
        %489 = vperm.xlu0 %488, %v292
        %v490 = vpop.permute.xlu0 %489
        %493 = vset.pattern.permute.xlu0 0
        %494 = vperm.xlu0 %493, %v293
        %v495 = vpop.permute.xlu0 %494
        %498 = vset.pattern.permute.xlu0 0
        %499 = vperm.xlu0 %498, %v294
        %v500 = vpop.permute.xlu0 %499
        %503 = vset.pattern.permute.xlu0 0
        %504 = vperm.xlu0 %503, %v295
        %v505 = vpop.permute.xlu0 %504
        %508 = vset.pattern.permute.xlu0 0
        %509 = vperm.xlu0 %508, %v296
        %v510 = vpop.permute.xlu0 %509
        %v512 = vadd.f32 %v435, %v400
        %v513 = vadd.f32 %v435, %v401
        %v514 = vadd.f32 %v440, %v402
        %v515 = vadd.f32 %v440, %v403
        %v516 = vadd.f32 %v445, %v404
        %v517 = vadd.f32 %v445, %v405
        %v518 = vadd.f32 %v450, %v406
        %v519 = vadd.f32 %v450, %v407
        %v520 = vadd.f32 %v455, %v408
        %v521 = vadd.f32 %v455, %v409
        %v522 = vadd.f32 %v460, %v410
        %v523 = vadd.f32 %v460, %v411
        %v524 = vadd.f32 %v465, %v412
        %v525 = vadd.f32 %v465, %v413
        %v526 = vadd.f32 %v470, %v414
        %v527 = vadd.f32 %v470, %v415
        %v528 = vadd.f32 %v475, %v416
        %v529 = vadd.f32 %v475, %v417
        %v530 = vadd.f32 %v480, %v418
        %v531 = vadd.f32 %v480, %v419
        %v532 = vadd.f32 %v485, %v420
        %v533 = vadd.f32 %v485, %v421
        %v534 = vadd.f32 %v490, %v422
        %v535 = vadd.f32 %v490, %v423
        %v536 = vadd.f32 %v495, %v424
        %v537 = vadd.f32 %v495, %v425
        %v538 = vadd.f32 %v500, %v426
        %v539 = vadd.f32 %v500, %v427
        %v540 = vadd.f32 %v505, %v428
        %v541 = vadd.f32 %v505, %v429
        %v542 = vadd.f32 %v510, %v430
        %v543 = vadd.f32 %v510, %v431
        %544 = vset.pattern.permute.xlu0 1
        %545 = vperm.xlu0 %544, %v297
        %v546 = vpop.permute.xlu0 %545
        %548 = vset.pattern.permute.xlu0 1
        %549 = vperm.xlu0 %548, %v298
        %v550 = vpop.permute.xlu0 %549
        %552 = vset.pattern.permute.xlu0 1
        %553 = vperm.xlu0 %552, %v299
        %v554 = vpop.permute.xlu0 %553
        %556 = vset.pattern.permute.xlu0 1
        %557 = vperm.xlu0 %556, %v300
        %v558 = vpop.permute.xlu0 %557
        %560 = vset.pattern.permute.xlu0 1
        %561 = vperm.xlu0 %560, %v301
        %v562 = vpop.permute.xlu0 %561
        %564 = vset.pattern.permute.xlu0 1
        %565 = vperm.xlu0 %564, %v302
        %v566 = vpop.permute.xlu0 %565
        %568 = vset.pattern.permute.xlu0 1
        %569 = vperm.xlu0 %568, %v303
        %v570 = vpop.permute.xlu0 %569
        %572 = vset.pattern.permute.xlu0 1
        %573 = vperm.xlu0 %572, %v304
        %v574 = vpop.permute.xlu0 %573
        %576 = vset.pattern.permute.xlu0 1
        %577 = vperm.xlu0 %576, %v305
        %v578 = vpop.permute.xlu0 %577
        %580 = vset.pattern.permute.xlu0 1
        %581 = vperm.xlu0 %580, %v306
        %v582 = vpop.permute.xlu0 %581
        %584 = vset.pattern.permute.xlu0 1
        %585 = vperm.xlu0 %584, %v307
        %v586 = vpop.permute.xlu0 %585
        %588 = vset.pattern.permute.xlu0 1
        %589 = vperm.xlu0 %588, %v308
        %v590 = vpop.permute.xlu0 %589
        %592 = vset.pattern.permute.xlu0 1
        %593 = vperm.xlu0 %592, %v309
        %v594 = vpop.permute.xlu0 %593
        %596 = vset.pattern.permute.xlu0 1
        %597 = vperm.xlu0 %596, %v310
        %v598 = vpop.permute.xlu0 %597
        %600 = vset.pattern.permute.xlu0 1
        %601 = vperm.xlu0 %600, %v311
        %v602 = vpop.permute.xlu0 %601
        %604 = vset.pattern.permute.xlu0 1
        %605 = vperm.xlu0 %604, %v312
        %v606 = vpop.permute.xlu0 %605
        %v608 = vperm.slane %v280, 1
        %v609 = vperm.slane %v280, 3
        %v612 = vperm.slane %v608, 1
        %v613 = vperm.slane %v609, 1
        %v614 = vmul.f32 %v546, %v612
        %v615 = vmul.f32 %v546, %v613
        %v616 = vmul.f32 %v550, %v612
        %v617 = vmul.f32 %v550, %v613
        %v618 = vmul.f32 %v554, %v612
        %v619 = vmul.f32 %v554, %v613
        %v620 = vmul.f32 %v558, %v612
        %v621 = vmul.f32 %v558, %v613
        %v622 = vmul.f32 %v562, %v612
        %v623 = vmul.f32 %v562, %v613
        %v624 = vmul.f32 %v566, %v612
        %v625 = vmul.f32 %v566, %v613
        %v626 = vmul.f32 %v570, %v612
        %v627 = vmul.f32 %v570, %v613
        %v628 = vmul.f32 %v574, %v612
        %v629 = vmul.f32 %v574, %v613
        %v630 = vmul.f32 %v578, %v612
        %v631 = vmul.f32 %v578, %v613
        %v632 = vmul.f32 %v582, %v612
        %v633 = vmul.f32 %v582, %v613
        %v634 = vmul.f32 %v586, %v612
        %v635 = vmul.f32 %v586, %v613
        %v636 = vmul.f32 %v590, %v612
        %v637 = vmul.f32 %v590, %v613
        %v638 = vmul.f32 %v594, %v612
        %v639 = vmul.f32 %v594, %v613
        %v640 = vmul.f32 %v598, %v612
        %v641 = vmul.f32 %v598, %v613
        %v642 = vmul.f32 %v602, %v612
        %v643 = vmul.f32 %v602, %v613
        %v644 = vmul.f32 %v606, %v612
        %v645 = vmul.f32 %v606, %v613
        %v646 = vadd.f32 %v512, %v614
        %v647 = vadd.f32 %v513, %v615
        %v648 = vadd.f32 %v514, %v616
        %v649 = vadd.f32 %v515, %v617
        %v650 = vadd.f32 %v516, %v618
        %v651 = vadd.f32 %v517, %v619
        %v652 = vadd.f32 %v518, %v620
        %v653 = vadd.f32 %v519, %v621
        %v654 = vadd.f32 %v520, %v622
        %v655 = vadd.f32 %v521, %v623
        %v656 = vadd.f32 %v522, %v624
        %v657 = vadd.f32 %v523, %v625
        %v658 = vadd.f32 %v524, %v626
        %v659 = vadd.f32 %v525, %v627
        %v660 = vadd.f32 %v526, %v628
        %v661 = vadd.f32 %v527, %v629
        %v662 = vadd.f32 %v528, %v630
        %v663 = vadd.f32 %v529, %v631
        %v664 = vadd.f32 %v530, %v632
        %v665 = vadd.f32 %v531, %v633
        %v666 = vadd.f32 %v532, %v634
        %v667 = vadd.f32 %v533, %v635
        %v668 = vadd.f32 %v534, %v636
        %v669 = vadd.f32 %v535, %v637
        %v670 = vadd.f32 %v536, %v638
        %v671 = vadd.f32 %v537, %v639
        %v672 = vadd.f32 %v538, %v640
        %v673 = vadd.f32 %v539, %v641
        %v674 = vadd.f32 %v540, %v642
        %v675 = vadd.f32 %v541, %v643
        %v676 = vadd.f32 %v542, %v644
        %v677 = vadd.f32 %v543, %v645
        %v678 = vand.u32 2147483647, %v646
        %vm679 = vcmp.le.f32.partialorder %v678, 0.7853982
        %vm680 = vcmp.lt.s32.totalorder %v646, 0
        %v681 = vand.u32 %v646, 2139095040
        %v682 = vshrl.u32 %v681, 23
        %v683 = vsub.s32 %v682, 127
        %v684 = vand.u32 2147483647, %v646
        %v685 = vand.u32 %v684, 8388607
        %v686 = vor.u32 %v685, 8388608
        %v687 = vsub.s32 0, %v686
        %v688 = vadd.s32 %v683, 1
        %vm689 = vcmp.gt.s32.totalorder %v688, 0
        %v690 = vsel %vm689, %v688, 0
        %v691 = vshrl.u32 %v690, 5
        %v692 = vand.u32 %v690, 31
        %v693 = vsub.s32 32, %v692
        %v694 = vshrl.u32 683565275, %v693
        %v695 = vshll.u32 683565275, %v692
        %v696 = vshrl.u32 2475754826, %v693
        %v697 = vor.u32 %v695, %v696
        %v698 = vshll.u32 2475754826, %v692
        %v699 = vshrl.u32 2131351028, %v693
        %v700 = vor.u32 %v698, %v699
        %v701 = vshll.u32 2131351028, %v692
        %v702 = vshrl.u32 2102212464, %v693
        %v703 = vor.u32 %v701, %v702
        %v704 = vshll.u32 2102212464, %v692
        %v705 = vshrl.u32 920167782, %v693
        %v706 = vor.u32 %v704, %v705
        %v707 = vshll.u32 920167782, %v692
        %v708 = vshrl.u32 1326507024, %v693
        %v709 = vor.u32 %v707, %v708
        %vm710 = vcmp.lt.s32.totalorder %v691, 1
        %vm711 = vcmp.lt.s32.totalorder %v691, 2
        %vm712 = vcmp.lt.s32.totalorder %v691, 3
        %vm713 = vcmp.lt.s32.totalorder %v691, 4
        %v714 = vsel %vm710, %v694, %v697
        %v715 = vsel %vm713, %v703, 2102212464
        %v716 = vsel %vm712, %v700, %v715
        %v717 = vsel %vm711, %v714, %v716
        %v718 = vsel %vm710, %v697, %v700
        %v719 = vsel %vm713, %v706, 920167782
        %v720 = vsel %vm712, %v703, %v719
        %v721 = vsel %vm711, %v718, %v720
        %v722 = vsel %vm710, %v700, %v703
        %v723 = vsel %vm713, %v709, 1326507024
        %v724 = vsel %vm712, %v706, %v723
        %v725 = vsel %vm711, %v722, %v724
        %v726 = vshll.u32 %v686, 8
        %v727 = vand.u32 %v726, 65535
        %v728 = vshrl.u32 %v726, 16
        %v729 = vand.u32 %v725, 65535
        %v730 = vshrl.u32 %v725, 16
        %v731 = vmul.u32 %v727, %v729
        %v732 = vmul.u32 %v727, %v730
        %v733 = vmul.u32 %v728, %v729
        %v734 = vmul.u32 %v728, %v730
        %v735 = vshll.u32 %v732, 16
        %v736 = vshrl.u32 %v732, 16
        %v737 = vshll.u32 %v733, 16
        %v738 = vshrl.u32 %v733, 16
        %vm739 = vc.u32 %v731, %v735
        %v740 = vsel %vm739, 1, 0
        %v741 = vadd.s32 %v731, %v735
        %v742 = vadd.s32 %v734, %v740
        %vm743 = vc.u32 %v741, %v737
        %v744 = vsel %vm743, 1, 0
        %v745 = vadd.s32 %v741, %v737
        %v746 = vadd.s32 %v742, %v744
        %v747 = vadd.s32 %v746, %v736
        %v748 = vadd.s32 %v747, %v738
        %v749 = vand.u32 %v726, 65535
        %v750 = vshrl.u32 %v726, 16
        %v751 = vand.u32 %v721, 65535
        %v752 = vshrl.u32 %v721, 16
        %v753 = vmul.u32 %v749, %v751
        %v754 = vmul.u32 %v749, %v752
        %v755 = vmul.u32 %v750, %v751
        %v756 = vmul.u32 %v750, %v752
        %v757 = vshll.u32 %v754, 16
        %v758 = vshrl.u32 %v754, 16
        %v759 = vshll.u32 %v755, 16
        %v760 = vshrl.u32 %v755, 16
        %vm761 = vc.u32 %v753, %v757
        %v762 = vsel %vm761, 1, 0
        %v763 = vadd.s32 %v753, %v757
        %v764 = vadd.s32 %v756, %v762
        %vm765 = vc.u32 %v763, %v759
        %v766 = vsel %vm765, 1, 0
        %v767 = vadd.s32 %v763, %v759
        %v768 = vadd.s32 %v764, %v766
        %v769 = vadd.s32 %v768, %v758
        %v770 = vadd.s32 %v769, %v760
        %v771 = vmul.u32 %v726, %v717
        %v772 = vadd.s32 %v748, %v767
        %vm773 = vc.u32 %v748, %v767
        %v774 = vadd.s32 %v770, 1
        %v775 = vsel %vm773, %v774, %v770
        %v776 = vadd.s32 %v771, %v775
        %v777 = vadd.s32 %v776, 536870912
        %v778 = vshrl.u32 %v777, 30
        %v779 = vshll.u32 %v778, 30
        %v780 = vsub.s32 %v776, %v779
        %vm781 = vcmp.lt.s32.totalorder %v780, 0
        %v782 = vsub.s32 0, %v780
        %v783 = vsel %vm781, %v782, %v780
        %v784 = vclz %v783
        %v785 = vsub.s32 %v784, 2
        %vm786 = vcmp.gt.s32.totalorder 0, %v785
        %v787 = vsel %vm786, 0, %v785
        %v788 = vsub.s32 32, %v787
        %v789 = vshll.u32 %v780, %v787
        %v790 = vshrl.u32 %v772, %v788
        %v791 = vor.u32 %v789, %v790
        %v792 = vsub.s32 4294967266, %v787
        %v793 = vadd.s32 %v792, 127
        %v794 = vshll.u32 %v793, 23
        %v795 = vor.u32 4788187, %v794
        %v796 = vand.u32 2147483647, %v795
        %v798 = vcvt.s32.f32 %v791
        %v799 = vmul.f32 %v798, %v796
        %v800 = vxor.u32 %v799, 2147483648
        %v801 = vsel %vm680, %v800, %v799
        %v802 = vsub.s32 4, %v778
        %v803 = vsel %vm680, %v802, %v778
        %v804 = vsel %vm679, %v646, %v801
        %v805 = vsel %vm679, 0, %v803
        %v806 = vmul.f32 %v804, %v804
        %v807 = vmul.f32 %v806, -0.001358992
        %v808 = vadd.f32 %v807, 0.041655596
        %v809 = vmul.f32 %v806, %v808
        %v810 = vadd.f32 %v809, -0.4999988
        %v811 = vmul.f32 %v806, %v810
        %v812 = vadd.f32 1.0, %v811
        %v813 = vmul.f32 %v804, %v804
        %v814 = vmul.f32 %v813, -0.00019511016
        %v815 = vadd.f32 %v814, 0.008332121
        %v816 = vmul.f32 %v813, %v815
        %v817 = vadd.f32 %v816, -0.16666654
        %v818 = vmul.f32 %v813, %v817
        %v819 = vadd.f32 %v818, 1.0
        %v820 = vmul.f32 %v819, %v804
        %vm821 = vweird.f32 %v646
        %v822 = vadd.s32 %v805, 3
        %v823 = vand.u32 %v822, 3
        %vm824 = vcmp.lt.s32.totalorder %v823, 2
        %vm825 = vcmp.eq.s32.totalorder %v823, 0
        %v826 = vxor.u32 %v820, 2147483648
        %v827 = vsel %vm825, %v812, %v826
        %vm828 = vcmp.eq.s32.totalorder %v823, 2
        %v829 = vxor.u32 %v812, 2147483648
        %v830 = vsel %vm828, %v829, %v820
        %v831 = vsel %vm824, %v827, %v830
        %v832 = vsel %vm821, nan, %v831
        %v833 = vand.u32 2147483647, %v647
        %vm834 = vcmp.le.f32.partialorder %v833, 0.7853982
        %vm835 = vcmp.lt.s32.totalorder %v647, 0
        %v836 = vand.u32 %v647, 2139095040
        %v837 = vshrl.u32 %v836, 23
        %v838 = vsub.s32 %v837, 127
        %v839 = vand.u32 2147483647, %v647
        %v840 = vand.u32 %v839, 8388607
        %v841 = vor.u32 %v840, 8388608
        %v842 = vsub.s32 0, %v841
        %v843 = vadd.s32 %v838, 1
        %vm844 = vcmp.gt.s32.totalorder %v843, 0
        %v845 = vsel %vm844, %v843, 0
        %v846 = vshrl.u32 %v845, 5
        %v847 = vand.u32 %v845, 31
        %v848 = vsub.s32 32, %v847
        %v849 = vshrl.u32 683565275, %v848
        %v850 = vshll.u32 683565275, %v847
        %v851 = vshrl.u32 2475754826, %v848
        %v852 = vor.u32 %v850, %v851
        %v853 = vshll.u32 2475754826, %v847
        %v854 = vshrl.u32 2131351028, %v848
        %v855 = vor.u32 %v853, %v854
        %v856 = vshll.u32 2131351028, %v847
        %v857 = vshrl.u32 2102212464, %v848
        %v858 = vor.u32 %v856, %v857
        %v859 = vshll.u32 2102212464, %v847
        %v860 = vshrl.u32 920167782, %v848
        %v861 = vor.u32 %v859, %v860
        %v862 = vshll.u32 920167782, %v847
        %v863 = vshrl.u32 1326507024, %v848
        %v864 = vor.u32 %v862, %v863
        %vm865 = vcmp.lt.s32.totalorder %v846, 1
        %vm866 = vcmp.lt.s32.totalorder %v846, 2
        %vm867 = vcmp.lt.s32.totalorder %v846, 3
        %vm868 = vcmp.lt.s32.totalorder %v846, 4
        %v869 = vsel %vm865, %v849, %v852
        %v870 = vsel %vm868, %v858, 2102212464
        %v871 = vsel %vm867, %v855, %v870
        %v872 = vsel %vm866, %v869, %v871
        %v873 = vsel %vm865, %v852, %v855
        %v874 = vsel %vm868, %v861, 920167782
        %v875 = vsel %vm867, %v858, %v874
        %v876 = vsel %vm866, %v873, %v875
        %v877 = vsel %vm865, %v855, %v858
        %v878 = vsel %vm868, %v864, 1326507024
        %v879 = vsel %vm867, %v861, %v878
        %v880 = vsel %vm866, %v877, %v879
        %v881 = vshll.u32 %v841, 8
        %v882 = vand.u32 %v881, 65535
        %v883 = vshrl.u32 %v881, 16
        %v884 = vand.u32 %v880, 65535
        %v885 = vshrl.u32 %v880, 16
        %v886 = vmul.u32 %v882, %v884
        %v887 = vmul.u32 %v882, %v885
        %v888 = vmul.u32 %v883, %v884
        %v889 = vmul.u32 %v883, %v885
        %v890 = vshll.u32 %v887, 16
        %v891 = vshrl.u32 %v887, 16
        %v892 = vshll.u32 %v888, 16
        %v893 = vshrl.u32 %v888, 16
        %vm894 = vc.u32 %v886, %v890
        %v895 = vsel %vm894, 1, 0
        %v896 = vadd.s32 %v886, %v890
        %v897 = vadd.s32 %v889, %v895
        %vm898 = vc.u32 %v896, %v892
        %v899 = vsel %vm898, 1, 0
        %v900 = vadd.s32 %v896, %v892
        %v901 = vadd.s32 %v897, %v899
        %v902 = vadd.s32 %v901, %v891
        %v903 = vadd.s32 %v902, %v893
        %v904 = vand.u32 %v881, 65535
        %v905 = vshrl.u32 %v881, 16
        %v906 = vand.u32 %v876, 65535
        %v907 = vshrl.u32 %v876, 16
        %v908 = vmul.u32 %v904, %v906
        %v909 = vmul.u32 %v904, %v907
        %v910 = vmul.u32 %v905, %v906
        %v911 = vmul.u32 %v905, %v907
        %v912 = vshll.u32 %v909, 16
        %v913 = vshrl.u32 %v909, 16
        %v914 = vshll.u32 %v910, 16
        %v915 = vshrl.u32 %v910, 16
        %vm916 = vc.u32 %v908, %v912
        %v917 = vsel %vm916, 1, 0
        %v918 = vadd.s32 %v908, %v912
        %v919 = vadd.s32 %v911, %v917
        %vm920 = vc.u32 %v918, %v914
        %v921 = vsel %vm920, 1, 0
        %v922 = vadd.s32 %v918, %v914
        %v923 = vadd.s32 %v919, %v921
        %v924 = vadd.s32 %v923, %v913
        %v925 = vadd.s32 %v924, %v915
        %v926 = vmul.u32 %v881, %v872
        %v927 = vadd.s32 %v903, %v922
        %vm928 = vc.u32 %v903, %v922
        %v929 = vadd.s32 %v925, 1
        %v930 = vsel %vm928, %v929, %v925
        %v931 = vadd.s32 %v926, %v930
        %v932 = vadd.s32 %v931, 536870912
        %v933 = vshrl.u32 %v932, 30
        %v934 = vshll.u32 %v933, 30
        %v935 = vsub.s32 %v931, %v934
        %vm936 = vcmp.lt.s32.totalorder %v935, 0
        %v937 = vsub.s32 0, %v935
        %v938 = vsel %vm936, %v937, %v935
        %v939 = vclz %v938
        %v940 = vsub.s32 %v939, 2
        %vm941 = vcmp.gt.s32.totalorder 0, %v940
        %v942 = vsel %vm941, 0, %v940
        %v943 = vsub.s32 32, %v942
        %v944 = vshll.u32 %v935, %v942
        %v945 = vshrl.u32 %v927, %v943
        %v946 = vor.u32 %v944, %v945
        %v947 = vsub.s32 4294967266, %v942
        %v948 = vadd.s32 %v947, 127
        %v949 = vshll.u32 %v948, 23
        %v950 = vor.u32 4788187, %v949
        %v951 = vand.u32 2147483647, %v950
        %v953 = vcvt.s32.f32 %v946
        %v954 = vmul.f32 %v953, %v951
        %v955 = vxor.u32 %v954, 2147483648
        %v956 = vsel %vm835, %v955, %v954
        %v957 = vsub.s32 4, %v933
        %v958 = vsel %vm835, %v957, %v933
        %v959 = vsel %vm834, %v647, %v956
        %v960 = vsel %vm834, 0, %v958
        %v961 = vmul.f32 %v959, %v959
        %v962 = vmul.f32 %v961, -0.001358992
        %v963 = vadd.f32 %v962, 0.041655596
        %v964 = vmul.f32 %v961, %v963
        %v965 = vadd.f32 %v964, -0.4999988
        %v966 = vmul.f32 %v961, %v965
        %v967 = vadd.f32 1.0, %v966
        %v968 = vmul.f32 %v959, %v959
        %v969 = vmul.f32 %v968, -0.00019511016
        %v970 = vadd.f32 %v969, 0.008332121
        %v971 = vmul.f32 %v968, %v970
        %v972 = vadd.f32 %v971, -0.16666654
        %v973 = vmul.f32 %v968, %v972
        %v974 = vadd.f32 %v973, 1.0
        %v975 = vmul.f32 %v974, %v959
        %vm976 = vweird.f32 %v647
        %v977 = vadd.s32 %v960, 3
        %v978 = vand.u32 %v977, 3
        %vm979 = vcmp.lt.s32.totalorder %v978, 2
        %vm980 = vcmp.eq.s32.totalorder %v978, 0
        %v981 = vxor.u32 %v975, 2147483648
        %v982 = vsel %vm980, %v967, %v981
        %vm983 = vcmp.eq.s32.totalorder %v978, 2
        %v984 = vxor.u32 %v967, 2147483648
        %v985 = vsel %vm983, %v984, %v975
        %v986 = vsel %vm979, %v982, %v985
        %v987 = vsel %vm976, nan, %v986
        %v988 = vand.u32 2147483647, %v648
        %vm989 = vcmp.le.f32.partialorder %v988, 0.7853982
        %vm990 = vcmp.lt.s32.totalorder %v648, 0
        %v991 = vand.u32 %v648, 2139095040
        %v992 = vshrl.u32 %v991, 23
        %v993 = vsub.s32 %v992, 127
        %v994 = vand.u32 2147483647, %v648
        %v995 = vand.u32 %v994, 8388607
        %v996 = vor.u32 %v995, 8388608
        %v997 = vsub.s32 0, %v996
        %v998 = vadd.s32 %v993, 1
        %vm999 = vcmp.gt.s32.totalorder %v998, 0
        %v1000 = vsel %vm999, %v998, 0
        %v1001 = vshrl.u32 %v1000, 5
        %v1002 = vand.u32 %v1000, 31
        %v1003 = vsub.s32 32, %v1002
        %v1004 = vshrl.u32 683565275, %v1003
        %v1005 = vshll.u32 683565275, %v1002
        %v1006 = vshrl.u32 2475754826, %v1003
        %v1007 = vor.u32 %v1005, %v1006
        %v1008 = vshll.u32 2475754826, %v1002
        %v1009 = vshrl.u32 2131351028, %v1003
        %v1010 = vor.u32 %v1008, %v1009
        %v1011 = vshll.u32 2131351028, %v1002
        %v1012 = vshrl.u32 2102212464, %v1003
        %v1013 = vor.u32 %v1011, %v1012
        %v1014 = vshll.u32 2102212464, %v1002
        %v1015 = vshrl.u32 920167782, %v1003
        %v1016 = vor.u32 %v1014, %v1015
        %v1017 = vshll.u32 920167782, %v1002
        %v1018 = vshrl.u32 1326507024, %v1003
        %v1019 = vor.u32 %v1017, %v1018
        %vm1020 = vcmp.lt.s32.totalorder %v1001, 1
        %vm1021 = vcmp.lt.s32.totalorder %v1001, 2
        %vm1022 = vcmp.lt.s32.totalorder %v1001, 3
        %vm1023 = vcmp.lt.s32.totalorder %v1001, 4
        %v1024 = vsel %vm1020, %v1004, %v1007
        %v1025 = vsel %vm1023, %v1013, 2102212464
        %v1026 = vsel %vm1022, %v1010, %v1025
        %v1027 = vsel %vm1021, %v1024, %v1026
        %v1028 = vsel %vm1020, %v1007, %v1010
        %v1029 = vsel %vm1023, %v1016, 920167782
        %v1030 = vsel %vm1022, %v1013, %v1029
        %v1031 = vsel %vm1021, %v1028, %v1030
        %v1032 = vsel %vm1020, %v1010, %v1013
        %v1033 = vsel %vm1023, %v1019, 1326507024
        %v1034 = vsel %vm1022, %v1016, %v1033
        %v1035 = vsel %vm1021, %v1032, %v1034
        %v1036 = vshll.u32 %v996, 8
        %v1037 = vand.u32 %v1036, 65535
        %v1038 = vshrl.u32 %v1036, 16
        %v1039 = vand.u32 %v1035, 65535
        %v1040 = vshrl.u32 %v1035, 16
        %v1041 = vmul.u32 %v1037, %v1039
        %v1042 = vmul.u32 %v1037, %v1040
        %v1043 = vmul.u32 %v1038, %v1039
        %v1044 = vmul.u32 %v1038, %v1040
        %v1045 = vshll.u32 %v1042, 16
        %v1046 = vshrl.u32 %v1042, 16
        %v1047 = vshll.u32 %v1043, 16
        %v1048 = vshrl.u32 %v1043, 16
        %vm1049 = vc.u32 %v1041, %v1045
        %v1050 = vsel %vm1049, 1, 0
        %v1051 = vadd.s32 %v1041, %v1045
        %v1052 = vadd.s32 %v1044, %v1050
        %vm1053 = vc.u32 %v1051, %v1047
        %v1054 = vsel %vm1053, 1, 0
        %v1055 = vadd.s32 %v1051, %v1047
        %v1056 = vadd.s32 %v1052, %v1054
        %v1057 = vadd.s32 %v1056, %v1046
        %v1058 = vadd.s32 %v1057, %v1048
        %v1059 = vand.u32 %v1036, 65535
        %v1060 = vshrl.u32 %v1036, 16
        %v1061 = vand.u32 %v1031, 65535
        %v1062 = vshrl.u32 %v1031, 16
        %v1063 = vmul.u32 %v1059, %v1061
        %v1064 = vmul.u32 %v1059, %v1062
        %v1065 = vmul.u32 %v1060, %v1061
        %v1066 = vmul.u32 %v1060, %v1062
        %v1067 = vshll.u32 %v1064, 16
        %v1068 = vshrl.u32 %v1064, 16
        %v1069 = vshll.u32 %v1065, 16
        %v1070 = vshrl.u32 %v1065, 16
        %vm1071 = vc.u32 %v1063, %v1067
        %v1072 = vsel %vm1071, 1, 0
        %v1073 = vadd.s32 %v1063, %v1067
        %v1074 = vadd.s32 %v1066, %v1072
        %vm1075 = vc.u32 %v1073, %v1069
        %v1076 = vsel %vm1075, 1, 0
        %v1077 = vadd.s32 %v1073, %v1069
        %v1078 = vadd.s32 %v1074, %v1076
        %v1079 = vadd.s32 %v1078, %v1068
        %v1080 = vadd.s32 %v1079, %v1070
        %v1081 = vmul.u32 %v1036, %v1027
        %v1082 = vadd.s32 %v1058, %v1077
        %vm1083 = vc.u32 %v1058, %v1077
        %v1084 = vadd.s32 %v1080, 1
        %v1085 = vsel %vm1083, %v1084, %v1080
        %v1086 = vadd.s32 %v1081, %v1085
        %v1087 = vadd.s32 %v1086, 536870912
        %v1088 = vshrl.u32 %v1087, 30
        %v1089 = vshll.u32 %v1088, 30
        %v1090 = vsub.s32 %v1086, %v1089
        %vm1091 = vcmp.lt.s32.totalorder %v1090, 0
        %v1092 = vsub.s32 0, %v1090
        %v1093 = vsel %vm1091, %v1092, %v1090
        %v1094 = vclz %v1093
        %v1095 = vsub.s32 %v1094, 2
        %vm1096 = vcmp.gt.s32.totalorder 0, %v1095
        %v1097 = vsel %vm1096, 0, %v1095
        %v1098 = vsub.s32 32, %v1097
        %v1099 = vshll.u32 %v1090, %v1097
        %v1100 = vshrl.u32 %v1082, %v1098
        %v1101 = vor.u32 %v1099, %v1100
        %v1102 = vsub.s32 4294967266, %v1097
        %v1103 = vadd.s32 %v1102, 127
        %v1104 = vshll.u32 %v1103, 23
        %v1105 = vor.u32 4788187, %v1104
        %v1106 = vand.u32 2147483647, %v1105
        %v1108 = vcvt.s32.f32 %v1101
        %v1109 = vmul.f32 %v1108, %v1106
        %v1110 = vxor.u32 %v1109, 2147483648
        %v1111 = vsel %vm990, %v1110, %v1109
        %v1112 = vsub.s32 4, %v1088
        %v1113 = vsel %vm990, %v1112, %v1088
        %v1114 = vsel %vm989, %v648, %v1111
        %v1115 = vsel %vm989, 0, %v1113
        %v1116 = vmul.f32 %v1114, %v1114
        %v1117 = vmul.f32 %v1116, -0.001358992
        %v1118 = vadd.f32 %v1117, 0.041655596
        %v1119 = vmul.f32 %v1116, %v1118
        %v1120 = vadd.f32 %v1119, -0.4999988
        %v1121 = vmul.f32 %v1116, %v1120
        %v1122 = vadd.f32 1.0, %v1121
        %v1123 = vmul.f32 %v1114, %v1114
        %v1124 = vmul.f32 %v1123, -0.00019511016
        %v1125 = vadd.f32 %v1124, 0.008332121
        %v1126 = vmul.f32 %v1123, %v1125
        %v1127 = vadd.f32 %v1126, -0.16666654
        %v1128 = vmul.f32 %v1123, %v1127
        %v1129 = vadd.f32 %v1128, 1.0
        %v1130 = vmul.f32 %v1129, %v1114
        %vm1131 = vweird.f32 %v648
        %v1132 = vadd.s32 %v1115, 3
        %v1133 = vand.u32 %v1132, 3
        %vm1134 = vcmp.lt.s32.totalorder %v1133, 2
        %vm1135 = vcmp.eq.s32.totalorder %v1133, 0
        %v1136 = vxor.u32 %v1130, 2147483648
        %v1137 = vsel %vm1135, %v1122, %v1136
        %vm1138 = vcmp.eq.s32.totalorder %v1133, 2
        %v1139 = vxor.u32 %v1122, 2147483648
        %v1140 = vsel %vm1138, %v1139, %v1130
        %v1141 = vsel %vm1134, %v1137, %v1140
        %v1142 = vsel %vm1131, nan, %v1141
        %v1143 = vand.u32 2147483647, %v649
        %vm1144 = vcmp.le.f32.partialorder %v1143, 0.7853982
        %vm1145 = vcmp.lt.s32.totalorder %v649, 0
        %v1146 = vand.u32 %v649, 2139095040
        %v1147 = vshrl.u32 %v1146, 23
        %v1148 = vsub.s32 %v1147, 127
        %v1149 = vand.u32 2147483647, %v649
        %v1150 = vand.u32 %v1149, 8388607
        %v1151 = vor.u32 %v1150, 8388608
        %v1152 = vsub.s32 0, %v1151
        %v1153 = vadd.s32 %v1148, 1
        %vm1154 = vcmp.gt.s32.totalorder %v1153, 0
        %v1155 = vsel %vm1154, %v1153, 0
        %v1156 = vshrl.u32 %v1155, 5
        %v1157 = vand.u32 %v1155, 31
        %v1158 = vsub.s32 32, %v1157
        %v1159 = vshrl.u32 683565275, %v1158
        %v1160 = vshll.u32 683565275, %v1157
        %v1161 = vshrl.u32 2475754826, %v1158
        %v1162 = vor.u32 %v1160, %v1161
        %v1163 = vshll.u32 2475754826, %v1157
        %v1164 = vshrl.u32 2131351028, %v1158
        %v1165 = vor.u32 %v1163, %v1164
        %v1166 = vshll.u32 2131351028, %v1157
        %v1167 = vshrl.u32 2102212464, %v1158
        %v1168 = vor.u32 %v1166, %v1167
        %v1169 = vshll.u32 2102212464, %v1157
        %v1170 = vshrl.u32 920167782, %v1158
        %v1171 = vor.u32 %v1169, %v1170
        %v1172 = vshll.u32 920167782, %v1157
        %v1173 = vshrl.u32 1326507024, %v1158
        %v1174 = vor.u32 %v1172, %v1173
        %vm1175 = vcmp.lt.s32.totalorder %v1156, 1
        %vm1176 = vcmp.lt.s32.totalorder %v1156, 2
        %vm1177 = vcmp.lt.s32.totalorder %v1156, 3
        %vm1178 = vcmp.lt.s32.totalorder %v1156, 4
        %v1179 = vsel %vm1175, %v1159, %v1162
        %v1180 = vsel %vm1178, %v1168, 2102212464
        %v1181 = vsel %vm1177, %v1165, %v1180
        %v1182 = vsel %vm1176, %v1179, %v1181
        %v1183 = vsel %vm1175, %v1162, %v1165
        %v1184 = vsel %vm1178, %v1171, 920167782
        %v1185 = vsel %vm1177, %v1168, %v1184
        %v1186 = vsel %vm1176, %v1183, %v1185
        %v1187 = vsel %vm1175, %v1165, %v1168
        %v1188 = vsel %vm1178, %v1174, 1326507024
        %v1189 = vsel %vm1177, %v1171, %v1188
        %v1190 = vsel %vm1176, %v1187, %v1189
        %v1191 = vshll.u32 %v1151, 8
        %v1192 = vand.u32 %v1191, 65535
        %v1193 = vshrl.u32 %v1191, 16
        %v1194 = vand.u32 %v1190, 65535
        %v1195 = vshrl.u32 %v1190, 16
        %v1196 = vmul.u32 %v1192, %v1194
        %v1197 = vmul.u32 %v1192, %v1195
        %v1198 = vmul.u32 %v1193, %v1194
        %v1199 = vmul.u32 %v1193, %v1195
        %v1200 = vshll.u32 %v1197, 16
        %v1201 = vshrl.u32 %v1197, 16
        %v1202 = vshll.u32 %v1198, 16
        %v1203 = vshrl.u32 %v1198, 16
        %vm1204 = vc.u32 %v1196, %v1200
        %v1205 = vsel %vm1204, 1, 0
        %v1206 = vadd.s32 %v1196, %v1200
        %v1207 = vadd.s32 %v1199, %v1205
        %vm1208 = vc.u32 %v1206, %v1202
        %v1209 = vsel %vm1208, 1, 0
        %v1210 = vadd.s32 %v1206, %v1202
        %v1211 = vadd.s32 %v1207, %v1209
        %v1212 = vadd.s32 %v1211, %v1201
        %v1213 = vadd.s32 %v1212, %v1203
        %v1214 = vand.u32 %v1191, 65535
        %v1215 = vshrl.u32 %v1191, 16
        %v1216 = vand.u32 %v1186, 65535
        %v1217 = vshrl.u32 %v1186, 16
        %v1218 = vmul.u32 %v1214, %v1216
        %v1219 = vmul.u32 %v1214, %v1217
        %v1220 = vmul.u32 %v1215, %v1216
        %v1221 = vmul.u32 %v1215, %v1217
        %v1222 = vshll.u32 %v1219, 16
        %v1223 = vshrl.u32 %v1219, 16
        %v1224 = vshll.u32 %v1220, 16
        %v1225 = vshrl.u32 %v1220, 16
        %vm1226 = vc.u32 %v1218, %v1222
        %v1227 = vsel %vm1226, 1, 0
        %v1228 = vadd.s32 %v1218, %v1222
        %v1229 = vadd.s32 %v1221, %v1227
        %vm1230 = vc.u32 %v1228, %v1224
        %v1231 = vsel %vm1230, 1, 0
        %v1232 = vadd.s32 %v1228, %v1224
        %v1233 = vadd.s32 %v1229, %v1231
        %v1234 = vadd.s32 %v1233, %v1223
        %v1235 = vadd.s32 %v1234, %v1225
        %v1236 = vmul.u32 %v1191, %v1182
        %v1237 = vadd.s32 %v1213, %v1232
        %vm1238 = vc.u32 %v1213, %v1232
        %v1239 = vadd.s32 %v1235, 1
        %v1240 = vsel %vm1238, %v1239, %v1235
        %v1241 = vadd.s32 %v1236, %v1240
        %v1242 = vadd.s32 %v1241, 536870912
        %v1243 = vshrl.u32 %v1242, 30
        %v1244 = vshll.u32 %v1243, 30
        %v1245 = vsub.s32 %v1241, %v1244
        %vm1246 = vcmp.lt.s32.totalorder %v1245, 0
        %v1247 = vsub.s32 0, %v1245
        %v1248 = vsel %vm1246, %v1247, %v1245
        %v1249 = vclz %v1248
        %v1250 = vsub.s32 %v1249, 2
        %vm1251 = vcmp.gt.s32.totalorder 0, %v1250
        %v1252 = vsel %vm1251, 0, %v1250
        %v1253 = vsub.s32 32, %v1252
        %v1254 = vshll.u32 %v1245, %v1252
        %v1255 = vshrl.u32 %v1237, %v1253
        %v1256 = vor.u32 %v1254, %v1255
        %v1257 = vsub.s32 4294967266, %v1252
        %v1258 = vadd.s32 %v1257, 127
        %v1259 = vshll.u32 %v1258, 23
        %v1260 = vor.u32 4788187, %v1259
        %v1261 = vand.u32 2147483647, %v1260
        %v1263 = vcvt.s32.f32 %v1256
        %v1264 = vmul.f32 %v1263, %v1261
        %v1265 = vxor.u32 %v1264, 2147483648
        %v1266 = vsel %vm1145, %v1265, %v1264
        %v1267 = vsub.s32 4, %v1243
        %v1268 = vsel %vm1145, %v1267, %v1243
        %v1269 = vsel %vm1144, %v649, %v1266
        %v1270 = vsel %vm1144, 0, %v1268
        %v1271 = vmul.f32 %v1269, %v1269
        %v1272 = vmul.f32 %v1271, -0.001358992
        %v1273 = vadd.f32 %v1272, 0.041655596
        %v1274 = vmul.f32 %v1271, %v1273
        %v1275 = vadd.f32 %v1274, -0.4999988
        %v1276 = vmul.f32 %v1271, %v1275
        %v1277 = vadd.f32 1.0, %v1276
        %v1278 = vmul.f32 %v1269, %v1269
        %v1279 = vmul.f32 %v1278, -0.00019511016
        %v1280 = vadd.f32 %v1279, 0.008332121
        %v1281 = vmul.f32 %v1278, %v1280
        %v1282 = vadd.f32 %v1281, -0.16666654
        %v1283 = vmul.f32 %v1278, %v1282
        %v1284 = vadd.f32 %v1283, 1.0
        %v1285 = vmul.f32 %v1284, %v1269
        %vm1286 = vweird.f32 %v649
        %v1287 = vadd.s32 %v1270, 3
        %v1288 = vand.u32 %v1287, 3
        %vm1289 = vcmp.lt.s32.totalorder %v1288, 2
        %vm1290 = vcmp.eq.s32.totalorder %v1288, 0
        %v1291 = vxor.u32 %v1285, 2147483648
        %v1292 = vsel %vm1290, %v1277, %v1291
        %vm1293 = vcmp.eq.s32.totalorder %v1288, 2
        %v1294 = vxor.u32 %v1277, 2147483648
        %v1295 = vsel %vm1293, %v1294, %v1285
        %v1296 = vsel %vm1289, %v1292, %v1295
        %v1297 = vsel %vm1286, nan, %v1296
        %v1298 = vand.u32 2147483647, %v650
        %vm1299 = vcmp.le.f32.partialorder %v1298, 0.7853982
        %vm1300 = vcmp.lt.s32.totalorder %v650, 0
        %v1301 = vand.u32 %v650, 2139095040
        %v1302 = vshrl.u32 %v1301, 23
        %v1303 = vsub.s32 %v1302, 127
        %v1304 = vand.u32 2147483647, %v650
        %v1305 = vand.u32 %v1304, 8388607
        %v1306 = vor.u32 %v1305, 8388608
        %v1307 = vsub.s32 0, %v1306
        %v1308 = vadd.s32 %v1303, 1
        %vm1309 = vcmp.gt.s32.totalorder %v1308, 0
        %v1310 = vsel %vm1309, %v1308, 0
        %v1311 = vshrl.u32 %v1310, 5
        %v1312 = vand.u32 %v1310, 31
        %v1313 = vsub.s32 32, %v1312
        %v1314 = vshrl.u32 683565275, %v1313
        %v1315 = vshll.u32 683565275, %v1312
        %v1316 = vshrl.u32 2475754826, %v1313
        %v1317 = vor.u32 %v1315, %v1316
        %v1318 = vshll.u32 2475754826, %v1312
        %v1319 = vshrl.u32 2131351028, %v1313
        %v1320 = vor.u32 %v1318, %v1319
        %v1321 = vshll.u32 2131351028, %v1312
        %v1322 = vshrl.u32 2102212464, %v1313
        %v1323 = vor.u32 %v1321, %v1322
        %v1324 = vshll.u32 2102212464, %v1312
        %v1325 = vshrl.u32 920167782, %v1313
        %v1326 = vor.u32 %v1324, %v1325
        %v1327 = vshll.u32 920167782, %v1312
        %v1328 = vshrl.u32 1326507024, %v1313
        %v1329 = vor.u32 %v1327, %v1328
        %vm1330 = vcmp.lt.s32.totalorder %v1311, 1
        %vm1331 = vcmp.lt.s32.totalorder %v1311, 2
        %vm1332 = vcmp.lt.s32.totalorder %v1311, 3
        %vm1333 = vcmp.lt.s32.totalorder %v1311, 4
        %v1334 = vsel %vm1330, %v1314, %v1317
        %v1335 = vsel %vm1333, %v1323, 2102212464
        %v1336 = vsel %vm1332, %v1320, %v1335
        %v1337 = vsel %vm1331, %v1334, %v1336
        %v1338 = vsel %vm1330, %v1317, %v1320
        %v1339 = vsel %vm1333, %v1326, 920167782
        %v1340 = vsel %vm1332, %v1323, %v1339
        %v1341 = vsel %vm1331, %v1338, %v1340
        %v1342 = vsel %vm1330, %v1320, %v1323
        %v1343 = vsel %vm1333, %v1329, 1326507024
        %v1344 = vsel %vm1332, %v1326, %v1343
        %v1345 = vsel %vm1331, %v1342, %v1344
        %v1346 = vshll.u32 %v1306, 8
        %v1347 = vand.u32 %v1346, 65535
        %v1348 = vshrl.u32 %v1346, 16
        %v1349 = vand.u32 %v1345, 65535
        %v1350 = vshrl.u32 %v1345, 16
        %v1351 = vmul.u32 %v1347, %v1349
        %v1352 = vmul.u32 %v1347, %v1350
        %v1353 = vmul.u32 %v1348, %v1349
        %v1354 = vmul.u32 %v1348, %v1350
        %v1355 = vshll.u32 %v1352, 16
        %v1356 = vshrl.u32 %v1352, 16
        %v1357 = vshll.u32 %v1353, 16
        %v1358 = vshrl.u32 %v1353, 16
        %vm1359 = vc.u32 %v1351, %v1355
        %v1360 = vsel %vm1359, 1, 0
        %v1361 = vadd.s32 %v1351, %v1355
        %v1362 = vadd.s32 %v1354, %v1360
        %vm1363 = vc.u32 %v1361, %v1357
        %v1364 = vsel %vm1363, 1, 0
        %v1365 = vadd.s32 %v1361, %v1357
        %v1366 = vadd.s32 %v1362, %v1364
        %v1367 = vadd.s32 %v1366, %v1356
        %v1368 = vadd.s32 %v1367, %v1358
        %v1369 = vand.u32 %v1346, 65535
        %v1370 = vshrl.u32 %v1346, 16
        %v1371 = vand.u32 %v1341, 65535
        %v1372 = vshrl.u32 %v1341, 16
        %v1373 = vmul.u32 %v1369, %v1371
        %v1374 = vmul.u32 %v1369, %v1372
        %v1375 = vmul.u32 %v1370, %v1371
        %v1376 = vmul.u32 %v1370, %v1372
        %v1377 = vshll.u32 %v1374, 16
        %v1378 = vshrl.u32 %v1374, 16
        %v1379 = vshll.u32 %v1375, 16
        %v1380 = vshrl.u32 %v1375, 16
        %vm1381 = vc.u32 %v1373, %v1377
        %v1382 = vsel %vm1381, 1, 0
        %v1383 = vadd.s32 %v1373, %v1377
        %v1384 = vadd.s32 %v1376, %v1382
        %vm1385 = vc.u32 %v1383, %v1379
        %v1386 = vsel %vm1385, 1, 0
        %v1387 = vadd.s32 %v1383, %v1379
        %v1388 = vadd.s32 %v1384, %v1386
        %v1389 = vadd.s32 %v1388, %v1378
        %v1390 = vadd.s32 %v1389, %v1380
        %v1391 = vmul.u32 %v1346, %v1337
        %v1392 = vadd.s32 %v1368, %v1387
        %vm1393 = vc.u32 %v1368, %v1387
        %v1394 = vadd.s32 %v1390, 1
        %v1395 = vsel %vm1393, %v1394, %v1390
        %v1396 = vadd.s32 %v1391, %v1395
        %v1397 = vadd.s32 %v1396, 536870912
        %v1398 = vshrl.u32 %v1397, 30
        %v1399 = vshll.u32 %v1398, 30
        %v1400 = vsub.s32 %v1396, %v1399
        %vm1401 = vcmp.lt.s32.totalorder %v1400, 0
        %v1402 = vsub.s32 0, %v1400
        %v1403 = vsel %vm1401, %v1402, %v1400
        %v1404 = vclz %v1403
        %v1405 = vsub.s32 %v1404, 2
        %vm1406 = vcmp.gt.s32.totalorder 0, %v1405
        %v1407 = vsel %vm1406, 0, %v1405
        %v1408 = vsub.s32 32, %v1407
        %v1409 = vshll.u32 %v1400, %v1407
        %v1410 = vshrl.u32 %v1392, %v1408
        %v1411 = vor.u32 %v1409, %v1410
        %v1412 = vsub.s32 4294967266, %v1407
        %v1413 = vadd.s32 %v1412, 127
        %v1414 = vshll.u32 %v1413, 23
        %v1415 = vor.u32 4788187, %v1414
        %v1416 = vand.u32 2147483647, %v1415
        %v1418 = vcvt.s32.f32 %v1411
        %v1419 = vmul.f32 %v1418, %v1416
        %v1420 = vxor.u32 %v1419, 2147483648
        %v1421 = vsel %vm1300, %v1420, %v1419
        %v1422 = vsub.s32 4, %v1398
        %v1423 = vsel %vm1300, %v1422, %v1398
        %v1424 = vsel %vm1299, %v650, %v1421
        %v1425 = vsel %vm1299, 0, %v1423
        %v1426 = vmul.f32 %v1424, %v1424
        %v1427 = vmul.f32 %v1426, -0.001358992
        %v1428 = vadd.f32 %v1427, 0.041655596
        %v1429 = vmul.f32 %v1426, %v1428
        %v1430 = vadd.f32 %v1429, -0.4999988
        %v1431 = vmul.f32 %v1426, %v1430
        %v1432 = vadd.f32 1.0, %v1431
        %v1433 = vmul.f32 %v1424, %v1424
        %v1434 = vmul.f32 %v1433, -0.00019511016
        %v1435 = vadd.f32 %v1434, 0.008332121
        %v1436 = vmul.f32 %v1433, %v1435
        %v1437 = vadd.f32 %v1436, -0.16666654
        %v1438 = vmul.f32 %v1433, %v1437
        %v1439 = vadd.f32 %v1438, 1.0
        %v1440 = vmul.f32 %v1439, %v1424
        %vm1441 = vweird.f32 %v650
        %v1442 = vadd.s32 %v1425, 3
        %v1443 = vand.u32 %v1442, 3
        %vm1444 = vcmp.lt.s32.totalorder %v1443, 2
        %vm1445 = vcmp.eq.s32.totalorder %v1443, 0
        %v1446 = vxor.u32 %v1440, 2147483648
        %v1447 = vsel %vm1445, %v1432, %v1446
        %vm1448 = vcmp.eq.s32.totalorder %v1443, 2
        %v1449 = vxor.u32 %v1432, 2147483648
        %v1450 = vsel %vm1448, %v1449, %v1440
        %v1451 = vsel %vm1444, %v1447, %v1450
        %v1452 = vsel %vm1441, nan, %v1451
        %v1453 = vand.u32 2147483647, %v651
        %vm1454 = vcmp.le.f32.partialorder %v1453, 0.7853982
        %vm1455 = vcmp.lt.s32.totalorder %v651, 0
        %v1456 = vand.u32 %v651, 2139095040
        %v1457 = vshrl.u32 %v1456, 23
        %v1458 = vsub.s32 %v1457, 127
        %v1459 = vand.u32 2147483647, %v651
        %v1460 = vand.u32 %v1459, 8388607
        %v1461 = vor.u32 %v1460, 8388608
        %v1462 = vsub.s32 0, %v1461
        %v1463 = vadd.s32 %v1458, 1
        %vm1464 = vcmp.gt.s32.totalorder %v1463, 0
        %v1465 = vsel %vm1464, %v1463, 0
        %v1466 = vshrl.u32 %v1465, 5
        %v1467 = vand.u32 %v1465, 31
        %v1468 = vsub.s32 32, %v1467
        %v1469 = vshrl.u32 683565275, %v1468
        %v1470 = vshll.u32 683565275, %v1467
        %v1471 = vshrl.u32 2475754826, %v1468
        %v1472 = vor.u32 %v1470, %v1471
        %v1473 = vshll.u32 2475754826, %v1467
        %v1474 = vshrl.u32 2131351028, %v1468
        %v1475 = vor.u32 %v1473, %v1474
        %v1476 = vshll.u32 2131351028, %v1467
        %v1477 = vshrl.u32 2102212464, %v1468
        %v1478 = vor.u32 %v1476, %v1477
        %v1479 = vshll.u32 2102212464, %v1467
        %v1480 = vshrl.u32 920167782, %v1468
        %v1481 = vor.u32 %v1479, %v1480
        %v1482 = vshll.u32 920167782, %v1467
        %v1483 = vshrl.u32 1326507024, %v1468
        %v1484 = vor.u32 %v1482, %v1483
        %vm1485 = vcmp.lt.s32.totalorder %v1466, 1
        %vm1486 = vcmp.lt.s32.totalorder %v1466, 2
        %vm1487 = vcmp.lt.s32.totalorder %v1466, 3
        %vm1488 = vcmp.lt.s32.totalorder %v1466, 4
        %v1489 = vsel %vm1485, %v1469, %v1472
        %v1490 = vsel %vm1488, %v1478, 2102212464
        %v1491 = vsel %vm1487, %v1475, %v1490
        %v1492 = vsel %vm1486, %v1489, %v1491
        %v1493 = vsel %vm1485, %v1472, %v1475
        %v1494 = vsel %vm1488, %v1481, 920167782
        %v1495 = vsel %vm1487, %v1478, %v1494
        %v1496 = vsel %vm1486, %v1493, %v1495
        %v1497 = vsel %vm1485, %v1475, %v1478
        %v1498 = vsel %vm1488, %v1484, 1326507024
        %v1499 = vsel %vm1487, %v1481, %v1498
        %v1500 = vsel %vm1486, %v1497, %v1499
        %v1501 = vshll.u32 %v1461, 8
        %v1502 = vand.u32 %v1501, 65535
        %v1503 = vshrl.u32 %v1501, 16
        %v1504 = vand.u32 %v1500, 65535
        %v1505 = vshrl.u32 %v1500, 16
        %v1506 = vmul.u32 %v1502, %v1504
        %v1507 = vmul.u32 %v1502, %v1505
        %v1508 = vmul.u32 %v1503, %v1504
        %v1509 = vmul.u32 %v1503, %v1505
        %v1510 = vshll.u32 %v1507, 16
        %v1511 = vshrl.u32 %v1507, 16
        %v1512 = vshll.u32 %v1508, 16
        %v1513 = vshrl.u32 %v1508, 16
        %vm1514 = vc.u32 %v1506, %v1510
        %v1515 = vsel %vm1514, 1, 0
        %v1516 = vadd.s32 %v1506, %v1510
        %v1517 = vadd.s32 %v1509, %v1515
        %vm1518 = vc.u32 %v1516, %v1512
        %v1519 = vsel %vm1518, 1, 0
        %v1520 = vadd.s32 %v1516, %v1512
        %v1521 = vadd.s32 %v1517, %v1519
        %v1522 = vadd.s32 %v1521, %v1511
        %v1523 = vadd.s32 %v1522, %v1513
        %v1524 = vand.u32 %v1501, 65535
        %v1525 = vshrl.u32 %v1501, 16
        %v1526 = vand.u32 %v1496, 65535
        %v1527 = vshrl.u32 %v1496, 16
        %v1528 = vmul.u32 %v1524, %v1526
        %v1529 = vmul.u32 %v1524, %v1527
        %v1530 = vmul.u32 %v1525, %v1526
        %v1531 = vmul.u32 %v1525, %v1527
        %v1532 = vshll.u32 %v1529, 16
        %v1533 = vshrl.u32 %v1529, 16
        %v1534 = vshll.u32 %v1530, 16
        %v1535 = vshrl.u32 %v1530, 16
        %vm1536 = vc.u32 %v1528, %v1532
        %v1537 = vsel %vm1536, 1, 0
        %v1538 = vadd.s32 %v1528, %v1532
        %v1539 = vadd.s32 %v1531, %v1537
        %vm1540 = vc.u32 %v1538, %v1534
        %v1541 = vsel %vm1540, 1, 0
        %v1542 = vadd.s32 %v1538, %v1534
        %v1543 = vadd.s32 %v1539, %v1541
        %v1544 = vadd.s32 %v1543, %v1533
        %v1545 = vadd.s32 %v1544, %v1535
        %v1546 = vmul.u32 %v1501, %v1492
        %v1547 = vadd.s32 %v1523, %v1542
        %vm1548 = vc.u32 %v1523, %v1542
        %v1549 = vadd.s32 %v1545, 1
        %v1550 = vsel %vm1548, %v1549, %v1545
        %v1551 = vadd.s32 %v1546, %v1550
        %v1552 = vadd.s32 %v1551, 536870912
        %v1553 = vshrl.u32 %v1552, 30
        %v1554 = vshll.u32 %v1553, 30
        %v1555 = vsub.s32 %v1551, %v1554
        %vm1556 = vcmp.lt.s32.totalorder %v1555, 0
        %v1557 = vsub.s32 0, %v1555
        %v1558 = vsel %vm1556, %v1557, %v1555
        %v1559 = vclz %v1558
        %v1560 = vsub.s32 %v1559, 2
        %vm1561 = vcmp.gt.s32.totalorder 0, %v1560
        %v1562 = vsel %vm1561, 0, %v1560
        %v1563 = vsub.s32 32, %v1562
        %v1564 = vshll.u32 %v1555, %v1562
        %v1565 = vshrl.u32 %v1547, %v1563
        %v1566 = vor.u32 %v1564, %v1565
        %v1567 = vsub.s32 4294967266, %v1562
        %v1568 = vadd.s32 %v1567, 127
        %v1569 = vshll.u32 %v1568, 23
        %v1570 = vor.u32 4788187, %v1569
        %v1571 = vand.u32 2147483647, %v1570
        %v1573 = vcvt.s32.f32 %v1566
        %v1574 = vmul.f32 %v1573, %v1571
        %v1575 = vxor.u32 %v1574, 2147483648
        %v1576 = vsel %vm1455, %v1575, %v1574
        %v1577 = vsub.s32 4, %v1553
        %v1578 = vsel %vm1455, %v1577, %v1553
        %v1579 = vsel %vm1454, %v651, %v1576
        %v1580 = vsel %vm1454, 0, %v1578
        %v1581 = vmul.f32 %v1579, %v1579
        %v1582 = vmul.f32 %v1581, -0.001358992
        %v1583 = vadd.f32 %v1582, 0.041655596
        %v1584 = vmul.f32 %v1581, %v1583
        %v1585 = vadd.f32 %v1584, -0.4999988
        %v1586 = vmul.f32 %v1581, %v1585
        %v1587 = vadd.f32 1.0, %v1586
        %v1588 = vmul.f32 %v1579, %v1579
        %v1589 = vmul.f32 %v1588, -0.00019511016
        %v1590 = vadd.f32 %v1589, 0.008332121
        %v1591 = vmul.f32 %v1588, %v1590
        %v1592 = vadd.f32 %v1591, -0.16666654
        %v1593 = vmul.f32 %v1588, %v1592
        %v1594 = vadd.f32 %v1593, 1.0
        %v1595 = vmul.f32 %v1594, %v1579
        %vm1596 = vweird.f32 %v651
        %v1597 = vadd.s32 %v1580, 3
        %v1598 = vand.u32 %v1597, 3
        %vm1599 = vcmp.lt.s32.totalorder %v1598, 2
        %vm1600 = vcmp.eq.s32.totalorder %v1598, 0
        %v1601 = vxor.u32 %v1595, 2147483648
        %v1602 = vsel %vm1600, %v1587, %v1601
        %vm1603 = vcmp.eq.s32.totalorder %v1598, 2
        %v1604 = vxor.u32 %v1587, 2147483648
        %v1605 = vsel %vm1603, %v1604, %v1595
        %v1606 = vsel %vm1599, %v1602, %v1605
        %v1607 = vsel %vm1596, nan, %v1606
        %v1608 = vand.u32 2147483647, %v652
        %vm1609 = vcmp.le.f32.partialorder %v1608, 0.7853982
        %vm1610 = vcmp.lt.s32.totalorder %v652, 0
        %v1611 = vand.u32 %v652, 2139095040
        %v1612 = vshrl.u32 %v1611, 23
        %v1613 = vsub.s32 %v1612, 127
        %v1614 = vand.u32 2147483647, %v652
        %v1615 = vand.u32 %v1614, 8388607
        %v1616 = vor.u32 %v1615, 8388608
        %v1617 = vsub.s32 0, %v1616
        %v1618 = vadd.s32 %v1613, 1
        %vm1619 = vcmp.gt.s32.totalorder %v1618, 0
        %v1620 = vsel %vm1619, %v1618, 0
        %v1621 = vshrl.u32 %v1620, 5
        %v1622 = vand.u32 %v1620, 31
        %v1623 = vsub.s32 32, %v1622
        %v1624 = vshrl.u32 683565275, %v1623
        %v1625 = vshll.u32 683565275, %v1622
        %v1626 = vshrl.u32 2475754826, %v1623
        %v1627 = vor.u32 %v1625, %v1626
        %v1628 = vshll.u32 2475754826, %v1622
        %v1629 = vshrl.u32 2131351028, %v1623
        %v1630 = vor.u32 %v1628, %v1629
        %v1631 = vshll.u32 2131351028, %v1622
        %v1632 = vshrl.u32 2102212464, %v1623
        %v1633 = vor.u32 %v1631, %v1632
        %v1634 = vshll.u32 2102212464, %v1622
        %v1635 = vshrl.u32 920167782, %v1623
        %v1636 = vor.u32 %v1634, %v1635
        %v1637 = vshll.u32 920167782, %v1622
        %v1638 = vshrl.u32 1326507024, %v1623
        %v1639 = vor.u32 %v1637, %v1638
        %vm1640 = vcmp.lt.s32.totalorder %v1621, 1
        %vm1641 = vcmp.lt.s32.totalorder %v1621, 2
        %vm1642 = vcmp.lt.s32.totalorder %v1621, 3
        %vm1643 = vcmp.lt.s32.totalorder %v1621, 4
        %v1644 = vsel %vm1640, %v1624, %v1627
        %v1645 = vsel %vm1643, %v1633, 2102212464
        %v1646 = vsel %vm1642, %v1630, %v1645
        %v1647 = vsel %vm1641, %v1644, %v1646
        %v1648 = vsel %vm1640, %v1627, %v1630
        %v1649 = vsel %vm1643, %v1636, 920167782
        %v1650 = vsel %vm1642, %v1633, %v1649
        %v1651 = vsel %vm1641, %v1648, %v1650
        %v1652 = vsel %vm1640, %v1630, %v1633
        %v1653 = vsel %vm1643, %v1639, 1326507024
        %v1654 = vsel %vm1642, %v1636, %v1653
        %v1655 = vsel %vm1641, %v1652, %v1654
        %v1656 = vshll.u32 %v1616, 8
        %v1657 = vand.u32 %v1656, 65535
        %v1658 = vshrl.u32 %v1656, 16
        %v1659 = vand.u32 %v1655, 65535
        %v1660 = vshrl.u32 %v1655, 16
        %v1661 = vmul.u32 %v1657, %v1659
        %v1662 = vmul.u32 %v1657, %v1660
        %v1663 = vmul.u32 %v1658, %v1659
        %v1664 = vmul.u32 %v1658, %v1660
        %v1665 = vshll.u32 %v1662, 16
        %v1666 = vshrl.u32 %v1662, 16
        %v1667 = vshll.u32 %v1663, 16
        %v1668 = vshrl.u32 %v1663, 16
        %vm1669 = vc.u32 %v1661, %v1665
        %v1670 = vsel %vm1669, 1, 0
        %v1671 = vadd.s32 %v1661, %v1665
        %v1672 = vadd.s32 %v1664, %v1670
        %vm1673 = vc.u32 %v1671, %v1667
        %v1674 = vsel %vm1673, 1, 0
        %v1675 = vadd.s32 %v1671, %v1667
        %v1676 = vadd.s32 %v1672, %v1674
        %v1677 = vadd.s32 %v1676, %v1666
        %v1678 = vadd.s32 %v1677, %v1668
        %v1679 = vand.u32 %v1656, 65535
        %v1680 = vshrl.u32 %v1656, 16
        %v1681 = vand.u32 %v1651, 65535
        %v1682 = vshrl.u32 %v1651, 16
        %v1683 = vmul.u32 %v1679, %v1681
        %v1684 = vmul.u32 %v1679, %v1682
        %v1685 = vmul.u32 %v1680, %v1681
        %v1686 = vmul.u32 %v1680, %v1682
        %v1687 = vshll.u32 %v1684, 16
        %v1688 = vshrl.u32 %v1684, 16
        %v1689 = vshll.u32 %v1685, 16
        %v1690 = vshrl.u32 %v1685, 16
        %vm1691 = vc.u32 %v1683, %v1687
        %v1692 = vsel %vm1691, 1, 0
        %v1693 = vadd.s32 %v1683, %v1687
        %v1694 = vadd.s32 %v1686, %v1692
        %vm1695 = vc.u32 %v1693, %v1689
        %v1696 = vsel %vm1695, 1, 0
        %v1697 = vadd.s32 %v1693, %v1689
        %v1698 = vadd.s32 %v1694, %v1696
        %v1699 = vadd.s32 %v1698, %v1688
        %v1700 = vadd.s32 %v1699, %v1690
        %v1701 = vmul.u32 %v1656, %v1647
        %v1702 = vadd.s32 %v1678, %v1697
        %vm1703 = vc.u32 %v1678, %v1697
        %v1704 = vadd.s32 %v1700, 1
        %v1705 = vsel %vm1703, %v1704, %v1700
        %v1706 = vadd.s32 %v1701, %v1705
        %v1707 = vadd.s32 %v1706, 536870912
        %v1708 = vshrl.u32 %v1707, 30
        %v1709 = vshll.u32 %v1708, 30
        %v1710 = vsub.s32 %v1706, %v1709
        %vm1711 = vcmp.lt.s32.totalorder %v1710, 0
        %v1712 = vsub.s32 0, %v1710
        %v1713 = vsel %vm1711, %v1712, %v1710
        %v1714 = vclz %v1713
        %v1715 = vsub.s32 %v1714, 2
        %vm1716 = vcmp.gt.s32.totalorder 0, %v1715
        %v1717 = vsel %vm1716, 0, %v1715
        %v1718 = vsub.s32 32, %v1717
        %v1719 = vshll.u32 %v1710, %v1717
        %v1720 = vshrl.u32 %v1702, %v1718
        %v1721 = vor.u32 %v1719, %v1720
        %v1722 = vsub.s32 4294967266, %v1717
        %v1723 = vadd.s32 %v1722, 127
        %v1724 = vshll.u32 %v1723, 23
        %v1725 = vor.u32 4788187, %v1724
        %v1726 = vand.u32 2147483647, %v1725
        %v1728 = vcvt.s32.f32 %v1721
        %v1729 = vmul.f32 %v1728, %v1726
        %v1730 = vxor.u32 %v1729, 2147483648
        %v1731 = vsel %vm1610, %v1730, %v1729
        %v1732 = vsub.s32 4, %v1708
        %v1733 = vsel %vm1610, %v1732, %v1708
        %v1734 = vsel %vm1609, %v652, %v1731
        %v1735 = vsel %vm1609, 0, %v1733
        %v1736 = vmul.f32 %v1734, %v1734
        %v1737 = vmul.f32 %v1736, -0.001358992
        %v1738 = vadd.f32 %v1737, 0.041655596
        %v1739 = vmul.f32 %v1736, %v1738
        %v1740 = vadd.f32 %v1739, -0.4999988
        %v1741 = vmul.f32 %v1736, %v1740
        %v1742 = vadd.f32 1.0, %v1741
        %v1743 = vmul.f32 %v1734, %v1734
        %v1744 = vmul.f32 %v1743, -0.00019511016
        %v1745 = vadd.f32 %v1744, 0.008332121
        %v1746 = vmul.f32 %v1743, %v1745
        %v1747 = vadd.f32 %v1746, -0.16666654
        %v1748 = vmul.f32 %v1743, %v1747
        %v1749 = vadd.f32 %v1748, 1.0
        %v1750 = vmul.f32 %v1749, %v1734
        %vm1751 = vweird.f32 %v652
        %v1752 = vadd.s32 %v1735, 3
        %v1753 = vand.u32 %v1752, 3
        %vm1754 = vcmp.lt.s32.totalorder %v1753, 2
        %vm1755 = vcmp.eq.s32.totalorder %v1753, 0
        %v1756 = vxor.u32 %v1750, 2147483648
        %v1757 = vsel %vm1755, %v1742, %v1756
        %vm1758 = vcmp.eq.s32.totalorder %v1753, 2
        %v1759 = vxor.u32 %v1742, 2147483648
        %v1760 = vsel %vm1758, %v1759, %v1750
        %v1761 = vsel %vm1754, %v1757, %v1760
        %v1762 = vsel %vm1751, nan, %v1761
        %v1763 = vand.u32 2147483647, %v653
        %vm1764 = vcmp.le.f32.partialorder %v1763, 0.7853982
        %vm1765 = vcmp.lt.s32.totalorder %v653, 0
        %v1766 = vand.u32 %v653, 2139095040
        %v1767 = vshrl.u32 %v1766, 23
        %v1768 = vsub.s32 %v1767, 127
        %v1769 = vand.u32 2147483647, %v653
        %v1770 = vand.u32 %v1769, 8388607
        %v1771 = vor.u32 %v1770, 8388608
        %v1772 = vsub.s32 0, %v1771
        %v1773 = vadd.s32 %v1768, 1
        %vm1774 = vcmp.gt.s32.totalorder %v1773, 0
        %v1775 = vsel %vm1774, %v1773, 0
        %v1776 = vshrl.u32 %v1775, 5
        %v1777 = vand.u32 %v1775, 31
        %v1778 = vsub.s32 32, %v1777
        %v1779 = vshrl.u32 683565275, %v1778
        %v1780 = vshll.u32 683565275, %v1777
        %v1781 = vshrl.u32 2475754826, %v1778
        %v1782 = vor.u32 %v1780, %v1781
        %v1783 = vshll.u32 2475754826, %v1777
        %v1784 = vshrl.u32 2131351028, %v1778
        %v1785 = vor.u32 %v1783, %v1784
        %v1786 = vshll.u32 2131351028, %v1777
        %v1787 = vshrl.u32 2102212464, %v1778
        %v1788 = vor.u32 %v1786, %v1787
        %v1789 = vshll.u32 2102212464, %v1777
        %v1790 = vshrl.u32 920167782, %v1778
        %v1791 = vor.u32 %v1789, %v1790
        %v1792 = vshll.u32 920167782, %v1777
        %v1793 = vshrl.u32 1326507024, %v1778
        %v1794 = vor.u32 %v1792, %v1793
        %vm1795 = vcmp.lt.s32.totalorder %v1776, 1
        %vm1796 = vcmp.lt.s32.totalorder %v1776, 2
        %vm1797 = vcmp.lt.s32.totalorder %v1776, 3
        %vm1798 = vcmp.lt.s32.totalorder %v1776, 4
        %v1799 = vsel %vm1795, %v1779, %v1782
        %v1800 = vsel %vm1798, %v1788, 2102212464
        %v1801 = vsel %vm1797, %v1785, %v1800
        %v1802 = vsel %vm1796, %v1799, %v1801
        %v1803 = vsel %vm1795, %v1782, %v1785
        %v1804 = vsel %vm1798, %v1791, 920167782
        %v1805 = vsel %vm1797, %v1788, %v1804
        %v1806 = vsel %vm1796, %v1803, %v1805
        %v1807 = vsel %vm1795, %v1785, %v1788
        %v1808 = vsel %vm1798, %v1794, 1326507024
        %v1809 = vsel %vm1797, %v1791, %v1808
        %v1810 = vsel %vm1796, %v1807, %v1809
        %v1811 = vshll.u32 %v1771, 8
        %v1812 = vand.u32 %v1811, 65535
        %v1813 = vshrl.u32 %v1811, 16
        %v1814 = vand.u32 %v1810, 65535
        %v1815 = vshrl.u32 %v1810, 16
        %v1816 = vmul.u32 %v1812, %v1814
        %v1817 = vmul.u32 %v1812, %v1815
        %v1818 = vmul.u32 %v1813, %v1814
        %v1819 = vmul.u32 %v1813, %v1815
        %v1820 = vshll.u32 %v1817, 16
        %v1821 = vshrl.u32 %v1817, 16
        %v1822 = vshll.u32 %v1818, 16
        %v1823 = vshrl.u32 %v1818, 16
        %vm1824 = vc.u32 %v1816, %v1820
        %v1825 = vsel %vm1824, 1, 0
        %v1826 = vadd.s32 %v1816, %v1820
        %v1827 = vadd.s32 %v1819, %v1825
        %vm1828 = vc.u32 %v1826, %v1822
        %v1829 = vsel %vm1828, 1, 0
        %v1830 = vadd.s32 %v1826, %v1822
        %v1831 = vadd.s32 %v1827, %v1829
        %v1832 = vadd.s32 %v1831, %v1821
        %v1833 = vadd.s32 %v1832, %v1823
        %v1834 = vand.u32 %v1811, 65535
        %v1835 = vshrl.u32 %v1811, 16
        %v1836 = vand.u32 %v1806, 65535
        %v1837 = vshrl.u32 %v1806, 16
        %v1838 = vmul.u32 %v1834, %v1836
        %v1839 = vmul.u32 %v1834, %v1837
        %v1840 = vmul.u32 %v1835, %v1836
        %v1841 = vmul.u32 %v1835, %v1837
        %v1842 = vshll.u32 %v1839, 16
        %v1843 = vshrl.u32 %v1839, 16
        %v1844 = vshll.u32 %v1840, 16
        %v1845 = vshrl.u32 %v1840, 16
        %vm1846 = vc.u32 %v1838, %v1842
        %v1847 = vsel %vm1846, 1, 0
        %v1848 = vadd.s32 %v1838, %v1842
        %v1849 = vadd.s32 %v1841, %v1847
        %vm1850 = vc.u32 %v1848, %v1844
        %v1851 = vsel %vm1850, 1, 0
        %v1852 = vadd.s32 %v1848, %v1844
        %v1853 = vadd.s32 %v1849, %v1851
        %v1854 = vadd.s32 %v1853, %v1843
        %v1855 = vadd.s32 %v1854, %v1845
        %v1856 = vmul.u32 %v1811, %v1802
        %v1857 = vadd.s32 %v1833, %v1852
        %vm1858 = vc.u32 %v1833, %v1852
        %v1859 = vadd.s32 %v1855, 1
        %v1860 = vsel %vm1858, %v1859, %v1855
        %v1861 = vadd.s32 %v1856, %v1860
        %v1862 = vadd.s32 %v1861, 536870912
        %v1863 = vshrl.u32 %v1862, 30
        %v1864 = vshll.u32 %v1863, 30
        %v1865 = vsub.s32 %v1861, %v1864
        %vm1866 = vcmp.lt.s32.totalorder %v1865, 0
        %v1867 = vsub.s32 0, %v1865
        %v1868 = vsel %vm1866, %v1867, %v1865
        %v1869 = vclz %v1868
        %v1870 = vsub.s32 %v1869, 2
        %vm1871 = vcmp.gt.s32.totalorder 0, %v1870
        %v1872 = vsel %vm1871, 0, %v1870
        %v1873 = vsub.s32 32, %v1872
        %v1874 = vshll.u32 %v1865, %v1872
        %v1875 = vshrl.u32 %v1857, %v1873
        %v1876 = vor.u32 %v1874, %v1875
        %v1877 = vsub.s32 4294967266, %v1872
        %v1878 = vadd.s32 %v1877, 127
        %v1879 = vshll.u32 %v1878, 23
        %v1880 = vor.u32 4788187, %v1879
        %v1881 = vand.u32 2147483647, %v1880
        %v1883 = vcvt.s32.f32 %v1876
        %v1884 = vmul.f32 %v1883, %v1881
        %v1885 = vxor.u32 %v1884, 2147483648
        %v1886 = vsel %vm1765, %v1885, %v1884
        %v1887 = vsub.s32 4, %v1863
        %v1888 = vsel %vm1765, %v1887, %v1863
        %v1889 = vsel %vm1764, %v653, %v1886
        %v1890 = vsel %vm1764, 0, %v1888
        %v1891 = vmul.f32 %v1889, %v1889
        %v1892 = vmul.f32 %v1891, -0.001358992
        %v1893 = vadd.f32 %v1892, 0.041655596
        %v1894 = vmul.f32 %v1891, %v1893
        %v1895 = vadd.f32 %v1894, -0.4999988
        %v1896 = vmul.f32 %v1891, %v1895
        %v1897 = vadd.f32 1.0, %v1896
        %v1898 = vmul.f32 %v1889, %v1889
        %v1899 = vmul.f32 %v1898, -0.00019511016
        %v1900 = vadd.f32 %v1899, 0.008332121
        %v1901 = vmul.f32 %v1898, %v1900
        %v1902 = vadd.f32 %v1901, -0.16666654
        %v1903 = vmul.f32 %v1898, %v1902
        %v1904 = vadd.f32 %v1903, 1.0
        %v1905 = vmul.f32 %v1904, %v1889
        %vm1906 = vweird.f32 %v653
        %v1907 = vadd.s32 %v1890, 3
        %v1908 = vand.u32 %v1907, 3
        %vm1909 = vcmp.lt.s32.totalorder %v1908, 2
        %vm1910 = vcmp.eq.s32.totalorder %v1908, 0
        %v1911 = vxor.u32 %v1905, 2147483648
        %v1912 = vsel %vm1910, %v1897, %v1911
        %vm1913 = vcmp.eq.s32.totalorder %v1908, 2
        %v1914 = vxor.u32 %v1897, 2147483648
        %v1915 = vsel %vm1913, %v1914, %v1905
        %v1916 = vsel %vm1909, %v1912, %v1915
        %v1917 = vsel %vm1906, nan, %v1916
        %v1918 = vand.u32 2147483647, %v654
        %vm1919 = vcmp.le.f32.partialorder %v1918, 0.7853982
        %vm1920 = vcmp.lt.s32.totalorder %v654, 0
        %v1921 = vand.u32 %v654, 2139095040
        %v1922 = vshrl.u32 %v1921, 23
        %v1923 = vsub.s32 %v1922, 127
        %v1924 = vand.u32 2147483647, %v654
        %v1925 = vand.u32 %v1924, 8388607
        %v1926 = vor.u32 %v1925, 8388608
        %v1927 = vsub.s32 0, %v1926
        %v1928 = vadd.s32 %v1923, 1
        %vm1929 = vcmp.gt.s32.totalorder %v1928, 0
        %v1930 = vsel %vm1929, %v1928, 0
        %v1931 = vshrl.u32 %v1930, 5
        %v1932 = vand.u32 %v1930, 31
        %v1933 = vsub.s32 32, %v1932
        %v1934 = vshrl.u32 683565275, %v1933
        %v1935 = vshll.u32 683565275, %v1932
        %v1936 = vshrl.u32 2475754826, %v1933
        %v1937 = vor.u32 %v1935, %v1936
        %v1938 = vshll.u32 2475754826, %v1932
        %v1939 = vshrl.u32 2131351028, %v1933
        %v1940 = vor.u32 %v1938, %v1939
        %v1941 = vshll.u32 2131351028, %v1932
        %v1942 = vshrl.u32 2102212464, %v1933
        %v1943 = vor.u32 %v1941, %v1942
        %v1944 = vshll.u32 2102212464, %v1932
        %v1945 = vshrl.u32 920167782, %v1933
        %v1946 = vor.u32 %v1944, %v1945
        %v1947 = vshll.u32 920167782, %v1932
        %v1948 = vshrl.u32 1326507024, %v1933
        %v1949 = vor.u32 %v1947, %v1948
        %vm1950 = vcmp.lt.s32.totalorder %v1931, 1
        %vm1951 = vcmp.lt.s32.totalorder %v1931, 2
        %vm1952 = vcmp.lt.s32.totalorder %v1931, 3
        %vm1953 = vcmp.lt.s32.totalorder %v1931, 4
        %v1954 = vsel %vm1950, %v1934, %v1937
        %v1955 = vsel %vm1953, %v1943, 2102212464
        %v1956 = vsel %vm1952, %v1940, %v1955
        %v1957 = vsel %vm1951, %v1954, %v1956
        %v1958 = vsel %vm1950, %v1937, %v1940
        %v1959 = vsel %vm1953, %v1946, 920167782
        %v1960 = vsel %vm1952, %v1943, %v1959
        %v1961 = vsel %vm1951, %v1958, %v1960
        %v1962 = vsel %vm1950, %v1940, %v1943
        %v1963 = vsel %vm1953, %v1949, 1326507024
        %v1964 = vsel %vm1952, %v1946, %v1963
        %v1965 = vsel %vm1951, %v1962, %v1964
        %v1966 = vshll.u32 %v1926, 8
        %v1967 = vand.u32 %v1966, 65535
        %v1968 = vshrl.u32 %v1966, 16
        %v1969 = vand.u32 %v1965, 65535
        %v1970 = vshrl.u32 %v1965, 16
        %v1971 = vmul.u32 %v1967, %v1969
        %v1972 = vmul.u32 %v1967, %v1970
        %v1973 = vmul.u32 %v1968, %v1969
        %v1974 = vmul.u32 %v1968, %v1970
        %v1975 = vshll.u32 %v1972, 16
        %v1976 = vshrl.u32 %v1972, 16
        %v1977 = vshll.u32 %v1973, 16
        %v1978 = vshrl.u32 %v1973, 16
        %vm1979 = vc.u32 %v1971, %v1975
        %v1980 = vsel %vm1979, 1, 0
        %v1981 = vadd.s32 %v1971, %v1975
        %v1982 = vadd.s32 %v1974, %v1980
        %vm1983 = vc.u32 %v1981, %v1977
        %v1984 = vsel %vm1983, 1, 0
        %v1985 = vadd.s32 %v1981, %v1977
        %v1986 = vadd.s32 %v1982, %v1984
        %v1987 = vadd.s32 %v1986, %v1976
        %v1988 = vadd.s32 %v1987, %v1978
        %v1989 = vand.u32 %v1966, 65535
        %v1990 = vshrl.u32 %v1966, 16
        %v1991 = vand.u32 %v1961, 65535
        %v1992 = vshrl.u32 %v1961, 16
        %v1993 = vmul.u32 %v1989, %v1991
        %v1994 = vmul.u32 %v1989, %v1992
        %v1995 = vmul.u32 %v1990, %v1991
        %v1996 = vmul.u32 %v1990, %v1992
        %v1997 = vshll.u32 %v1994, 16
        %v1998 = vshrl.u32 %v1994, 16
        %v1999 = vshll.u32 %v1995, 16
        %v2000 = vshrl.u32 %v1995, 16
        %vm2001 = vc.u32 %v1993, %v1997
        %v2002 = vsel %vm2001, 1, 0
        %v2003 = vadd.s32 %v1993, %v1997
        %v2004 = vadd.s32 %v1996, %v2002
        %vm2005 = vc.u32 %v2003, %v1999
        %v2006 = vsel %vm2005, 1, 0
        %v2007 = vadd.s32 %v2003, %v1999
        %v2008 = vadd.s32 %v2004, %v2006
        %v2009 = vadd.s32 %v2008, %v1998
        %v2010 = vadd.s32 %v2009, %v2000
        %v2011 = vmul.u32 %v1966, %v1957
        %v2012 = vadd.s32 %v1988, %v2007
        %vm2013 = vc.u32 %v1988, %v2007
        %v2014 = vadd.s32 %v2010, 1
        %v2015 = vsel %vm2013, %v2014, %v2010
        %v2016 = vadd.s32 %v2011, %v2015
        %v2017 = vadd.s32 %v2016, 536870912
        %v2018 = vshrl.u32 %v2017, 30
        %v2019 = vshll.u32 %v2018, 30
        %v2020 = vsub.s32 %v2016, %v2019
        %vm2021 = vcmp.lt.s32.totalorder %v2020, 0
        %v2022 = vsub.s32 0, %v2020
        %v2023 = vsel %vm2021, %v2022, %v2020
        %v2024 = vclz %v2023
        %v2025 = vsub.s32 %v2024, 2
        %vm2026 = vcmp.gt.s32.totalorder 0, %v2025
        %v2027 = vsel %vm2026, 0, %v2025
        %v2028 = vsub.s32 32, %v2027
        %v2029 = vshll.u32 %v2020, %v2027
        %v2030 = vshrl.u32 %v2012, %v2028
        %v2031 = vor.u32 %v2029, %v2030
        %v2032 = vsub.s32 4294967266, %v2027
        %v2033 = vadd.s32 %v2032, 127
        %v2034 = vshll.u32 %v2033, 23
        %v2035 = vor.u32 4788187, %v2034
        %v2036 = vand.u32 2147483647, %v2035
        %v2038 = vcvt.s32.f32 %v2031
        %v2039 = vmul.f32 %v2038, %v2036
        %v2040 = vxor.u32 %v2039, 2147483648
        %v2041 = vsel %vm1920, %v2040, %v2039
        %v2042 = vsub.s32 4, %v2018
        %v2043 = vsel %vm1920, %v2042, %v2018
        %v2044 = vsel %vm1919, %v654, %v2041
        %v2045 = vsel %vm1919, 0, %v2043
        %v2046 = vmul.f32 %v2044, %v2044
        %v2047 = vmul.f32 %v2046, -0.001358992
        %v2048 = vadd.f32 %v2047, 0.041655596
        %v2049 = vmul.f32 %v2046, %v2048
        %v2050 = vadd.f32 %v2049, -0.4999988
        %v2051 = vmul.f32 %v2046, %v2050
        %v2052 = vadd.f32 1.0, %v2051
        %v2053 = vmul.f32 %v2044, %v2044
        %v2054 = vmul.f32 %v2053, -0.00019511016
        %v2055 = vadd.f32 %v2054, 0.008332121
        %v2056 = vmul.f32 %v2053, %v2055
        %v2057 = vadd.f32 %v2056, -0.16666654
        %v2058 = vmul.f32 %v2053, %v2057
        %v2059 = vadd.f32 %v2058, 1.0
        %v2060 = vmul.f32 %v2059, %v2044
        %vm2061 = vweird.f32 %v654
        %v2062 = vadd.s32 %v2045, 3
        %v2063 = vand.u32 %v2062, 3
        %vm2064 = vcmp.lt.s32.totalorder %v2063, 2
        %vm2065 = vcmp.eq.s32.totalorder %v2063, 0
        %v2066 = vxor.u32 %v2060, 2147483648
        %v2067 = vsel %vm2065, %v2052, %v2066
        %vm2068 = vcmp.eq.s32.totalorder %v2063, 2
        %v2069 = vxor.u32 %v2052, 2147483648
        %v2070 = vsel %vm2068, %v2069, %v2060
        %v2071 = vsel %vm2064, %v2067, %v2070
        %v2072 = vsel %vm2061, nan, %v2071
        %v2073 = vand.u32 2147483647, %v655
        %vm2074 = vcmp.le.f32.partialorder %v2073, 0.7853982
        %vm2075 = vcmp.lt.s32.totalorder %v655, 0
        %v2076 = vand.u32 %v655, 2139095040
        %v2077 = vshrl.u32 %v2076, 23
        %v2078 = vsub.s32 %v2077, 127
        %v2079 = vand.u32 2147483647, %v655
        %v2080 = vand.u32 %v2079, 8388607
        %v2081 = vor.u32 %v2080, 8388608
        %v2082 = vsub.s32 0, %v2081
        %v2083 = vadd.s32 %v2078, 1
        %vm2084 = vcmp.gt.s32.totalorder %v2083, 0
        %v2085 = vsel %vm2084, %v2083, 0
        %v2086 = vshrl.u32 %v2085, 5
        %v2087 = vand.u32 %v2085, 31
        %v2088 = vsub.s32 32, %v2087
        %v2089 = vshrl.u32 683565275, %v2088
        %v2090 = vshll.u32 683565275, %v2087
        %v2091 = vshrl.u32 2475754826, %v2088
        %v2092 = vor.u32 %v2090, %v2091
        %v2093 = vshll.u32 2475754826, %v2087
        %v2094 = vshrl.u32 2131351028, %v2088
        %v2095 = vor.u32 %v2093, %v2094
        %v2096 = vshll.u32 2131351028, %v2087
        %v2097 = vshrl.u32 2102212464, %v2088
        %v2098 = vor.u32 %v2096, %v2097
        %v2099 = vshll.u32 2102212464, %v2087
        %v2100 = vshrl.u32 920167782, %v2088
        %v2101 = vor.u32 %v2099, %v2100
        %v2102 = vshll.u32 920167782, %v2087
        %v2103 = vshrl.u32 1326507024, %v2088
        %v2104 = vor.u32 %v2102, %v2103
        %vm2105 = vcmp.lt.s32.totalorder %v2086, 1
        %vm2106 = vcmp.lt.s32.totalorder %v2086, 2
        %vm2107 = vcmp.lt.s32.totalorder %v2086, 3
        %vm2108 = vcmp.lt.s32.totalorder %v2086, 4
        %v2109 = vsel %vm2105, %v2089, %v2092
        %v2110 = vsel %vm2108, %v2098, 2102212464
        %v2111 = vsel %vm2107, %v2095, %v2110
        %v2112 = vsel %vm2106, %v2109, %v2111
        %v2113 = vsel %vm2105, %v2092, %v2095
        %v2114 = vsel %vm2108, %v2101, 920167782
        %v2115 = vsel %vm2107, %v2098, %v2114
        %v2116 = vsel %vm2106, %v2113, %v2115
        %v2117 = vsel %vm2105, %v2095, %v2098
        %v2118 = vsel %vm2108, %v2104, 1326507024
        %v2119 = vsel %vm2107, %v2101, %v2118
        %v2120 = vsel %vm2106, %v2117, %v2119
        %v2121 = vshll.u32 %v2081, 8
        %v2122 = vand.u32 %v2121, 65535
        %v2123 = vshrl.u32 %v2121, 16
        %v2124 = vand.u32 %v2120, 65535
        %v2125 = vshrl.u32 %v2120, 16
        %v2126 = vmul.u32 %v2122, %v2124
        %v2127 = vmul.u32 %v2122, %v2125
        %v2128 = vmul.u32 %v2123, %v2124
        %v2129 = vmul.u32 %v2123, %v2125
        %v2130 = vshll.u32 %v2127, 16
        %v2131 = vshrl.u32 %v2127, 16
        %v2132 = vshll.u32 %v2128, 16
        %v2133 = vshrl.u32 %v2128, 16
        %vm2134 = vc.u32 %v2126, %v2130
        %v2135 = vsel %vm2134, 1, 0
        %v2136 = vadd.s32 %v2126, %v2130
        %v2137 = vadd.s32 %v2129, %v2135
        %vm2138 = vc.u32 %v2136, %v2132
        %v2139 = vsel %vm2138, 1, 0
        %v2140 = vadd.s32 %v2136, %v2132
        %v2141 = vadd.s32 %v2137, %v2139
        %v2142 = vadd.s32 %v2141, %v2131
        %v2143 = vadd.s32 %v2142, %v2133
        %v2144 = vand.u32 %v2121, 65535
        %v2145 = vshrl.u32 %v2121, 16
        %v2146 = vand.u32 %v2116, 65535
        %v2147 = vshrl.u32 %v2116, 16
        %v2148 = vmul.u32 %v2144, %v2146
        %v2149 = vmul.u32 %v2144, %v2147
        %v2150 = vmul.u32 %v2145, %v2146
        %v2151 = vmul.u32 %v2145, %v2147
        %v2152 = vshll.u32 %v2149, 16
        %v2153 = vshrl.u32 %v2149, 16
        %v2154 = vshll.u32 %v2150, 16
        %v2155 = vshrl.u32 %v2150, 16
        %vm2156 = vc.u32 %v2148, %v2152
        %v2157 = vsel %vm2156, 1, 0
        %v2158 = vadd.s32 %v2148, %v2152
        %v2159 = vadd.s32 %v2151, %v2157
        %vm2160 = vc.u32 %v2158, %v2154
        %v2161 = vsel %vm2160, 1, 0
        %v2162 = vadd.s32 %v2158, %v2154
        %v2163 = vadd.s32 %v2159, %v2161
        %v2164 = vadd.s32 %v2163, %v2153
        %v2165 = vadd.s32 %v2164, %v2155
        %v2166 = vmul.u32 %v2121, %v2112
        %v2167 = vadd.s32 %v2143, %v2162
        %vm2168 = vc.u32 %v2143, %v2162
        %v2169 = vadd.s32 %v2165, 1
        %v2170 = vsel %vm2168, %v2169, %v2165
        %v2171 = vadd.s32 %v2166, %v2170
        %v2172 = vadd.s32 %v2171, 536870912
        %v2173 = vshrl.u32 %v2172, 30
        %v2174 = vshll.u32 %v2173, 30
        %v2175 = vsub.s32 %v2171, %v2174
        %vm2176 = vcmp.lt.s32.totalorder %v2175, 0
        %v2177 = vsub.s32 0, %v2175
        %v2178 = vsel %vm2176, %v2177, %v2175
        %v2179 = vclz %v2178
        %v2180 = vsub.s32 %v2179, 2
        %vm2181 = vcmp.gt.s32.totalorder 0, %v2180
        %v2182 = vsel %vm2181, 0, %v2180
        %v2183 = vsub.s32 32, %v2182
        %v2184 = vshll.u32 %v2175, %v2182
        %v2185 = vshrl.u32 %v2167, %v2183
        %v2186 = vor.u32 %v2184, %v2185
        %v2187 = vsub.s32 4294967266, %v2182
        %v2188 = vadd.s32 %v2187, 127
        %v2189 = vshll.u32 %v2188, 23
        %v2190 = vor.u32 4788187, %v2189
        %v2191 = vand.u32 2147483647, %v2190
        %v2193 = vcvt.s32.f32 %v2186
        %v2194 = vmul.f32 %v2193, %v2191
        %v2195 = vxor.u32 %v2194, 2147483648
        %v2196 = vsel %vm2075, %v2195, %v2194
        %v2197 = vsub.s32 4, %v2173
        %v2198 = vsel %vm2075, %v2197, %v2173
        %v2199 = vsel %vm2074, %v655, %v2196
        %v2200 = vsel %vm2074, 0, %v2198
        %v2201 = vmul.f32 %v2199, %v2199
        %v2202 = vmul.f32 %v2201, -0.001358992
        %v2203 = vadd.f32 %v2202, 0.041655596
        %v2204 = vmul.f32 %v2201, %v2203
        %v2205 = vadd.f32 %v2204, -0.4999988
        %v2206 = vmul.f32 %v2201, %v2205
        %v2207 = vadd.f32 1.0, %v2206
        %v2208 = vmul.f32 %v2199, %v2199
        %v2209 = vmul.f32 %v2208, -0.00019511016
        %v2210 = vadd.f32 %v2209, 0.008332121
        %v2211 = vmul.f32 %v2208, %v2210
        %v2212 = vadd.f32 %v2211, -0.16666654
        %v2213 = vmul.f32 %v2208, %v2212
        %v2214 = vadd.f32 %v2213, 1.0
        %v2215 = vmul.f32 %v2214, %v2199
        %vm2216 = vweird.f32 %v655
        %v2217 = vadd.s32 %v2200, 3
        %v2218 = vand.u32 %v2217, 3
        %vm2219 = vcmp.lt.s32.totalorder %v2218, 2
        %vm2220 = vcmp.eq.s32.totalorder %v2218, 0
        %v2221 = vxor.u32 %v2215, 2147483648
        %v2222 = vsel %vm2220, %v2207, %v2221
        %vm2223 = vcmp.eq.s32.totalorder %v2218, 2
        %v2224 = vxor.u32 %v2207, 2147483648
        %v2225 = vsel %vm2223, %v2224, %v2215
        %v2226 = vsel %vm2219, %v2222, %v2225
        %v2227 = vsel %vm2216, nan, %v2226
        %v2228 = vand.u32 2147483647, %v656
        %vm2229 = vcmp.le.f32.partialorder %v2228, 0.7853982
        %vm2230 = vcmp.lt.s32.totalorder %v656, 0
        %v2231 = vand.u32 %v656, 2139095040
        %v2232 = vshrl.u32 %v2231, 23
        %v2233 = vsub.s32 %v2232, 127
        %v2234 = vand.u32 2147483647, %v656
        %v2235 = vand.u32 %v2234, 8388607
        %v2236 = vor.u32 %v2235, 8388608
        %v2237 = vsub.s32 0, %v2236
        %v2238 = vadd.s32 %v2233, 1
        %vm2239 = vcmp.gt.s32.totalorder %v2238, 0
        %v2240 = vsel %vm2239, %v2238, 0
        %v2241 = vshrl.u32 %v2240, 5
        %v2242 = vand.u32 %v2240, 31
        %v2243 = vsub.s32 32, %v2242
        %v2244 = vshrl.u32 683565275, %v2243
        %v2245 = vshll.u32 683565275, %v2242
        %v2246 = vshrl.u32 2475754826, %v2243
        %v2247 = vor.u32 %v2245, %v2246
        %v2248 = vshll.u32 2475754826, %v2242
        %v2249 = vshrl.u32 2131351028, %v2243
        %v2250 = vor.u32 %v2248, %v2249
        %v2251 = vshll.u32 2131351028, %v2242
        %v2252 = vshrl.u32 2102212464, %v2243
        %v2253 = vor.u32 %v2251, %v2252
        %v2254 = vshll.u32 2102212464, %v2242
        %v2255 = vshrl.u32 920167782, %v2243
        %v2256 = vor.u32 %v2254, %v2255
        %v2257 = vshll.u32 920167782, %v2242
        %v2258 = vshrl.u32 1326507024, %v2243
        %v2259 = vor.u32 %v2257, %v2258
        %vm2260 = vcmp.lt.s32.totalorder %v2241, 1
        %vm2261 = vcmp.lt.s32.totalorder %v2241, 2
        %vm2262 = vcmp.lt.s32.totalorder %v2241, 3
        %vm2263 = vcmp.lt.s32.totalorder %v2241, 4
        %v2264 = vsel %vm2260, %v2244, %v2247
        %v2265 = vsel %vm2263, %v2253, 2102212464
        %v2266 = vsel %vm2262, %v2250, %v2265
        %v2267 = vsel %vm2261, %v2264, %v2266
        %v2268 = vsel %vm2260, %v2247, %v2250
        %v2269 = vsel %vm2263, %v2256, 920167782
        %v2270 = vsel %vm2262, %v2253, %v2269
        %v2271 = vsel %vm2261, %v2268, %v2270
        %v2272 = vsel %vm2260, %v2250, %v2253
        %v2273 = vsel %vm2263, %v2259, 1326507024
        %v2274 = vsel %vm2262, %v2256, %v2273
        %v2275 = vsel %vm2261, %v2272, %v2274
        %v2276 = vshll.u32 %v2236, 8
        %v2277 = vand.u32 %v2276, 65535
        %v2278 = vshrl.u32 %v2276, 16
        %v2279 = vand.u32 %v2275, 65535
        %v2280 = vshrl.u32 %v2275, 16
        %v2281 = vmul.u32 %v2277, %v2279
        %v2282 = vmul.u32 %v2277, %v2280
        %v2283 = vmul.u32 %v2278, %v2279
        %v2284 = vmul.u32 %v2278, %v2280
        %v2285 = vshll.u32 %v2282, 16
        %v2286 = vshrl.u32 %v2282, 16
        %v2287 = vshll.u32 %v2283, 16
        %v2288 = vshrl.u32 %v2283, 16
        %vm2289 = vc.u32 %v2281, %v2285
        %v2290 = vsel %vm2289, 1, 0
        %v2291 = vadd.s32 %v2281, %v2285
        %v2292 = vadd.s32 %v2284, %v2290
        %vm2293 = vc.u32 %v2291, %v2287
        %v2294 = vsel %vm2293, 1, 0
        %v2295 = vadd.s32 %v2291, %v2287
        %v2296 = vadd.s32 %v2292, %v2294
        %v2297 = vadd.s32 %v2296, %v2286
        %v2298 = vadd.s32 %v2297, %v2288
        %v2299 = vand.u32 %v2276, 65535
        %v2300 = vshrl.u32 %v2276, 16
        %v2301 = vand.u32 %v2271, 65535
        %v2302 = vshrl.u32 %v2271, 16
        %v2303 = vmul.u32 %v2299, %v2301
        %v2304 = vmul.u32 %v2299, %v2302
        %v2305 = vmul.u32 %v2300, %v2301
        %v2306 = vmul.u32 %v2300, %v2302
        %v2307 = vshll.u32 %v2304, 16
        %v2308 = vshrl.u32 %v2304, 16
        %v2309 = vshll.u32 %v2305, 16
        %v2310 = vshrl.u32 %v2305, 16
        %vm2311 = vc.u32 %v2303, %v2307
        %v2312 = vsel %vm2311, 1, 0
        %v2313 = vadd.s32 %v2303, %v2307
        %v2314 = vadd.s32 %v2306, %v2312
        %vm2315 = vc.u32 %v2313, %v2309
        %v2316 = vsel %vm2315, 1, 0
        %v2317 = vadd.s32 %v2313, %v2309
        %v2318 = vadd.s32 %v2314, %v2316
        %v2319 = vadd.s32 %v2318, %v2308
        %v2320 = vadd.s32 %v2319, %v2310
        %v2321 = vmul.u32 %v2276, %v2267
        %v2322 = vadd.s32 %v2298, %v2317
        %vm2323 = vc.u32 %v2298, %v2317
        %v2324 = vadd.s32 %v2320, 1
        %v2325 = vsel %vm2323, %v2324, %v2320
        %v2326 = vadd.s32 %v2321, %v2325
        %v2327 = vadd.s32 %v2326, 536870912
        %v2328 = vshrl.u32 %v2327, 30
        %v2329 = vshll.u32 %v2328, 30
        %v2330 = vsub.s32 %v2326, %v2329
        %vm2331 = vcmp.lt.s32.totalorder %v2330, 0
        %v2332 = vsub.s32 0, %v2330
        %v2333 = vsel %vm2331, %v2332, %v2330
        %v2334 = vclz %v2333
        %v2335 = vsub.s32 %v2334, 2
        %vm2336 = vcmp.gt.s32.totalorder 0, %v2335
        %v2337 = vsel %vm2336, 0, %v2335
        %v2338 = vsub.s32 32, %v2337
        %v2339 = vshll.u32 %v2330, %v2337
        %v2340 = vshrl.u32 %v2322, %v2338
        %v2341 = vor.u32 %v2339, %v2340
        %v2342 = vsub.s32 4294967266, %v2337
        %v2343 = vadd.s32 %v2342, 127
        %v2344 = vshll.u32 %v2343, 23
        %v2345 = vor.u32 4788187, %v2344
        %v2346 = vand.u32 2147483647, %v2345
        %v2348 = vcvt.s32.f32 %v2341
        %v2349 = vmul.f32 %v2348, %v2346
        %v2350 = vxor.u32 %v2349, 2147483648
        %v2351 = vsel %vm2230, %v2350, %v2349
        %v2352 = vsub.s32 4, %v2328
        %v2353 = vsel %vm2230, %v2352, %v2328
        %v2354 = vsel %vm2229, %v656, %v2351
        %v2355 = vsel %vm2229, 0, %v2353
        %v2356 = vmul.f32 %v2354, %v2354
        %v2357 = vmul.f32 %v2356, -0.001358992
        %v2358 = vadd.f32 %v2357, 0.041655596
        %v2359 = vmul.f32 %v2356, %v2358
        %v2360 = vadd.f32 %v2359, -0.4999988
        %v2361 = vmul.f32 %v2356, %v2360
        %v2362 = vadd.f32 1.0, %v2361
        %v2363 = vmul.f32 %v2354, %v2354
        %v2364 = vmul.f32 %v2363, -0.00019511016
        %v2365 = vadd.f32 %v2364, 0.008332121
        %v2366 = vmul.f32 %v2363, %v2365
        %v2367 = vadd.f32 %v2366, -0.16666654
        %v2368 = vmul.f32 %v2363, %v2367
        %v2369 = vadd.f32 %v2368, 1.0
        %v2370 = vmul.f32 %v2369, %v2354
        %vm2371 = vweird.f32 %v656
        %v2372 = vadd.s32 %v2355, 3
        %v2373 = vand.u32 %v2372, 3
        %vm2374 = vcmp.lt.s32.totalorder %v2373, 2
        %vm2375 = vcmp.eq.s32.totalorder %v2373, 0
        %v2376 = vxor.u32 %v2370, 2147483648
        %v2377 = vsel %vm2375, %v2362, %v2376
        %vm2378 = vcmp.eq.s32.totalorder %v2373, 2
        %v2379 = vxor.u32 %v2362, 2147483648
        %v2380 = vsel %vm2378, %v2379, %v2370
        %v2381 = vsel %vm2374, %v2377, %v2380
        %v2382 = vsel %vm2371, nan, %v2381
        %v2383 = vand.u32 2147483647, %v657
        %vm2384 = vcmp.le.f32.partialorder %v2383, 0.7853982
        %vm2385 = vcmp.lt.s32.totalorder %v657, 0
        %v2386 = vand.u32 %v657, 2139095040
        %v2387 = vshrl.u32 %v2386, 23
        %v2388 = vsub.s32 %v2387, 127
        %v2389 = vand.u32 2147483647, %v657
        %v2390 = vand.u32 %v2389, 8388607
        %v2391 = vor.u32 %v2390, 8388608
        %v2392 = vsub.s32 0, %v2391
        %v2393 = vadd.s32 %v2388, 1
        %vm2394 = vcmp.gt.s32.totalorder %v2393, 0
        %v2395 = vsel %vm2394, %v2393, 0
        %v2396 = vshrl.u32 %v2395, 5
        %v2397 = vand.u32 %v2395, 31
        %v2398 = vsub.s32 32, %v2397
        %v2399 = vshrl.u32 683565275, %v2398
        %v2400 = vshll.u32 683565275, %v2397
        %v2401 = vshrl.u32 2475754826, %v2398
        %v2402 = vor.u32 %v2400, %v2401
        %v2403 = vshll.u32 2475754826, %v2397
        %v2404 = vshrl.u32 2131351028, %v2398
        %v2405 = vor.u32 %v2403, %v2404
        %v2406 = vshll.u32 2131351028, %v2397
        %v2407 = vshrl.u32 2102212464, %v2398
        %v2408 = vor.u32 %v2406, %v2407
        %v2409 = vshll.u32 2102212464, %v2397
        %v2410 = vshrl.u32 920167782, %v2398
        %v2411 = vor.u32 %v2409, %v2410
        %v2412 = vshll.u32 920167782, %v2397
        %v2413 = vshrl.u32 1326507024, %v2398
        %v2414 = vor.u32 %v2412, %v2413
        %vm2415 = vcmp.lt.s32.totalorder %v2396, 1
        %vm2416 = vcmp.lt.s32.totalorder %v2396, 2
        %vm2417 = vcmp.lt.s32.totalorder %v2396, 3
        %vm2418 = vcmp.lt.s32.totalorder %v2396, 4
        %v2419 = vsel %vm2415, %v2399, %v2402
        %v2420 = vsel %vm2418, %v2408, 2102212464
        %v2421 = vsel %vm2417, %v2405, %v2420
        %v2422 = vsel %vm2416, %v2419, %v2421
        %v2423 = vsel %vm2415, %v2402, %v2405
        %v2424 = vsel %vm2418, %v2411, 920167782
        %v2425 = vsel %vm2417, %v2408, %v2424
        %v2426 = vsel %vm2416, %v2423, %v2425
        %v2427 = vsel %vm2415, %v2405, %v2408
        %v2428 = vsel %vm2418, %v2414, 1326507024
        %v2429 = vsel %vm2417, %v2411, %v2428
        %v2430 = vsel %vm2416, %v2427, %v2429
        %v2431 = vshll.u32 %v2391, 8
        %v2432 = vand.u32 %v2431, 65535
        %v2433 = vshrl.u32 %v2431, 16
        %v2434 = vand.u32 %v2430, 65535
        %v2435 = vshrl.u32 %v2430, 16
        %v2436 = vmul.u32 %v2432, %v2434
        %v2437 = vmul.u32 %v2432, %v2435
        %v2438 = vmul.u32 %v2433, %v2434
        %v2439 = vmul.u32 %v2433, %v2435
        %v2440 = vshll.u32 %v2437, 16
        %v2441 = vshrl.u32 %v2437, 16
        %v2442 = vshll.u32 %v2438, 16
        %v2443 = vshrl.u32 %v2438, 16
        %vm2444 = vc.u32 %v2436, %v2440
        %v2445 = vsel %vm2444, 1, 0
        %v2446 = vadd.s32 %v2436, %v2440
        %v2447 = vadd.s32 %v2439, %v2445
        %vm2448 = vc.u32 %v2446, %v2442
        %v2449 = vsel %vm2448, 1, 0
        %v2450 = vadd.s32 %v2446, %v2442
        %v2451 = vadd.s32 %v2447, %v2449
        %v2452 = vadd.s32 %v2451, %v2441
        %v2453 = vadd.s32 %v2452, %v2443
        %v2454 = vand.u32 %v2431, 65535
        %v2455 = vshrl.u32 %v2431, 16
        %v2456 = vand.u32 %v2426, 65535
        %v2457 = vshrl.u32 %v2426, 16
        %v2458 = vmul.u32 %v2454, %v2456
        %v2459 = vmul.u32 %v2454, %v2457
        %v2460 = vmul.u32 %v2455, %v2456
        %v2461 = vmul.u32 %v2455, %v2457
        %v2462 = vshll.u32 %v2459, 16
        %v2463 = vshrl.u32 %v2459, 16
        %v2464 = vshll.u32 %v2460, 16
        %v2465 = vshrl.u32 %v2460, 16
        %vm2466 = vc.u32 %v2458, %v2462
        %v2467 = vsel %vm2466, 1, 0
        %v2468 = vadd.s32 %v2458, %v2462
        %v2469 = vadd.s32 %v2461, %v2467
        %vm2470 = vc.u32 %v2468, %v2464
        %v2471 = vsel %vm2470, 1, 0
        %v2472 = vadd.s32 %v2468, %v2464
        %v2473 = vadd.s32 %v2469, %v2471
        %v2474 = vadd.s32 %v2473, %v2463
        %v2475 = vadd.s32 %v2474, %v2465
        %v2476 = vmul.u32 %v2431, %v2422
        %v2477 = vadd.s32 %v2453, %v2472
        %vm2478 = vc.u32 %v2453, %v2472
        %v2479 = vadd.s32 %v2475, 1
        %v2480 = vsel %vm2478, %v2479, %v2475
        %v2481 = vadd.s32 %v2476, %v2480
        %v2482 = vadd.s32 %v2481, 536870912
        %v2483 = vshrl.u32 %v2482, 30
        %v2484 = vshll.u32 %v2483, 30
        %v2485 = vsub.s32 %v2481, %v2484
        %vm2486 = vcmp.lt.s32.totalorder %v2485, 0
        %v2487 = vsub.s32 0, %v2485
        %v2488 = vsel %vm2486, %v2487, %v2485
        %v2489 = vclz %v2488
        %v2490 = vsub.s32 %v2489, 2
        %vm2491 = vcmp.gt.s32.totalorder 0, %v2490
        %v2492 = vsel %vm2491, 0, %v2490
        %v2493 = vsub.s32 32, %v2492
        %v2494 = vshll.u32 %v2485, %v2492
        %v2495 = vshrl.u32 %v2477, %v2493
        %v2496 = vor.u32 %v2494, %v2495
        %v2497 = vsub.s32 4294967266, %v2492
        %v2498 = vadd.s32 %v2497, 127
        %v2499 = vshll.u32 %v2498, 23
        %v2500 = vor.u32 4788187, %v2499
        %v2501 = vand.u32 2147483647, %v2500
        %v2503 = vcvt.s32.f32 %v2496
        %v2504 = vmul.f32 %v2503, %v2501
        %v2505 = vxor.u32 %v2504, 2147483648
        %v2506 = vsel %vm2385, %v2505, %v2504
        %v2507 = vsub.s32 4, %v2483
        %v2508 = vsel %vm2385, %v2507, %v2483
        %v2509 = vsel %vm2384, %v657, %v2506
        %v2510 = vsel %vm2384, 0, %v2508
        %v2511 = vmul.f32 %v2509, %v2509
        %v2512 = vmul.f32 %v2511, -0.001358992
        %v2513 = vadd.f32 %v2512, 0.041655596
        %v2514 = vmul.f32 %v2511, %v2513
        %v2515 = vadd.f32 %v2514, -0.4999988
        %v2516 = vmul.f32 %v2511, %v2515
        %v2517 = vadd.f32 1.0, %v2516
        %v2518 = vmul.f32 %v2509, %v2509
        %v2519 = vmul.f32 %v2518, -0.00019511016
        %v2520 = vadd.f32 %v2519, 0.008332121
        %v2521 = vmul.f32 %v2518, %v2520
        %v2522 = vadd.f32 %v2521, -0.16666654
        %v2523 = vmul.f32 %v2518, %v2522
        %v2524 = vadd.f32 %v2523, 1.0
        %v2525 = vmul.f32 %v2524, %v2509
        %vm2526 = vweird.f32 %v657
        %v2527 = vadd.s32 %v2510, 3
        %v2528 = vand.u32 %v2527, 3
        %vm2529 = vcmp.lt.s32.totalorder %v2528, 2
        %vm2530 = vcmp.eq.s32.totalorder %v2528, 0
        %v2531 = vxor.u32 %v2525, 2147483648
        %v2532 = vsel %vm2530, %v2517, %v2531
        %vm2533 = vcmp.eq.s32.totalorder %v2528, 2
        %v2534 = vxor.u32 %v2517, 2147483648
        %v2535 = vsel %vm2533, %v2534, %v2525
        %v2536 = vsel %vm2529, %v2532, %v2535
        %v2537 = vsel %vm2526, nan, %v2536
        %v2538 = vand.u32 2147483647, %v658
        %vm2539 = vcmp.le.f32.partialorder %v2538, 0.7853982
        %vm2540 = vcmp.lt.s32.totalorder %v658, 0
        %v2541 = vand.u32 %v658, 2139095040
        %v2542 = vshrl.u32 %v2541, 23
        %v2543 = vsub.s32 %v2542, 127
        %v2544 = vand.u32 2147483647, %v658
        %v2545 = vand.u32 %v2544, 8388607
        %v2546 = vor.u32 %v2545, 8388608
        %v2547 = vsub.s32 0, %v2546
        %v2548 = vadd.s32 %v2543, 1
        %vm2549 = vcmp.gt.s32.totalorder %v2548, 0
        %v2550 = vsel %vm2549, %v2548, 0
        %v2551 = vshrl.u32 %v2550, 5
        %v2552 = vand.u32 %v2550, 31
        %v2553 = vsub.s32 32, %v2552
        %v2554 = vshrl.u32 683565275, %v2553
        %v2555 = vshll.u32 683565275, %v2552
        %v2556 = vshrl.u32 2475754826, %v2553
        %v2557 = vor.u32 %v2555, %v2556
        %v2558 = vshll.u32 2475754826, %v2552
        %v2559 = vshrl.u32 2131351028, %v2553
        %v2560 = vor.u32 %v2558, %v2559
        %v2561 = vshll.u32 2131351028, %v2552
        %v2562 = vshrl.u32 2102212464, %v2553
        %v2563 = vor.u32 %v2561, %v2562
        %v2564 = vshll.u32 2102212464, %v2552
        %v2565 = vshrl.u32 920167782, %v2553
        %v2566 = vor.u32 %v2564, %v2565
        %v2567 = vshll.u32 920167782, %v2552
        %v2568 = vshrl.u32 1326507024, %v2553
        %v2569 = vor.u32 %v2567, %v2568
        %vm2570 = vcmp.lt.s32.totalorder %v2551, 1
        %vm2571 = vcmp.lt.s32.totalorder %v2551, 2
        %vm2572 = vcmp.lt.s32.totalorder %v2551, 3
        %vm2573 = vcmp.lt.s32.totalorder %v2551, 4
        %v2574 = vsel %vm2570, %v2554, %v2557
        %v2575 = vsel %vm2573, %v2563, 2102212464
        %v2576 = vsel %vm2572, %v2560, %v2575
        %v2577 = vsel %vm2571, %v2574, %v2576
        %v2578 = vsel %vm2570, %v2557, %v2560
        %v2579 = vsel %vm2573, %v2566, 920167782
        %v2580 = vsel %vm2572, %v2563, %v2579
        %v2581 = vsel %vm2571, %v2578, %v2580
        %v2582 = vsel %vm2570, %v2560, %v2563
        %v2583 = vsel %vm2573, %v2569, 1326507024
        %v2584 = vsel %vm2572, %v2566, %v2583
        %v2585 = vsel %vm2571, %v2582, %v2584
        %v2586 = vshll.u32 %v2546, 8
        %v2587 = vand.u32 %v2586, 65535
        %v2588 = vshrl.u32 %v2586, 16
        %v2589 = vand.u32 %v2585, 65535
        %v2590 = vshrl.u32 %v2585, 16
        %v2591 = vmul.u32 %v2587, %v2589
        %v2592 = vmul.u32 %v2587, %v2590
        %v2593 = vmul.u32 %v2588, %v2589
        %v2594 = vmul.u32 %v2588, %v2590
        %v2595 = vshll.u32 %v2592, 16
        %v2596 = vshrl.u32 %v2592, 16
        %v2597 = vshll.u32 %v2593, 16
        %v2598 = vshrl.u32 %v2593, 16
        %vm2599 = vc.u32 %v2591, %v2595
        %v2600 = vsel %vm2599, 1, 0
        %v2601 = vadd.s32 %v2591, %v2595
        %v2602 = vadd.s32 %v2594, %v2600
        %vm2603 = vc.u32 %v2601, %v2597
        %v2604 = vsel %vm2603, 1, 0
        %v2605 = vadd.s32 %v2601, %v2597
        %v2606 = vadd.s32 %v2602, %v2604
        %v2607 = vadd.s32 %v2606, %v2596
        %v2608 = vadd.s32 %v2607, %v2598
        %v2609 = vand.u32 %v2586, 65535
        %v2610 = vshrl.u32 %v2586, 16
        %v2611 = vand.u32 %v2581, 65535
        %v2612 = vshrl.u32 %v2581, 16
        %v2613 = vmul.u32 %v2609, %v2611
        %v2614 = vmul.u32 %v2609, %v2612
        %v2615 = vmul.u32 %v2610, %v2611
        %v2616 = vmul.u32 %v2610, %v2612
        %v2617 = vshll.u32 %v2614, 16
        %v2618 = vshrl.u32 %v2614, 16
        %v2619 = vshll.u32 %v2615, 16
        %v2620 = vshrl.u32 %v2615, 16
        %vm2621 = vc.u32 %v2613, %v2617
        %v2622 = vsel %vm2621, 1, 0
        %v2623 = vadd.s32 %v2613, %v2617
        %v2624 = vadd.s32 %v2616, %v2622
        %vm2625 = vc.u32 %v2623, %v2619
        %v2626 = vsel %vm2625, 1, 0
        %v2627 = vadd.s32 %v2623, %v2619
        %v2628 = vadd.s32 %v2624, %v2626
        %v2629 = vadd.s32 %v2628, %v2618
        %v2630 = vadd.s32 %v2629, %v2620
        %v2631 = vmul.u32 %v2586, %v2577
        %v2632 = vadd.s32 %v2608, %v2627
        %vm2633 = vc.u32 %v2608, %v2627
        %v2634 = vadd.s32 %v2630, 1
        %v2635 = vsel %vm2633, %v2634, %v2630
        %v2636 = vadd.s32 %v2631, %v2635
        %v2637 = vadd.s32 %v2636, 536870912
        %v2638 = vshrl.u32 %v2637, 30
        %v2639 = vshll.u32 %v2638, 30
        %v2640 = vsub.s32 %v2636, %v2639
        %vm2641 = vcmp.lt.s32.totalorder %v2640, 0
        %v2642 = vsub.s32 0, %v2640
        %v2643 = vsel %vm2641, %v2642, %v2640
        %v2644 = vclz %v2643
        %v2645 = vsub.s32 %v2644, 2
        %vm2646 = vcmp.gt.s32.totalorder 0, %v2645
        %v2647 = vsel %vm2646, 0, %v2645
        %v2648 = vsub.s32 32, %v2647
        %v2649 = vshll.u32 %v2640, %v2647
        %v2650 = vshrl.u32 %v2632, %v2648
        %v2651 = vor.u32 %v2649, %v2650
        %v2652 = vsub.s32 4294967266, %v2647
        %v2653 = vadd.s32 %v2652, 127
        %v2654 = vshll.u32 %v2653, 23
        %v2655 = vor.u32 4788187, %v2654
        %v2656 = vand.u32 2147483647, %v2655
        %v2658 = vcvt.s32.f32 %v2651
        %v2659 = vmul.f32 %v2658, %v2656
        %v2660 = vxor.u32 %v2659, 2147483648
        %v2661 = vsel %vm2540, %v2660, %v2659
        %v2662 = vsub.s32 4, %v2638
        %v2663 = vsel %vm2540, %v2662, %v2638
        %v2664 = vsel %vm2539, %v658, %v2661
        %v2665 = vsel %vm2539, 0, %v2663
        %v2666 = vmul.f32 %v2664, %v2664
        %v2667 = vmul.f32 %v2666, -0.001358992
        %v2668 = vadd.f32 %v2667, 0.041655596
        %v2669 = vmul.f32 %v2666, %v2668
        %v2670 = vadd.f32 %v2669, -0.4999988
        %v2671 = vmul.f32 %v2666, %v2670
        %v2672 = vadd.f32 1.0, %v2671
        %v2673 = vmul.f32 %v2664, %v2664
        %v2674 = vmul.f32 %v2673, -0.00019511016
        %v2675 = vadd.f32 %v2674, 0.008332121
        %v2676 = vmul.f32 %v2673, %v2675
        %v2677 = vadd.f32 %v2676, -0.16666654
        %v2678 = vmul.f32 %v2673, %v2677
        %v2679 = vadd.f32 %v2678, 1.0
        %v2680 = vmul.f32 %v2679, %v2664
        %vm2681 = vweird.f32 %v658
        %v2682 = vadd.s32 %v2665, 3
        %v2683 = vand.u32 %v2682, 3
        %vm2684 = vcmp.lt.s32.totalorder %v2683, 2
        %vm2685 = vcmp.eq.s32.totalorder %v2683, 0
        %v2686 = vxor.u32 %v2680, 2147483648
        %v2687 = vsel %vm2685, %v2672, %v2686
        %vm2688 = vcmp.eq.s32.totalorder %v2683, 2
        %v2689 = vxor.u32 %v2672, 2147483648
        %v2690 = vsel %vm2688, %v2689, %v2680
        %v2691 = vsel %vm2684, %v2687, %v2690
        %v2692 = vsel %vm2681, nan, %v2691
        %v2693 = vand.u32 2147483647, %v659
        %vm2694 = vcmp.le.f32.partialorder %v2693, 0.7853982
        %vm2695 = vcmp.lt.s32.totalorder %v659, 0
        %v2696 = vand.u32 %v659, 2139095040
        %v2697 = vshrl.u32 %v2696, 23
        %v2698 = vsub.s32 %v2697, 127
        %v2699 = vand.u32 2147483647, %v659
        %v2700 = vand.u32 %v2699, 8388607
        %v2701 = vor.u32 %v2700, 8388608
        %v2702 = vsub.s32 0, %v2701
        %v2703 = vadd.s32 %v2698, 1
        %vm2704 = vcmp.gt.s32.totalorder %v2703, 0
        %v2705 = vsel %vm2704, %v2703, 0
        %v2706 = vshrl.u32 %v2705, 5
        %v2707 = vand.u32 %v2705, 31
        %v2708 = vsub.s32 32, %v2707
        %v2709 = vshrl.u32 683565275, %v2708
        %v2710 = vshll.u32 683565275, %v2707
        %v2711 = vshrl.u32 2475754826, %v2708
        %v2712 = vor.u32 %v2710, %v2711
        %v2713 = vshll.u32 2475754826, %v2707
        %v2714 = vshrl.u32 2131351028, %v2708
        %v2715 = vor.u32 %v2713, %v2714
        %v2716 = vshll.u32 2131351028, %v2707
        %v2717 = vshrl.u32 2102212464, %v2708
        %v2718 = vor.u32 %v2716, %v2717
        %v2719 = vshll.u32 2102212464, %v2707
        %v2720 = vshrl.u32 920167782, %v2708
        %v2721 = vor.u32 %v2719, %v2720
        %v2722 = vshll.u32 920167782, %v2707
        %v2723 = vshrl.u32 1326507024, %v2708
        %v2724 = vor.u32 %v2722, %v2723
        %vm2725 = vcmp.lt.s32.totalorder %v2706, 1
        %vm2726 = vcmp.lt.s32.totalorder %v2706, 2
        %vm2727 = vcmp.lt.s32.totalorder %v2706, 3
        %vm2728 = vcmp.lt.s32.totalorder %v2706, 4
        %v2729 = vsel %vm2725, %v2709, %v2712
        %v2730 = vsel %vm2728, %v2718, 2102212464
        %v2731 = vsel %vm2727, %v2715, %v2730
        %v2732 = vsel %vm2726, %v2729, %v2731
        %v2733 = vsel %vm2725, %v2712, %v2715
        %v2734 = vsel %vm2728, %v2721, 920167782
        %v2735 = vsel %vm2727, %v2718, %v2734
        %v2736 = vsel %vm2726, %v2733, %v2735
        %v2737 = vsel %vm2725, %v2715, %v2718
        %v2738 = vsel %vm2728, %v2724, 1326507024
        %v2739 = vsel %vm2727, %v2721, %v2738
        %v2740 = vsel %vm2726, %v2737, %v2739
        %v2741 = vshll.u32 %v2701, 8
        %v2742 = vand.u32 %v2741, 65535
        %v2743 = vshrl.u32 %v2741, 16
        %v2744 = vand.u32 %v2740, 65535
        %v2745 = vshrl.u32 %v2740, 16
        %v2746 = vmul.u32 %v2742, %v2744
        %v2747 = vmul.u32 %v2742, %v2745
        %v2748 = vmul.u32 %v2743, %v2744
        %v2749 = vmul.u32 %v2743, %v2745
        %v2750 = vshll.u32 %v2747, 16
        %v2751 = vshrl.u32 %v2747, 16
        %v2752 = vshll.u32 %v2748, 16
        %v2753 = vshrl.u32 %v2748, 16
        %vm2754 = vc.u32 %v2746, %v2750
        %v2755 = vsel %vm2754, 1, 0
        %v2756 = vadd.s32 %v2746, %v2750
        %v2757 = vadd.s32 %v2749, %v2755
        %vm2758 = vc.u32 %v2756, %v2752
        %v2759 = vsel %vm2758, 1, 0
        %v2760 = vadd.s32 %v2756, %v2752
        %v2761 = vadd.s32 %v2757, %v2759
        %v2762 = vadd.s32 %v2761, %v2751
        %v2763 = vadd.s32 %v2762, %v2753
        %v2764 = vand.u32 %v2741, 65535
        %v2765 = vshrl.u32 %v2741, 16
        %v2766 = vand.u32 %v2736, 65535
        %v2767 = vshrl.u32 %v2736, 16
        %v2768 = vmul.u32 %v2764, %v2766
        %v2769 = vmul.u32 %v2764, %v2767
        %v2770 = vmul.u32 %v2765, %v2766
        %v2771 = vmul.u32 %v2765, %v2767
        %v2772 = vshll.u32 %v2769, 16
        %v2773 = vshrl.u32 %v2769, 16
        %v2774 = vshll.u32 %v2770, 16
        %v2775 = vshrl.u32 %v2770, 16
        %vm2776 = vc.u32 %v2768, %v2772
        %v2777 = vsel %vm2776, 1, 0
        %v2778 = vadd.s32 %v2768, %v2772
        %v2779 = vadd.s32 %v2771, %v2777
        %vm2780 = vc.u32 %v2778, %v2774
        %v2781 = vsel %vm2780, 1, 0
        %v2782 = vadd.s32 %v2778, %v2774
        %v2783 = vadd.s32 %v2779, %v2781
        %v2784 = vadd.s32 %v2783, %v2773
        %v2785 = vadd.s32 %v2784, %v2775
        %v2786 = vmul.u32 %v2741, %v2732
        %v2787 = vadd.s32 %v2763, %v2782
        %vm2788 = vc.u32 %v2763, %v2782
        %v2789 = vadd.s32 %v2785, 1
        %v2790 = vsel %vm2788, %v2789, %v2785
        %v2791 = vadd.s32 %v2786, %v2790
        %v2792 = vadd.s32 %v2791, 536870912
        %v2793 = vshrl.u32 %v2792, 30
        %v2794 = vshll.u32 %v2793, 30
        %v2795 = vsub.s32 %v2791, %v2794
        %vm2796 = vcmp.lt.s32.totalorder %v2795, 0
        %v2797 = vsub.s32 0, %v2795
        %v2798 = vsel %vm2796, %v2797, %v2795
        %v2799 = vclz %v2798
        %v2800 = vsub.s32 %v2799, 2
        %vm2801 = vcmp.gt.s32.totalorder 0, %v2800
        %v2802 = vsel %vm2801, 0, %v2800
        %v2803 = vsub.s32 32, %v2802
        %v2804 = vshll.u32 %v2795, %v2802
        %v2805 = vshrl.u32 %v2787, %v2803
        %v2806 = vor.u32 %v2804, %v2805
        %v2807 = vsub.s32 4294967266, %v2802
        %v2808 = vadd.s32 %v2807, 127
        %v2809 = vshll.u32 %v2808, 23
        %v2810 = vor.u32 4788187, %v2809
        %v2811 = vand.u32 2147483647, %v2810
        %v2813 = vcvt.s32.f32 %v2806
        %v2814 = vmul.f32 %v2813, %v2811
        %v2815 = vxor.u32 %v2814, 2147483648
        %v2816 = vsel %vm2695, %v2815, %v2814
        %v2817 = vsub.s32 4, %v2793
        %v2818 = vsel %vm2695, %v2817, %v2793
        %v2819 = vsel %vm2694, %v659, %v2816
        %v2820 = vsel %vm2694, 0, %v2818
        %v2821 = vmul.f32 %v2819, %v2819
        %v2822 = vmul.f32 %v2821, -0.001358992
        %v2823 = vadd.f32 %v2822, 0.041655596
        %v2824 = vmul.f32 %v2821, %v2823
        %v2825 = vadd.f32 %v2824, -0.4999988
        %v2826 = vmul.f32 %v2821, %v2825
        %v2827 = vadd.f32 1.0, %v2826
        %v2828 = vmul.f32 %v2819, %v2819
        %v2829 = vmul.f32 %v2828, -0.00019511016
        %v2830 = vadd.f32 %v2829, 0.008332121
        %v2831 = vmul.f32 %v2828, %v2830
        %v2832 = vadd.f32 %v2831, -0.16666654
        %v2833 = vmul.f32 %v2828, %v2832
        %v2834 = vadd.f32 %v2833, 1.0
        %v2835 = vmul.f32 %v2834, %v2819
        %vm2836 = vweird.f32 %v659
        %v2837 = vadd.s32 %v2820, 3
        %v2838 = vand.u32 %v2837, 3
        %vm2839 = vcmp.lt.s32.totalorder %v2838, 2
        %vm2840 = vcmp.eq.s32.totalorder %v2838, 0
        %v2841 = vxor.u32 %v2835, 2147483648
        %v2842 = vsel %vm2840, %v2827, %v2841
        %vm2843 = vcmp.eq.s32.totalorder %v2838, 2
        %v2844 = vxor.u32 %v2827, 2147483648
        %v2845 = vsel %vm2843, %v2844, %v2835
        %v2846 = vsel %vm2839, %v2842, %v2845
        %v2847 = vsel %vm2836, nan, %v2846
        %v2848 = vand.u32 2147483647, %v660
        %vm2849 = vcmp.le.f32.partialorder %v2848, 0.7853982
        %vm2850 = vcmp.lt.s32.totalorder %v660, 0
        %v2851 = vand.u32 %v660, 2139095040
        %v2852 = vshrl.u32 %v2851, 23
        %v2853 = vsub.s32 %v2852, 127
        %v2854 = vand.u32 2147483647, %v660
        %v2855 = vand.u32 %v2854, 8388607
        %v2856 = vor.u32 %v2855, 8388608
        %v2857 = vsub.s32 0, %v2856
        %v2858 = vadd.s32 %v2853, 1
        %vm2859 = vcmp.gt.s32.totalorder %v2858, 0
        %v2860 = vsel %vm2859, %v2858, 0
        %v2861 = vshrl.u32 %v2860, 5
        %v2862 = vand.u32 %v2860, 31
        %v2863 = vsub.s32 32, %v2862
        %v2864 = vshrl.u32 683565275, %v2863
        %v2865 = vshll.u32 683565275, %v2862
        %v2866 = vshrl.u32 2475754826, %v2863
        %v2867 = vor.u32 %v2865, %v2866
        %v2868 = vshll.u32 2475754826, %v2862
        %v2869 = vshrl.u32 2131351028, %v2863
        %v2870 = vor.u32 %v2868, %v2869
        %v2871 = vshll.u32 2131351028, %v2862
        %v2872 = vshrl.u32 2102212464, %v2863
        %v2873 = vor.u32 %v2871, %v2872
        %v2874 = vshll.u32 2102212464, %v2862
        %v2875 = vshrl.u32 920167782, %v2863
        %v2876 = vor.u32 %v2874, %v2875
        %v2877 = vshll.u32 920167782, %v2862
        %v2878 = vshrl.u32 1326507024, %v2863
        %v2879 = vor.u32 %v2877, %v2878
        %vm2880 = vcmp.lt.s32.totalorder %v2861, 1
        %vm2881 = vcmp.lt.s32.totalorder %v2861, 2
        %vm2882 = vcmp.lt.s32.totalorder %v2861, 3
        %vm2883 = vcmp.lt.s32.totalorder %v2861, 4
        %v2884 = vsel %vm2880, %v2864, %v2867
        %v2885 = vsel %vm2883, %v2873, 2102212464
        %v2886 = vsel %vm2882, %v2870, %v2885
        %v2887 = vsel %vm2881, %v2884, %v2886
        %v2888 = vsel %vm2880, %v2867, %v2870
        %v2889 = vsel %vm2883, %v2876, 920167782
        %v2890 = vsel %vm2882, %v2873, %v2889
        %v2891 = vsel %vm2881, %v2888, %v2890
        %v2892 = vsel %vm2880, %v2870, %v2873
        %v2893 = vsel %vm2883, %v2879, 1326507024
        %v2894 = vsel %vm2882, %v2876, %v2893
        %v2895 = vsel %vm2881, %v2892, %v2894
        %v2896 = vshll.u32 %v2856, 8
        %v2897 = vand.u32 %v2896, 65535
        %v2898 = vshrl.u32 %v2896, 16
        %v2899 = vand.u32 %v2895, 65535
        %v2900 = vshrl.u32 %v2895, 16
        %v2901 = vmul.u32 %v2897, %v2899
        %v2902 = vmul.u32 %v2897, %v2900
        %v2903 = vmul.u32 %v2898, %v2899
        %v2904 = vmul.u32 %v2898, %v2900
        %v2905 = vshll.u32 %v2902, 16
        %v2906 = vshrl.u32 %v2902, 16
        %v2907 = vshll.u32 %v2903, 16
        %v2908 = vshrl.u32 %v2903, 16
        %vm2909 = vc.u32 %v2901, %v2905
        %v2910 = vsel %vm2909, 1, 0
        %v2911 = vadd.s32 %v2901, %v2905
        %v2912 = vadd.s32 %v2904, %v2910
        %vm2913 = vc.u32 %v2911, %v2907
        %v2914 = vsel %vm2913, 1, 0
        %v2915 = vadd.s32 %v2911, %v2907
        %v2916 = vadd.s32 %v2912, %v2914
        %v2917 = vadd.s32 %v2916, %v2906
        %v2918 = vadd.s32 %v2917, %v2908
        %v2919 = vand.u32 %v2896, 65535
        %v2920 = vshrl.u32 %v2896, 16
        %v2921 = vand.u32 %v2891, 65535
        %v2922 = vshrl.u32 %v2891, 16
        %v2923 = vmul.u32 %v2919, %v2921
        %v2924 = vmul.u32 %v2919, %v2922
        %v2925 = vmul.u32 %v2920, %v2921
        %v2926 = vmul.u32 %v2920, %v2922
        %v2927 = vshll.u32 %v2924, 16
        %v2928 = vshrl.u32 %v2924, 16
        %v2929 = vshll.u32 %v2925, 16
        %v2930 = vshrl.u32 %v2925, 16
        %vm2931 = vc.u32 %v2923, %v2927
        %v2932 = vsel %vm2931, 1, 0
        %v2933 = vadd.s32 %v2923, %v2927
        %v2934 = vadd.s32 %v2926, %v2932
        %vm2935 = vc.u32 %v2933, %v2929
        %v2936 = vsel %vm2935, 1, 0
        %v2937 = vadd.s32 %v2933, %v2929
        %v2938 = vadd.s32 %v2934, %v2936
        %v2939 = vadd.s32 %v2938, %v2928
        %v2940 = vadd.s32 %v2939, %v2930
        %v2941 = vmul.u32 %v2896, %v2887
        %v2942 = vadd.s32 %v2918, %v2937
        %vm2943 = vc.u32 %v2918, %v2937
        %v2944 = vadd.s32 %v2940, 1
        %v2945 = vsel %vm2943, %v2944, %v2940
        %v2946 = vadd.s32 %v2941, %v2945
        %v2947 = vadd.s32 %v2946, 536870912
        %v2948 = vshrl.u32 %v2947, 30
        %v2949 = vshll.u32 %v2948, 30
        %v2950 = vsub.s32 %v2946, %v2949
        %vm2951 = vcmp.lt.s32.totalorder %v2950, 0
        %v2952 = vsub.s32 0, %v2950
        %v2953 = vsel %vm2951, %v2952, %v2950
        %v2954 = vclz %v2953
        %v2955 = vsub.s32 %v2954, 2
        %vm2956 = vcmp.gt.s32.totalorder 0, %v2955
        %v2957 = vsel %vm2956, 0, %v2955
        %v2958 = vsub.s32 32, %v2957
        %v2959 = vshll.u32 %v2950, %v2957
        %v2960 = vshrl.u32 %v2942, %v2958
        %v2961 = vor.u32 %v2959, %v2960
        %v2962 = vsub.s32 4294967266, %v2957
        %v2963 = vadd.s32 %v2962, 127
        %v2964 = vshll.u32 %v2963, 23
        %v2965 = vor.u32 4788187, %v2964
        %v2966 = vand.u32 2147483647, %v2965
        %v2968 = vcvt.s32.f32 %v2961
        %v2969 = vmul.f32 %v2968, %v2966
        %v2970 = vxor.u32 %v2969, 2147483648
        %v2971 = vsel %vm2850, %v2970, %v2969
        %v2972 = vsub.s32 4, %v2948
        %v2973 = vsel %vm2850, %v2972, %v2948
        %v2974 = vsel %vm2849, %v660, %v2971
        %v2975 = vsel %vm2849, 0, %v2973
        %v2976 = vmul.f32 %v2974, %v2974
        %v2977 = vmul.f32 %v2976, -0.001358992
        %v2978 = vadd.f32 %v2977, 0.041655596
        %v2979 = vmul.f32 %v2976, %v2978
        %v2980 = vadd.f32 %v2979, -0.4999988
        %v2981 = vmul.f32 %v2976, %v2980
        %v2982 = vadd.f32 1.0, %v2981
        %v2983 = vmul.f32 %v2974, %v2974
        %v2984 = vmul.f32 %v2983, -0.00019511016
        %v2985 = vadd.f32 %v2984, 0.008332121
        %v2986 = vmul.f32 %v2983, %v2985
        %v2987 = vadd.f32 %v2986, -0.16666654
        %v2988 = vmul.f32 %v2983, %v2987
        %v2989 = vadd.f32 %v2988, 1.0
        %v2990 = vmul.f32 %v2989, %v2974
        %vm2991 = vweird.f32 %v660
        %v2992 = vadd.s32 %v2975, 3
        %v2993 = vand.u32 %v2992, 3
        %vm2994 = vcmp.lt.s32.totalorder %v2993, 2
        %vm2995 = vcmp.eq.s32.totalorder %v2993, 0
        %v2996 = vxor.u32 %v2990, 2147483648
        %v2997 = vsel %vm2995, %v2982, %v2996
        %vm2998 = vcmp.eq.s32.totalorder %v2993, 2
        %v2999 = vxor.u32 %v2982, 2147483648
        %v3000 = vsel %vm2998, %v2999, %v2990
        %v3001 = vsel %vm2994, %v2997, %v3000
        %v3002 = vsel %vm2991, nan, %v3001
        %v3003 = vand.u32 2147483647, %v661
        %vm3004 = vcmp.le.f32.partialorder %v3003, 0.7853982
        %vm3005 = vcmp.lt.s32.totalorder %v661, 0
        %v3006 = vand.u32 %v661, 2139095040
        %v3007 = vshrl.u32 %v3006, 23
        %v3008 = vsub.s32 %v3007, 127
        %v3009 = vand.u32 2147483647, %v661
        %v3010 = vand.u32 %v3009, 8388607
        %v3011 = vor.u32 %v3010, 8388608
        %v3012 = vsub.s32 0, %v3011
        %v3013 = vadd.s32 %v3008, 1
        %vm3014 = vcmp.gt.s32.totalorder %v3013, 0
        %v3015 = vsel %vm3014, %v3013, 0
        %v3016 = vshrl.u32 %v3015, 5
        %v3017 = vand.u32 %v3015, 31
        %v3018 = vsub.s32 32, %v3017
        %v3019 = vshrl.u32 683565275, %v3018
        %v3020 = vshll.u32 683565275, %v3017
        %v3021 = vshrl.u32 2475754826, %v3018
        %v3022 = vor.u32 %v3020, %v3021
        %v3023 = vshll.u32 2475754826, %v3017
        %v3024 = vshrl.u32 2131351028, %v3018
        %v3025 = vor.u32 %v3023, %v3024
        %v3026 = vshll.u32 2131351028, %v3017
        %v3027 = vshrl.u32 2102212464, %v3018
        %v3028 = vor.u32 %v3026, %v3027
        %v3029 = vshll.u32 2102212464, %v3017
        %v3030 = vshrl.u32 920167782, %v3018
        %v3031 = vor.u32 %v3029, %v3030
        %v3032 = vshll.u32 920167782, %v3017
        %v3033 = vshrl.u32 1326507024, %v3018
        %v3034 = vor.u32 %v3032, %v3033
        %vm3035 = vcmp.lt.s32.totalorder %v3016, 1
        %vm3036 = vcmp.lt.s32.totalorder %v3016, 2
        %vm3037 = vcmp.lt.s32.totalorder %v3016, 3
        %vm3038 = vcmp.lt.s32.totalorder %v3016, 4
        %v3039 = vsel %vm3035, %v3019, %v3022
        %v3040 = vsel %vm3038, %v3028, 2102212464
        %v3041 = vsel %vm3037, %v3025, %v3040
        %v3042 = vsel %vm3036, %v3039, %v3041
        %v3043 = vsel %vm3035, %v3022, %v3025
        %v3044 = vsel %vm3038, %v3031, 920167782
        %v3045 = vsel %vm3037, %v3028, %v3044
        %v3046 = vsel %vm3036, %v3043, %v3045
        %v3047 = vsel %vm3035, %v3025, %v3028
        %v3048 = vsel %vm3038, %v3034, 1326507024
        %v3049 = vsel %vm3037, %v3031, %v3048
        %v3050 = vsel %vm3036, %v3047, %v3049
        %v3051 = vshll.u32 %v3011, 8
        %v3052 = vand.u32 %v3051, 65535
        %v3053 = vshrl.u32 %v3051, 16
        %v3054 = vand.u32 %v3050, 65535
        %v3055 = vshrl.u32 %v3050, 16
        %v3056 = vmul.u32 %v3052, %v3054
        %v3057 = vmul.u32 %v3052, %v3055
        %v3058 = vmul.u32 %v3053, %v3054
        %v3059 = vmul.u32 %v3053, %v3055
        %v3060 = vshll.u32 %v3057, 16
        %v3061 = vshrl.u32 %v3057, 16
        %v3062 = vshll.u32 %v3058, 16
        %v3063 = vshrl.u32 %v3058, 16
        %vm3064 = vc.u32 %v3056, %v3060
        %v3065 = vsel %vm3064, 1, 0
        %v3066 = vadd.s32 %v3056, %v3060
        %v3067 = vadd.s32 %v3059, %v3065
        %vm3068 = vc.u32 %v3066, %v3062
        %v3069 = vsel %vm3068, 1, 0
        %v3070 = vadd.s32 %v3066, %v3062
        %v3071 = vadd.s32 %v3067, %v3069
        %v3072 = vadd.s32 %v3071, %v3061
        %v3073 = vadd.s32 %v3072, %v3063
        %v3074 = vand.u32 %v3051, 65535
        %v3075 = vshrl.u32 %v3051, 16
        %v3076 = vand.u32 %v3046, 65535
        %v3077 = vshrl.u32 %v3046, 16
        %v3078 = vmul.u32 %v3074, %v3076
        %v3079 = vmul.u32 %v3074, %v3077
        %v3080 = vmul.u32 %v3075, %v3076
        %v3081 = vmul.u32 %v3075, %v3077
        %v3082 = vshll.u32 %v3079, 16
        %v3083 = vshrl.u32 %v3079, 16
        %v3084 = vshll.u32 %v3080, 16
        %v3085 = vshrl.u32 %v3080, 16
        %vm3086 = vc.u32 %v3078, %v3082
        %v3087 = vsel %vm3086, 1, 0
        %v3088 = vadd.s32 %v3078, %v3082
        %v3089 = vadd.s32 %v3081, %v3087
        %vm3090 = vc.u32 %v3088, %v3084
        %v3091 = vsel %vm3090, 1, 0
        %v3092 = vadd.s32 %v3088, %v3084
        %v3093 = vadd.s32 %v3089, %v3091
        %v3094 = vadd.s32 %v3093, %v3083
        %v3095 = vadd.s32 %v3094, %v3085
        %v3096 = vmul.u32 %v3051, %v3042
        %v3097 = vadd.s32 %v3073, %v3092
        %vm3098 = vc.u32 %v3073, %v3092
        %v3099 = vadd.s32 %v3095, 1
        %v3100 = vsel %vm3098, %v3099, %v3095
        %v3101 = vadd.s32 %v3096, %v3100
        %v3102 = vadd.s32 %v3101, 536870912
        %v3103 = vshrl.u32 %v3102, 30
        %v3104 = vshll.u32 %v3103, 30
        %v3105 = vsub.s32 %v3101, %v3104
        %vm3106 = vcmp.lt.s32.totalorder %v3105, 0
        %v3107 = vsub.s32 0, %v3105
        %v3108 = vsel %vm3106, %v3107, %v3105
        %v3109 = vclz %v3108
        %v3110 = vsub.s32 %v3109, 2
        %vm3111 = vcmp.gt.s32.totalorder 0, %v3110
        %v3112 = vsel %vm3111, 0, %v3110
        %v3113 = vsub.s32 32, %v3112
        %v3114 = vshll.u32 %v3105, %v3112
        %v3115 = vshrl.u32 %v3097, %v3113
        %v3116 = vor.u32 %v3114, %v3115
        %v3117 = vsub.s32 4294967266, %v3112
        %v3118 = vadd.s32 %v3117, 127
        %v3119 = vshll.u32 %v3118, 23
        %v3120 = vor.u32 4788187, %v3119
        %v3121 = vand.u32 2147483647, %v3120
        %v3123 = vcvt.s32.f32 %v3116
        %v3124 = vmul.f32 %v3123, %v3121
        %v3125 = vxor.u32 %v3124, 2147483648
        %v3126 = vsel %vm3005, %v3125, %v3124
        %v3127 = vsub.s32 4, %v3103
        %v3128 = vsel %vm3005, %v3127, %v3103
        %v3129 = vsel %vm3004, %v661, %v3126
        %v3130 = vsel %vm3004, 0, %v3128
        %v3131 = vmul.f32 %v3129, %v3129
        %v3132 = vmul.f32 %v3131, -0.001358992
        %v3133 = vadd.f32 %v3132, 0.041655596
        %v3134 = vmul.f32 %v3131, %v3133
        %v3135 = vadd.f32 %v3134, -0.4999988
        %v3136 = vmul.f32 %v3131, %v3135
        %v3137 = vadd.f32 1.0, %v3136
        %v3138 = vmul.f32 %v3129, %v3129
        %v3139 = vmul.f32 %v3138, -0.00019511016
        %v3140 = vadd.f32 %v3139, 0.008332121
        %v3141 = vmul.f32 %v3138, %v3140
        %v3142 = vadd.f32 %v3141, -0.16666654
        %v3143 = vmul.f32 %v3138, %v3142
        %v3144 = vadd.f32 %v3143, 1.0
        %v3145 = vmul.f32 %v3144, %v3129
        %vm3146 = vweird.f32 %v661
        %v3147 = vadd.s32 %v3130, 3
        %v3148 = vand.u32 %v3147, 3
        %vm3149 = vcmp.lt.s32.totalorder %v3148, 2
        %vm3150 = vcmp.eq.s32.totalorder %v3148, 0
        %v3151 = vxor.u32 %v3145, 2147483648
        %v3152 = vsel %vm3150, %v3137, %v3151
        %vm3153 = vcmp.eq.s32.totalorder %v3148, 2
        %v3154 = vxor.u32 %v3137, 2147483648
        %v3155 = vsel %vm3153, %v3154, %v3145
        %v3156 = vsel %vm3149, %v3152, %v3155
        %v3157 = vsel %vm3146, nan, %v3156
        %v3158 = vand.u32 2147483647, %v662
        %vm3159 = vcmp.le.f32.partialorder %v3158, 0.7853982
        %vm3160 = vcmp.lt.s32.totalorder %v662, 0
        %v3161 = vand.u32 %v662, 2139095040
        %v3162 = vshrl.u32 %v3161, 23
        %v3163 = vsub.s32 %v3162, 127
        %v3164 = vand.u32 2147483647, %v662
        %v3165 = vand.u32 %v3164, 8388607
        %v3166 = vor.u32 %v3165, 8388608
        %v3167 = vsub.s32 0, %v3166
        %v3168 = vadd.s32 %v3163, 1
        %vm3169 = vcmp.gt.s32.totalorder %v3168, 0
        %v3170 = vsel %vm3169, %v3168, 0
        %v3171 = vshrl.u32 %v3170, 5
        %v3172 = vand.u32 %v3170, 31
        %v3173 = vsub.s32 32, %v3172
        %v3174 = vshrl.u32 683565275, %v3173
        %v3175 = vshll.u32 683565275, %v3172
        %v3176 = vshrl.u32 2475754826, %v3173
        %v3177 = vor.u32 %v3175, %v3176
        %v3178 = vshll.u32 2475754826, %v3172
        %v3179 = vshrl.u32 2131351028, %v3173
        %v3180 = vor.u32 %v3178, %v3179
        %v3181 = vshll.u32 2131351028, %v3172
        %v3182 = vshrl.u32 2102212464, %v3173
        %v3183 = vor.u32 %v3181, %v3182
        %v3184 = vshll.u32 2102212464, %v3172
        %v3185 = vshrl.u32 920167782, %v3173
        %v3186 = vor.u32 %v3184, %v3185
        %v3187 = vshll.u32 920167782, %v3172
        %v3188 = vshrl.u32 1326507024, %v3173
        %v3189 = vor.u32 %v3187, %v3188
        %vm3190 = vcmp.lt.s32.totalorder %v3171, 1
        %vm3191 = vcmp.lt.s32.totalorder %v3171, 2
        %vm3192 = vcmp.lt.s32.totalorder %v3171, 3
        %vm3193 = vcmp.lt.s32.totalorder %v3171, 4
        %v3194 = vsel %vm3190, %v3174, %v3177
        %v3195 = vsel %vm3193, %v3183, 2102212464
        %v3196 = vsel %vm3192, %v3180, %v3195
        %v3197 = vsel %vm3191, %v3194, %v3196
        %v3198 = vsel %vm3190, %v3177, %v3180
        %v3199 = vsel %vm3193, %v3186, 920167782
        %v3200 = vsel %vm3192, %v3183, %v3199
        %v3201 = vsel %vm3191, %v3198, %v3200
        %v3202 = vsel %vm3190, %v3180, %v3183
        %v3203 = vsel %vm3193, %v3189, 1326507024
        %v3204 = vsel %vm3192, %v3186, %v3203
        %v3205 = vsel %vm3191, %v3202, %v3204
        %v3206 = vshll.u32 %v3166, 8
        %v3207 = vand.u32 %v3206, 65535
        %v3208 = vshrl.u32 %v3206, 16
        %v3209 = vand.u32 %v3205, 65535
        %v3210 = vshrl.u32 %v3205, 16
        %v3211 = vmul.u32 %v3207, %v3209
        %v3212 = vmul.u32 %v3207, %v3210
        %v3213 = vmul.u32 %v3208, %v3209
        %v3214 = vmul.u32 %v3208, %v3210
        %v3215 = vshll.u32 %v3212, 16
        %v3216 = vshrl.u32 %v3212, 16
        %v3217 = vshll.u32 %v3213, 16
        %v3218 = vshrl.u32 %v3213, 16
        %vm3219 = vc.u32 %v3211, %v3215
        %v3220 = vsel %vm3219, 1, 0
        %v3221 = vadd.s32 %v3211, %v3215
        %v3222 = vadd.s32 %v3214, %v3220
        %vm3223 = vc.u32 %v3221, %v3217
        %v3224 = vsel %vm3223, 1, 0
        %v3225 = vadd.s32 %v3221, %v3217
        %v3226 = vadd.s32 %v3222, %v3224
        %v3227 = vadd.s32 %v3226, %v3216
        %v3228 = vadd.s32 %v3227, %v3218
        %v3229 = vand.u32 %v3206, 65535
        %v3230 = vshrl.u32 %v3206, 16
        %v3231 = vand.u32 %v3201, 65535
        %v3232 = vshrl.u32 %v3201, 16
        %v3233 = vmul.u32 %v3229, %v3231
        %v3234 = vmul.u32 %v3229, %v3232
        %v3235 = vmul.u32 %v3230, %v3231
        %v3236 = vmul.u32 %v3230, %v3232
        %v3237 = vshll.u32 %v3234, 16
        %v3238 = vshrl.u32 %v3234, 16
        %v3239 = vshll.u32 %v3235, 16
        %v3240 = vshrl.u32 %v3235, 16
        %vm3241 = vc.u32 %v3233, %v3237
        %v3242 = vsel %vm3241, 1, 0
        %v3243 = vadd.s32 %v3233, %v3237
        %v3244 = vadd.s32 %v3236, %v3242
        %vm3245 = vc.u32 %v3243, %v3239
        %v3246 = vsel %vm3245, 1, 0
        %v3247 = vadd.s32 %v3243, %v3239
        %v3248 = vadd.s32 %v3244, %v3246
        %v3249 = vadd.s32 %v3248, %v3238
        %v3250 = vadd.s32 %v3249, %v3240
        %v3251 = vmul.u32 %v3206, %v3197
        %v3252 = vadd.s32 %v3228, %v3247
        %vm3253 = vc.u32 %v3228, %v3247
        %v3254 = vadd.s32 %v3250, 1
        %v3255 = vsel %vm3253, %v3254, %v3250
        %v3256 = vadd.s32 %v3251, %v3255
        %v3257 = vadd.s32 %v3256, 536870912
        %v3258 = vshrl.u32 %v3257, 30
        %v3259 = vshll.u32 %v3258, 30
        %v3260 = vsub.s32 %v3256, %v3259
        %vm3261 = vcmp.lt.s32.totalorder %v3260, 0
        %v3262 = vsub.s32 0, %v3260
        %v3263 = vsel %vm3261, %v3262, %v3260
        %v3264 = vclz %v3263
        %v3265 = vsub.s32 %v3264, 2
        %vm3266 = vcmp.gt.s32.totalorder 0, %v3265
        %v3267 = vsel %vm3266, 0, %v3265
        %v3268 = vsub.s32 32, %v3267
        %v3269 = vshll.u32 %v3260, %v3267
        %v3270 = vshrl.u32 %v3252, %v3268
        %v3271 = vor.u32 %v3269, %v3270
        %v3272 = vsub.s32 4294967266, %v3267
        %v3273 = vadd.s32 %v3272, 127
        %v3274 = vshll.u32 %v3273, 23
        %v3275 = vor.u32 4788187, %v3274
        %v3276 = vand.u32 2147483647, %v3275
        %v3278 = vcvt.s32.f32 %v3271
        %v3279 = vmul.f32 %v3278, %v3276
        %v3280 = vxor.u32 %v3279, 2147483648
        %v3281 = vsel %vm3160, %v3280, %v3279
        %v3282 = vsub.s32 4, %v3258
        %v3283 = vsel %vm3160, %v3282, %v3258
        %v3284 = vsel %vm3159, %v662, %v3281
        %v3285 = vsel %vm3159, 0, %v3283
        %v3286 = vmul.f32 %v3284, %v3284
        %v3287 = vmul.f32 %v3286, -0.001358992
        %v3288 = vadd.f32 %v3287, 0.041655596
        %v3289 = vmul.f32 %v3286, %v3288
        %v3290 = vadd.f32 %v3289, -0.4999988
        %v3291 = vmul.f32 %v3286, %v3290
        %v3292 = vadd.f32 1.0, %v3291
        %v3293 = vmul.f32 %v3284, %v3284
        %v3294 = vmul.f32 %v3293, -0.00019511016
        %v3295 = vadd.f32 %v3294, 0.008332121
        %v3296 = vmul.f32 %v3293, %v3295
        %v3297 = vadd.f32 %v3296, -0.16666654
        %v3298 = vmul.f32 %v3293, %v3297
        %v3299 = vadd.f32 %v3298, 1.0
        %v3300 = vmul.f32 %v3299, %v3284
        %vm3301 = vweird.f32 %v662
        %v3302 = vadd.s32 %v3285, 3
        %v3303 = vand.u32 %v3302, 3
        %vm3304 = vcmp.lt.s32.totalorder %v3303, 2
        %vm3305 = vcmp.eq.s32.totalorder %v3303, 0
        %v3306 = vxor.u32 %v3300, 2147483648
        %v3307 = vsel %vm3305, %v3292, %v3306
        %vm3308 = vcmp.eq.s32.totalorder %v3303, 2
        %v3309 = vxor.u32 %v3292, 2147483648
        %v3310 = vsel %vm3308, %v3309, %v3300
        %v3311 = vsel %vm3304, %v3307, %v3310
        %v3312 = vsel %vm3301, nan, %v3311
        %v3313 = vand.u32 2147483647, %v663
        %vm3314 = vcmp.le.f32.partialorder %v3313, 0.7853982
        %vm3315 = vcmp.lt.s32.totalorder %v663, 0
        %v3316 = vand.u32 %v663, 2139095040
        %v3317 = vshrl.u32 %v3316, 23
        %v3318 = vsub.s32 %v3317, 127
        %v3319 = vand.u32 2147483647, %v663
        %v3320 = vand.u32 %v3319, 8388607
        %v3321 = vor.u32 %v3320, 8388608
        %v3322 = vsub.s32 0, %v3321
        %v3323 = vadd.s32 %v3318, 1
        %vm3324 = vcmp.gt.s32.totalorder %v3323, 0
        %v3325 = vsel %vm3324, %v3323, 0
        %v3326 = vshrl.u32 %v3325, 5
        %v3327 = vand.u32 %v3325, 31
        %v3328 = vsub.s32 32, %v3327
        %v3329 = vshrl.u32 683565275, %v3328
        %v3330 = vshll.u32 683565275, %v3327
        %v3331 = vshrl.u32 2475754826, %v3328
        %v3332 = vor.u32 %v3330, %v3331
        %v3333 = vshll.u32 2475754826, %v3327
        %v3334 = vshrl.u32 2131351028, %v3328
        %v3335 = vor.u32 %v3333, %v3334
        %v3336 = vshll.u32 2131351028, %v3327
        %v3337 = vshrl.u32 2102212464, %v3328
        %v3338 = vor.u32 %v3336, %v3337
        %v3339 = vshll.u32 2102212464, %v3327
        %v3340 = vshrl.u32 920167782, %v3328
        %v3341 = vor.u32 %v3339, %v3340
        %v3342 = vshll.u32 920167782, %v3327
        %v3343 = vshrl.u32 1326507024, %v3328
        %v3344 = vor.u32 %v3342, %v3343
        %vm3345 = vcmp.lt.s32.totalorder %v3326, 1
        %vm3346 = vcmp.lt.s32.totalorder %v3326, 2
        %vm3347 = vcmp.lt.s32.totalorder %v3326, 3
        %vm3348 = vcmp.lt.s32.totalorder %v3326, 4
        %v3349 = vsel %vm3345, %v3329, %v3332
        %v3350 = vsel %vm3348, %v3338, 2102212464
        %v3351 = vsel %vm3347, %v3335, %v3350
        %v3352 = vsel %vm3346, %v3349, %v3351
        %v3353 = vsel %vm3345, %v3332, %v3335
        %v3354 = vsel %vm3348, %v3341, 920167782
        %v3355 = vsel %vm3347, %v3338, %v3354
        %v3356 = vsel %vm3346, %v3353, %v3355
        %v3357 = vsel %vm3345, %v3335, %v3338
        %v3358 = vsel %vm3348, %v3344, 1326507024
        %v3359 = vsel %vm3347, %v3341, %v3358
        %v3360 = vsel %vm3346, %v3357, %v3359
        %v3361 = vshll.u32 %v3321, 8
        %v3362 = vand.u32 %v3361, 65535
        %v3363 = vshrl.u32 %v3361, 16
        %v3364 = vand.u32 %v3360, 65535
        %v3365 = vshrl.u32 %v3360, 16
        %v3366 = vmul.u32 %v3362, %v3364
        %v3367 = vmul.u32 %v3362, %v3365
        %v3368 = vmul.u32 %v3363, %v3364
        %v3369 = vmul.u32 %v3363, %v3365
        %v3370 = vshll.u32 %v3367, 16
        %v3371 = vshrl.u32 %v3367, 16
        %v3372 = vshll.u32 %v3368, 16
        %v3373 = vshrl.u32 %v3368, 16
        %vm3374 = vc.u32 %v3366, %v3370
        %v3375 = vsel %vm3374, 1, 0
        %v3376 = vadd.s32 %v3366, %v3370
        %v3377 = vadd.s32 %v3369, %v3375
        %vm3378 = vc.u32 %v3376, %v3372
        %v3379 = vsel %vm3378, 1, 0
        %v3380 = vadd.s32 %v3376, %v3372
        %v3381 = vadd.s32 %v3377, %v3379
        %v3382 = vadd.s32 %v3381, %v3371
        %v3383 = vadd.s32 %v3382, %v3373
        %v3384 = vand.u32 %v3361, 65535
        %v3385 = vshrl.u32 %v3361, 16
        %v3386 = vand.u32 %v3356, 65535
        %v3387 = vshrl.u32 %v3356, 16
        %v3388 = vmul.u32 %v3384, %v3386
        %v3389 = vmul.u32 %v3384, %v3387
        %v3390 = vmul.u32 %v3385, %v3386
        %v3391 = vmul.u32 %v3385, %v3387
        %v3392 = vshll.u32 %v3389, 16
        %v3393 = vshrl.u32 %v3389, 16
        %v3394 = vshll.u32 %v3390, 16
        %v3395 = vshrl.u32 %v3390, 16
        %vm3396 = vc.u32 %v3388, %v3392
        %v3397 = vsel %vm3396, 1, 0
        %v3398 = vadd.s32 %v3388, %v3392
        %v3399 = vadd.s32 %v3391, %v3397
        %vm3400 = vc.u32 %v3398, %v3394
        %v3401 = vsel %vm3400, 1, 0
        %v3402 = vadd.s32 %v3398, %v3394
        %v3403 = vadd.s32 %v3399, %v3401
        %v3404 = vadd.s32 %v3403, %v3393
        %v3405 = vadd.s32 %v3404, %v3395
        %v3406 = vmul.u32 %v3361, %v3352
        %v3407 = vadd.s32 %v3383, %v3402
        %vm3408 = vc.u32 %v3383, %v3402
        %v3409 = vadd.s32 %v3405, 1
        %v3410 = vsel %vm3408, %v3409, %v3405
        %v3411 = vadd.s32 %v3406, %v3410
        %v3412 = vadd.s32 %v3411, 536870912
        %v3413 = vshrl.u32 %v3412, 30
        %v3414 = vshll.u32 %v3413, 30
        %v3415 = vsub.s32 %v3411, %v3414
        %vm3416 = vcmp.lt.s32.totalorder %v3415, 0
        %v3417 = vsub.s32 0, %v3415
        %v3418 = vsel %vm3416, %v3417, %v3415
        %v3419 = vclz %v3418
        %v3420 = vsub.s32 %v3419, 2
        %vm3421 = vcmp.gt.s32.totalorder 0, %v3420
        %v3422 = vsel %vm3421, 0, %v3420
        %v3423 = vsub.s32 32, %v3422
        %v3424 = vshll.u32 %v3415, %v3422
        %v3425 = vshrl.u32 %v3407, %v3423
        %v3426 = vor.u32 %v3424, %v3425
        %v3427 = vsub.s32 4294967266, %v3422
        %v3428 = vadd.s32 %v3427, 127
        %v3429 = vshll.u32 %v3428, 23
        %v3430 = vor.u32 4788187, %v3429
        %v3431 = vand.u32 2147483647, %v3430
        %v3433 = vcvt.s32.f32 %v3426
        %v3434 = vmul.f32 %v3433, %v3431
        %v3435 = vxor.u32 %v3434, 2147483648
        %v3436 = vsel %vm3315, %v3435, %v3434
        %v3437 = vsub.s32 4, %v3413
        %v3438 = vsel %vm3315, %v3437, %v3413
        %v3439 = vsel %vm3314, %v663, %v3436
        %v3440 = vsel %vm3314, 0, %v3438
        %v3441 = vmul.f32 %v3439, %v3439
        %v3442 = vmul.f32 %v3441, -0.001358992
        %v3443 = vadd.f32 %v3442, 0.041655596
        %v3444 = vmul.f32 %v3441, %v3443
        %v3445 = vadd.f32 %v3444, -0.4999988
        %v3446 = vmul.f32 %v3441, %v3445
        %v3447 = vadd.f32 1.0, %v3446
        %v3448 = vmul.f32 %v3439, %v3439
        %v3449 = vmul.f32 %v3448, -0.00019511016
        %v3450 = vadd.f32 %v3449, 0.008332121
        %v3451 = vmul.f32 %v3448, %v3450
        %v3452 = vadd.f32 %v3451, -0.16666654
        %v3453 = vmul.f32 %v3448, %v3452
        %v3454 = vadd.f32 %v3453, 1.0
        %v3455 = vmul.f32 %v3454, %v3439
        %vm3456 = vweird.f32 %v663
        %v3457 = vadd.s32 %v3440, 3
        %v3458 = vand.u32 %v3457, 3
        %vm3459 = vcmp.lt.s32.totalorder %v3458, 2
        %vm3460 = vcmp.eq.s32.totalorder %v3458, 0
        %v3461 = vxor.u32 %v3455, 2147483648
        %v3462 = vsel %vm3460, %v3447, %v3461
        %vm3463 = vcmp.eq.s32.totalorder %v3458, 2
        %v3464 = vxor.u32 %v3447, 2147483648
        %v3465 = vsel %vm3463, %v3464, %v3455
        %v3466 = vsel %vm3459, %v3462, %v3465
        %v3467 = vsel %vm3456, nan, %v3466
        %v3468 = vand.u32 2147483647, %v664
        %vm3469 = vcmp.le.f32.partialorder %v3468, 0.7853982
        %vm3470 = vcmp.lt.s32.totalorder %v664, 0
        %v3471 = vand.u32 %v664, 2139095040
        %v3472 = vshrl.u32 %v3471, 23
        %v3473 = vsub.s32 %v3472, 127
        %v3474 = vand.u32 2147483647, %v664
        %v3475 = vand.u32 %v3474, 8388607
        %v3476 = vor.u32 %v3475, 8388608
        %v3477 = vsub.s32 0, %v3476
        %v3478 = vadd.s32 %v3473, 1
        %vm3479 = vcmp.gt.s32.totalorder %v3478, 0
        %v3480 = vsel %vm3479, %v3478, 0
        %v3481 = vshrl.u32 %v3480, 5
        %v3482 = vand.u32 %v3480, 31
        %v3483 = vsub.s32 32, %v3482
        %v3484 = vshrl.u32 683565275, %v3483
        %v3485 = vshll.u32 683565275, %v3482
        %v3486 = vshrl.u32 2475754826, %v3483
        %v3487 = vor.u32 %v3485, %v3486
        %v3488 = vshll.u32 2475754826, %v3482
        %v3489 = vshrl.u32 2131351028, %v3483
        %v3490 = vor.u32 %v3488, %v3489
        %v3491 = vshll.u32 2131351028, %v3482
        %v3492 = vshrl.u32 2102212464, %v3483
        %v3493 = vor.u32 %v3491, %v3492
        %v3494 = vshll.u32 2102212464, %v3482
        %v3495 = vshrl.u32 920167782, %v3483
        %v3496 = vor.u32 %v3494, %v3495
        %v3497 = vshll.u32 920167782, %v3482
        %v3498 = vshrl.u32 1326507024, %v3483
        %v3499 = vor.u32 %v3497, %v3498
        %vm3500 = vcmp.lt.s32.totalorder %v3481, 1
        %vm3501 = vcmp.lt.s32.totalorder %v3481, 2
        %vm3502 = vcmp.lt.s32.totalorder %v3481, 3
        %vm3503 = vcmp.lt.s32.totalorder %v3481, 4
        %v3504 = vsel %vm3500, %v3484, %v3487
        %v3505 = vsel %vm3503, %v3493, 2102212464
        %v3506 = vsel %vm3502, %v3490, %v3505
        %v3507 = vsel %vm3501, %v3504, %v3506
        %v3508 = vsel %vm3500, %v3487, %v3490
        %v3509 = vsel %vm3503, %v3496, 920167782
        %v3510 = vsel %vm3502, %v3493, %v3509
        %v3511 = vsel %vm3501, %v3508, %v3510
        %v3512 = vsel %vm3500, %v3490, %v3493
        %v3513 = vsel %vm3503, %v3499, 1326507024
        %v3514 = vsel %vm3502, %v3496, %v3513
        %v3515 = vsel %vm3501, %v3512, %v3514
        %v3516 = vshll.u32 %v3476, 8
        %v3517 = vand.u32 %v3516, 65535
        %v3518 = vshrl.u32 %v3516, 16
        %v3519 = vand.u32 %v3515, 65535
        %v3520 = vshrl.u32 %v3515, 16
        %v3521 = vmul.u32 %v3517, %v3519
        %v3522 = vmul.u32 %v3517, %v3520
        %v3523 = vmul.u32 %v3518, %v3519
        %v3524 = vmul.u32 %v3518, %v3520
        %v3525 = vshll.u32 %v3522, 16
        %v3526 = vshrl.u32 %v3522, 16
        %v3527 = vshll.u32 %v3523, 16
        %v3528 = vshrl.u32 %v3523, 16
        %vm3529 = vc.u32 %v3521, %v3525
        %v3530 = vsel %vm3529, 1, 0
        %v3531 = vadd.s32 %v3521, %v3525
        %v3532 = vadd.s32 %v3524, %v3530
        %vm3533 = vc.u32 %v3531, %v3527
        %v3534 = vsel %vm3533, 1, 0
        %v3535 = vadd.s32 %v3531, %v3527
        %v3536 = vadd.s32 %v3532, %v3534
        %v3537 = vadd.s32 %v3536, %v3526
        %v3538 = vadd.s32 %v3537, %v3528
        %v3539 = vand.u32 %v3516, 65535
        %v3540 = vshrl.u32 %v3516, 16
        %v3541 = vand.u32 %v3511, 65535
        %v3542 = vshrl.u32 %v3511, 16
        %v3543 = vmul.u32 %v3539, %v3541
        %v3544 = vmul.u32 %v3539, %v3542
        %v3545 = vmul.u32 %v3540, %v3541
        %v3546 = vmul.u32 %v3540, %v3542
        %v3547 = vshll.u32 %v3544, 16
        %v3548 = vshrl.u32 %v3544, 16
        %v3549 = vshll.u32 %v3545, 16
        %v3550 = vshrl.u32 %v3545, 16
        %vm3551 = vc.u32 %v3543, %v3547
        %v3552 = vsel %vm3551, 1, 0
        %v3553 = vadd.s32 %v3543, %v3547
        %v3554 = vadd.s32 %v3546, %v3552
        %vm3555 = vc.u32 %v3553, %v3549
        %v3556 = vsel %vm3555, 1, 0
        %v3557 = vadd.s32 %v3553, %v3549
        %v3558 = vadd.s32 %v3554, %v3556
        %v3559 = vadd.s32 %v3558, %v3548
        %v3560 = vadd.s32 %v3559, %v3550
        %v3561 = vmul.u32 %v3516, %v3507
        %v3562 = vadd.s32 %v3538, %v3557
        %vm3563 = vc.u32 %v3538, %v3557
        %v3564 = vadd.s32 %v3560, 1
        %v3565 = vsel %vm3563, %v3564, %v3560
        %v3566 = vadd.s32 %v3561, %v3565
        %v3567 = vadd.s32 %v3566, 536870912
        %v3568 = vshrl.u32 %v3567, 30
        %v3569 = vshll.u32 %v3568, 30
        %v3570 = vsub.s32 %v3566, %v3569
        %vm3571 = vcmp.lt.s32.totalorder %v3570, 0
        %v3572 = vsub.s32 0, %v3570
        %v3573 = vsel %vm3571, %v3572, %v3570
        %v3574 = vclz %v3573
        %v3575 = vsub.s32 %v3574, 2
        %vm3576 = vcmp.gt.s32.totalorder 0, %v3575
        %v3577 = vsel %vm3576, 0, %v3575
        %v3578 = vsub.s32 32, %v3577
        %v3579 = vshll.u32 %v3570, %v3577
        %v3580 = vshrl.u32 %v3562, %v3578
        %v3581 = vor.u32 %v3579, %v3580
        %v3582 = vsub.s32 4294967266, %v3577
        %v3583 = vadd.s32 %v3582, 127
        %v3584 = vshll.u32 %v3583, 23
        %v3585 = vor.u32 4788187, %v3584
        %v3586 = vand.u32 2147483647, %v3585
        %v3588 = vcvt.s32.f32 %v3581
        %v3589 = vmul.f32 %v3588, %v3586
        %v3590 = vxor.u32 %v3589, 2147483648
        %v3591 = vsel %vm3470, %v3590, %v3589
        %v3592 = vsub.s32 4, %v3568
        %v3593 = vsel %vm3470, %v3592, %v3568
        %v3594 = vsel %vm3469, %v664, %v3591
        %v3595 = vsel %vm3469, 0, %v3593
        %v3596 = vmul.f32 %v3594, %v3594
        %v3597 = vmul.f32 %v3596, -0.001358992
        %v3598 = vadd.f32 %v3597, 0.041655596
        %v3599 = vmul.f32 %v3596, %v3598
        %v3600 = vadd.f32 %v3599, -0.4999988
        %v3601 = vmul.f32 %v3596, %v3600
        %v3602 = vadd.f32 1.0, %v3601
        %v3603 = vmul.f32 %v3594, %v3594
        %v3604 = vmul.f32 %v3603, -0.00019511016
        %v3605 = vadd.f32 %v3604, 0.008332121
        %v3606 = vmul.f32 %v3603, %v3605
        %v3607 = vadd.f32 %v3606, -0.16666654
        %v3608 = vmul.f32 %v3603, %v3607
        %v3609 = vadd.f32 %v3608, 1.0
        %v3610 = vmul.f32 %v3609, %v3594
        %vm3611 = vweird.f32 %v664
        %v3612 = vadd.s32 %v3595, 3
        %v3613 = vand.u32 %v3612, 3
        %vm3614 = vcmp.lt.s32.totalorder %v3613, 2
        %vm3615 = vcmp.eq.s32.totalorder %v3613, 0
        %v3616 = vxor.u32 %v3610, 2147483648
        %v3617 = vsel %vm3615, %v3602, %v3616
        %vm3618 = vcmp.eq.s32.totalorder %v3613, 2
        %v3619 = vxor.u32 %v3602, 2147483648
        %v3620 = vsel %vm3618, %v3619, %v3610
        %v3621 = vsel %vm3614, %v3617, %v3620
        %v3622 = vsel %vm3611, nan, %v3621
        %v3623 = vand.u32 2147483647, %v665
        %vm3624 = vcmp.le.f32.partialorder %v3623, 0.7853982
        %vm3625 = vcmp.lt.s32.totalorder %v665, 0
        %v3626 = vand.u32 %v665, 2139095040
        %v3627 = vshrl.u32 %v3626, 23
        %v3628 = vsub.s32 %v3627, 127
        %v3629 = vand.u32 2147483647, %v665
        %v3630 = vand.u32 %v3629, 8388607
        %v3631 = vor.u32 %v3630, 8388608
        %v3632 = vsub.s32 0, %v3631
        %v3633 = vadd.s32 %v3628, 1
        %vm3634 = vcmp.gt.s32.totalorder %v3633, 0
        %v3635 = vsel %vm3634, %v3633, 0
        %v3636 = vshrl.u32 %v3635, 5
        %v3637 = vand.u32 %v3635, 31
        %v3638 = vsub.s32 32, %v3637
        %v3639 = vshrl.u32 683565275, %v3638
        %v3640 = vshll.u32 683565275, %v3637
        %v3641 = vshrl.u32 2475754826, %v3638
        %v3642 = vor.u32 %v3640, %v3641
        %v3643 = vshll.u32 2475754826, %v3637
        %v3644 = vshrl.u32 2131351028, %v3638
        %v3645 = vor.u32 %v3643, %v3644
        %v3646 = vshll.u32 2131351028, %v3637
        %v3647 = vshrl.u32 2102212464, %v3638
        %v3648 = vor.u32 %v3646, %v3647
        %v3649 = vshll.u32 2102212464, %v3637
        %v3650 = vshrl.u32 920167782, %v3638
        %v3651 = vor.u32 %v3649, %v3650
        %v3652 = vshll.u32 920167782, %v3637
        %v3653 = vshrl.u32 1326507024, %v3638
        %v3654 = vor.u32 %v3652, %v3653
        %vm3655 = vcmp.lt.s32.totalorder %v3636, 1
        %vm3656 = vcmp.lt.s32.totalorder %v3636, 2
        %vm3657 = vcmp.lt.s32.totalorder %v3636, 3
        %vm3658 = vcmp.lt.s32.totalorder %v3636, 4
        %v3659 = vsel %vm3655, %v3639, %v3642
        %v3660 = vsel %vm3658, %v3648, 2102212464
        %v3661 = vsel %vm3657, %v3645, %v3660
        %v3662 = vsel %vm3656, %v3659, %v3661
        %v3663 = vsel %vm3655, %v3642, %v3645
        %v3664 = vsel %vm3658, %v3651, 920167782
        %v3665 = vsel %vm3657, %v3648, %v3664
        %v3666 = vsel %vm3656, %v3663, %v3665
        %v3667 = vsel %vm3655, %v3645, %v3648
        %v3668 = vsel %vm3658, %v3654, 1326507024
        %v3669 = vsel %vm3657, %v3651, %v3668
        %v3670 = vsel %vm3656, %v3667, %v3669
        %v3671 = vshll.u32 %v3631, 8
        %v3672 = vand.u32 %v3671, 65535
        %v3673 = vshrl.u32 %v3671, 16
        %v3674 = vand.u32 %v3670, 65535
        %v3675 = vshrl.u32 %v3670, 16
        %v3676 = vmul.u32 %v3672, %v3674
        %v3677 = vmul.u32 %v3672, %v3675
        %v3678 = vmul.u32 %v3673, %v3674
        %v3679 = vmul.u32 %v3673, %v3675
        %v3680 = vshll.u32 %v3677, 16
        %v3681 = vshrl.u32 %v3677, 16
        %v3682 = vshll.u32 %v3678, 16
        %v3683 = vshrl.u32 %v3678, 16
        %vm3684 = vc.u32 %v3676, %v3680
        %v3685 = vsel %vm3684, 1, 0
        %v3686 = vadd.s32 %v3676, %v3680
        %v3687 = vadd.s32 %v3679, %v3685
        %vm3688 = vc.u32 %v3686, %v3682
        %v3689 = vsel %vm3688, 1, 0
        %v3690 = vadd.s32 %v3686, %v3682
        %v3691 = vadd.s32 %v3687, %v3689
        %v3692 = vadd.s32 %v3691, %v3681
        %v3693 = vadd.s32 %v3692, %v3683
        %v3694 = vand.u32 %v3671, 65535
        %v3695 = vshrl.u32 %v3671, 16
        %v3696 = vand.u32 %v3666, 65535
        %v3697 = vshrl.u32 %v3666, 16
        %v3698 = vmul.u32 %v3694, %v3696
        %v3699 = vmul.u32 %v3694, %v3697
        %v3700 = vmul.u32 %v3695, %v3696
        %v3701 = vmul.u32 %v3695, %v3697
        %v3702 = vshll.u32 %v3699, 16
        %v3703 = vshrl.u32 %v3699, 16
        %v3704 = vshll.u32 %v3700, 16
        %v3705 = vshrl.u32 %v3700, 16
        %vm3706 = vc.u32 %v3698, %v3702
        %v3707 = vsel %vm3706, 1, 0
        %v3708 = vadd.s32 %v3698, %v3702
        %v3709 = vadd.s32 %v3701, %v3707
        %vm3710 = vc.u32 %v3708, %v3704
        %v3711 = vsel %vm3710, 1, 0
        %v3712 = vadd.s32 %v3708, %v3704
        %v3713 = vadd.s32 %v3709, %v3711
        %v3714 = vadd.s32 %v3713, %v3703
        %v3715 = vadd.s32 %v3714, %v3705
        %v3716 = vmul.u32 %v3671, %v3662
        %v3717 = vadd.s32 %v3693, %v3712
        %vm3718 = vc.u32 %v3693, %v3712
        %v3719 = vadd.s32 %v3715, 1
        %v3720 = vsel %vm3718, %v3719, %v3715
        %v3721 = vadd.s32 %v3716, %v3720
        %v3722 = vadd.s32 %v3721, 536870912
        %v3723 = vshrl.u32 %v3722, 30
        %v3724 = vshll.u32 %v3723, 30
        %v3725 = vsub.s32 %v3721, %v3724
        %vm3726 = vcmp.lt.s32.totalorder %v3725, 0
        %v3727 = vsub.s32 0, %v3725
        %v3728 = vsel %vm3726, %v3727, %v3725
        %v3729 = vclz %v3728
        %v3730 = vsub.s32 %v3729, 2
        %vm3731 = vcmp.gt.s32.totalorder 0, %v3730
        %v3732 = vsel %vm3731, 0, %v3730
        %v3733 = vsub.s32 32, %v3732
        %v3734 = vshll.u32 %v3725, %v3732
        %v3735 = vshrl.u32 %v3717, %v3733
        %v3736 = vor.u32 %v3734, %v3735
        %v3737 = vsub.s32 4294967266, %v3732
        %v3738 = vadd.s32 %v3737, 127
        %v3739 = vshll.u32 %v3738, 23
        %v3740 = vor.u32 4788187, %v3739
        %v3741 = vand.u32 2147483647, %v3740
        %v3743 = vcvt.s32.f32 %v3736
        %v3744 = vmul.f32 %v3743, %v3741
        %v3745 = vxor.u32 %v3744, 2147483648
        %v3746 = vsel %vm3625, %v3745, %v3744
        %v3747 = vsub.s32 4, %v3723
        %v3748 = vsel %vm3625, %v3747, %v3723
        %v3749 = vsel %vm3624, %v665, %v3746
        %v3750 = vsel %vm3624, 0, %v3748
        %v3751 = vmul.f32 %v3749, %v3749
        %v3752 = vmul.f32 %v3751, -0.001358992
        %v3753 = vadd.f32 %v3752, 0.041655596
        %v3754 = vmul.f32 %v3751, %v3753
        %v3755 = vadd.f32 %v3754, -0.4999988
        %v3756 = vmul.f32 %v3751, %v3755
        %v3757 = vadd.f32 1.0, %v3756
        %v3758 = vmul.f32 %v3749, %v3749
        %v3759 = vmul.f32 %v3758, -0.00019511016
        %v3760 = vadd.f32 %v3759, 0.008332121
        %v3761 = vmul.f32 %v3758, %v3760
        %v3762 = vadd.f32 %v3761, -0.16666654
        %v3763 = vmul.f32 %v3758, %v3762
        %v3764 = vadd.f32 %v3763, 1.0
        %v3765 = vmul.f32 %v3764, %v3749
        %vm3766 = vweird.f32 %v665
        %v3767 = vadd.s32 %v3750, 3
        %v3768 = vand.u32 %v3767, 3
        %vm3769 = vcmp.lt.s32.totalorder %v3768, 2
        %vm3770 = vcmp.eq.s32.totalorder %v3768, 0
        %v3771 = vxor.u32 %v3765, 2147483648
        %v3772 = vsel %vm3770, %v3757, %v3771
        %vm3773 = vcmp.eq.s32.totalorder %v3768, 2
        %v3774 = vxor.u32 %v3757, 2147483648
        %v3775 = vsel %vm3773, %v3774, %v3765
        %v3776 = vsel %vm3769, %v3772, %v3775
        %v3777 = vsel %vm3766, nan, %v3776
        %v3778 = vand.u32 2147483647, %v666
        %vm3779 = vcmp.le.f32.partialorder %v3778, 0.7853982
        %vm3780 = vcmp.lt.s32.totalorder %v666, 0
        %v3781 = vand.u32 %v666, 2139095040
        %v3782 = vshrl.u32 %v3781, 23
        %v3783 = vsub.s32 %v3782, 127
        %v3784 = vand.u32 2147483647, %v666
        %v3785 = vand.u32 %v3784, 8388607
        %v3786 = vor.u32 %v3785, 8388608
        %v3787 = vsub.s32 0, %v3786
        %v3788 = vadd.s32 %v3783, 1
        %vm3789 = vcmp.gt.s32.totalorder %v3788, 0
        %v3790 = vsel %vm3789, %v3788, 0
        %v3791 = vshrl.u32 %v3790, 5
        %v3792 = vand.u32 %v3790, 31
        %v3793 = vsub.s32 32, %v3792
        %v3794 = vshrl.u32 683565275, %v3793
        %v3795 = vshll.u32 683565275, %v3792
        %v3796 = vshrl.u32 2475754826, %v3793
        %v3797 = vor.u32 %v3795, %v3796
        %v3798 = vshll.u32 2475754826, %v3792
        %v3799 = vshrl.u32 2131351028, %v3793
        %v3800 = vor.u32 %v3798, %v3799
        %v3801 = vshll.u32 2131351028, %v3792
        %v3802 = vshrl.u32 2102212464, %v3793
        %v3803 = vor.u32 %v3801, %v3802
        %v3804 = vshll.u32 2102212464, %v3792
        %v3805 = vshrl.u32 920167782, %v3793
        %v3806 = vor.u32 %v3804, %v3805
        %v3807 = vshll.u32 920167782, %v3792
        %v3808 = vshrl.u32 1326507024, %v3793
        %v3809 = vor.u32 %v3807, %v3808
        %vm3810 = vcmp.lt.s32.totalorder %v3791, 1
        %vm3811 = vcmp.lt.s32.totalorder %v3791, 2
        %vm3812 = vcmp.lt.s32.totalorder %v3791, 3
        %vm3813 = vcmp.lt.s32.totalorder %v3791, 4
        %v3814 = vsel %vm3810, %v3794, %v3797
        %v3815 = vsel %vm3813, %v3803, 2102212464
        %v3816 = vsel %vm3812, %v3800, %v3815
        %v3817 = vsel %vm3811, %v3814, %v3816
        %v3818 = vsel %vm3810, %v3797, %v3800
        %v3819 = vsel %vm3813, %v3806, 920167782
        %v3820 = vsel %vm3812, %v3803, %v3819
        %v3821 = vsel %vm3811, %v3818, %v3820
        %v3822 = vsel %vm3810, %v3800, %v3803
        %v3823 = vsel %vm3813, %v3809, 1326507024
        %v3824 = vsel %vm3812, %v3806, %v3823
        %v3825 = vsel %vm3811, %v3822, %v3824
        %v3826 = vshll.u32 %v3786, 8
        %v3827 = vand.u32 %v3826, 65535
        %v3828 = vshrl.u32 %v3826, 16
        %v3829 = vand.u32 %v3825, 65535
        %v3830 = vshrl.u32 %v3825, 16
        %v3831 = vmul.u32 %v3827, %v3829
        %v3832 = vmul.u32 %v3827, %v3830
        %v3833 = vmul.u32 %v3828, %v3829
        %v3834 = vmul.u32 %v3828, %v3830
        %v3835 = vshll.u32 %v3832, 16
        %v3836 = vshrl.u32 %v3832, 16
        %v3837 = vshll.u32 %v3833, 16
        %v3838 = vshrl.u32 %v3833, 16
        %vm3839 = vc.u32 %v3831, %v3835
        %v3840 = vsel %vm3839, 1, 0
        %v3841 = vadd.s32 %v3831, %v3835
        %v3842 = vadd.s32 %v3834, %v3840
        %vm3843 = vc.u32 %v3841, %v3837
        %v3844 = vsel %vm3843, 1, 0
        %v3845 = vadd.s32 %v3841, %v3837
        %v3846 = vadd.s32 %v3842, %v3844
        %v3847 = vadd.s32 %v3846, %v3836
        %v3848 = vadd.s32 %v3847, %v3838
        %v3849 = vand.u32 %v3826, 65535
        %v3850 = vshrl.u32 %v3826, 16
        %v3851 = vand.u32 %v3821, 65535
        %v3852 = vshrl.u32 %v3821, 16
        %v3853 = vmul.u32 %v3849, %v3851
        %v3854 = vmul.u32 %v3849, %v3852
        %v3855 = vmul.u32 %v3850, %v3851
        %v3856 = vmul.u32 %v3850, %v3852
        %v3857 = vshll.u32 %v3854, 16
        %v3858 = vshrl.u32 %v3854, 16
        %v3859 = vshll.u32 %v3855, 16
        %v3860 = vshrl.u32 %v3855, 16
        %vm3861 = vc.u32 %v3853, %v3857
        %v3862 = vsel %vm3861, 1, 0
        %v3863 = vadd.s32 %v3853, %v3857
        %v3864 = vadd.s32 %v3856, %v3862
        %vm3865 = vc.u32 %v3863, %v3859
        %v3866 = vsel %vm3865, 1, 0
        %v3867 = vadd.s32 %v3863, %v3859
        %v3868 = vadd.s32 %v3864, %v3866
        %v3869 = vadd.s32 %v3868, %v3858
        %v3870 = vadd.s32 %v3869, %v3860
        %v3871 = vmul.u32 %v3826, %v3817
        %v3872 = vadd.s32 %v3848, %v3867
        %vm3873 = vc.u32 %v3848, %v3867
        %v3874 = vadd.s32 %v3870, 1
        %v3875 = vsel %vm3873, %v3874, %v3870
        %v3876 = vadd.s32 %v3871, %v3875
        %v3877 = vadd.s32 %v3876, 536870912
        %v3878 = vshrl.u32 %v3877, 30
        %v3879 = vshll.u32 %v3878, 30
        %v3880 = vsub.s32 %v3876, %v3879
        %vm3881 = vcmp.lt.s32.totalorder %v3880, 0
        %v3882 = vsub.s32 0, %v3880
        %v3883 = vsel %vm3881, %v3882, %v3880
        %v3884 = vclz %v3883
        %v3885 = vsub.s32 %v3884, 2
        %vm3886 = vcmp.gt.s32.totalorder 0, %v3885
        %v3887 = vsel %vm3886, 0, %v3885
        %v3888 = vsub.s32 32, %v3887
        %v3889 = vshll.u32 %v3880, %v3887
        %v3890 = vshrl.u32 %v3872, %v3888
        %v3891 = vor.u32 %v3889, %v3890
        %v3892 = vsub.s32 4294967266, %v3887
        %v3893 = vadd.s32 %v3892, 127
        %v3894 = vshll.u32 %v3893, 23
        %v3895 = vor.u32 4788187, %v3894
        %v3896 = vand.u32 2147483647, %v3895
        %v3898 = vcvt.s32.f32 %v3891
        %v3899 = vmul.f32 %v3898, %v3896
        %v3900 = vxor.u32 %v3899, 2147483648
        %v3901 = vsel %vm3780, %v3900, %v3899
        %v3902 = vsub.s32 4, %v3878
        %v3903 = vsel %vm3780, %v3902, %v3878
        %v3904 = vsel %vm3779, %v666, %v3901
        %v3905 = vsel %vm3779, 0, %v3903
        %v3906 = vmul.f32 %v3904, %v3904
        %v3907 = vmul.f32 %v3906, -0.001358992
        %v3908 = vadd.f32 %v3907, 0.041655596
        %v3909 = vmul.f32 %v3906, %v3908
        %v3910 = vadd.f32 %v3909, -0.4999988
        %v3911 = vmul.f32 %v3906, %v3910
        %v3912 = vadd.f32 1.0, %v3911
        %v3913 = vmul.f32 %v3904, %v3904
        %v3914 = vmul.f32 %v3913, -0.00019511016
        %v3915 = vadd.f32 %v3914, 0.008332121
        %v3916 = vmul.f32 %v3913, %v3915
        %v3917 = vadd.f32 %v3916, -0.16666654
        %v3918 = vmul.f32 %v3913, %v3917
        %v3919 = vadd.f32 %v3918, 1.0
        %v3920 = vmul.f32 %v3919, %v3904
        %vm3921 = vweird.f32 %v666
        %v3922 = vadd.s32 %v3905, 3
        %v3923 = vand.u32 %v3922, 3
        %vm3924 = vcmp.lt.s32.totalorder %v3923, 2
        %vm3925 = vcmp.eq.s32.totalorder %v3923, 0
        %v3926 = vxor.u32 %v3920, 2147483648
        %v3927 = vsel %vm3925, %v3912, %v3926
        %vm3928 = vcmp.eq.s32.totalorder %v3923, 2
        %v3929 = vxor.u32 %v3912, 2147483648
        %v3930 = vsel %vm3928, %v3929, %v3920
        %v3931 = vsel %vm3924, %v3927, %v3930
        %v3932 = vsel %vm3921, nan, %v3931
        %v3933 = vand.u32 2147483647, %v667
        %vm3934 = vcmp.le.f32.partialorder %v3933, 0.7853982
        %vm3935 = vcmp.lt.s32.totalorder %v667, 0
        %v3936 = vand.u32 %v667, 2139095040
        %v3937 = vshrl.u32 %v3936, 23
        %v3938 = vsub.s32 %v3937, 127
        %v3939 = vand.u32 2147483647, %v667
        %v3940 = vand.u32 %v3939, 8388607
        %v3941 = vor.u32 %v3940, 8388608
        %v3942 = vsub.s32 0, %v3941
        %v3943 = vadd.s32 %v3938, 1
        %vm3944 = vcmp.gt.s32.totalorder %v3943, 0
        %v3945 = vsel %vm3944, %v3943, 0
        %v3946 = vshrl.u32 %v3945, 5
        %v3947 = vand.u32 %v3945, 31
        %v3948 = vsub.s32 32, %v3947
        %v3949 = vshrl.u32 683565275, %v3948
        %v3950 = vshll.u32 683565275, %v3947
        %v3951 = vshrl.u32 2475754826, %v3948
        %v3952 = vor.u32 %v3950, %v3951
        %v3953 = vshll.u32 2475754826, %v3947
        %v3954 = vshrl.u32 2131351028, %v3948
        %v3955 = vor.u32 %v3953, %v3954
        %v3956 = vshll.u32 2131351028, %v3947
        %v3957 = vshrl.u32 2102212464, %v3948
        %v3958 = vor.u32 %v3956, %v3957
        %v3959 = vshll.u32 2102212464, %v3947
        %v3960 = vshrl.u32 920167782, %v3948
        %v3961 = vor.u32 %v3959, %v3960
        %v3962 = vshll.u32 920167782, %v3947
        %v3963 = vshrl.u32 1326507024, %v3948
        %v3964 = vor.u32 %v3962, %v3963
        %vm3965 = vcmp.lt.s32.totalorder %v3946, 1
        %vm3966 = vcmp.lt.s32.totalorder %v3946, 2
        %vm3967 = vcmp.lt.s32.totalorder %v3946, 3
        %vm3968 = vcmp.lt.s32.totalorder %v3946, 4
        %v3969 = vsel %vm3965, %v3949, %v3952
        %v3970 = vsel %vm3968, %v3958, 2102212464
        %v3971 = vsel %vm3967, %v3955, %v3970
        %v3972 = vsel %vm3966, %v3969, %v3971
        %v3973 = vsel %vm3965, %v3952, %v3955
        %v3974 = vsel %vm3968, %v3961, 920167782
        %v3975 = vsel %vm3967, %v3958, %v3974
        %v3976 = vsel %vm3966, %v3973, %v3975
        %v3977 = vsel %vm3965, %v3955, %v3958
        %v3978 = vsel %vm3968, %v3964, 1326507024
        %v3979 = vsel %vm3967, %v3961, %v3978
        %v3980 = vsel %vm3966, %v3977, %v3979
        %v3981 = vshll.u32 %v3941, 8
        %v3982 = vand.u32 %v3981, 65535
        %v3983 = vshrl.u32 %v3981, 16
        %v3984 = vand.u32 %v3980, 65535
        %v3985 = vshrl.u32 %v3980, 16
        %v3986 = vmul.u32 %v3982, %v3984
        %v3987 = vmul.u32 %v3982, %v3985
        %v3988 = vmul.u32 %v3983, %v3984
        %v3989 = vmul.u32 %v3983, %v3985
        %v3990 = vshll.u32 %v3987, 16
        %v3991 = vshrl.u32 %v3987, 16
        %v3992 = vshll.u32 %v3988, 16
        %v3993 = vshrl.u32 %v3988, 16
        %vm3994 = vc.u32 %v3986, %v3990
        %v3995 = vsel %vm3994, 1, 0
        %v3996 = vadd.s32 %v3986, %v3990
        %v3997 = vadd.s32 %v3989, %v3995
        %vm3998 = vc.u32 %v3996, %v3992
        %v3999 = vsel %vm3998, 1, 0
        %v4000 = vadd.s32 %v3996, %v3992
        %v4001 = vadd.s32 %v3997, %v3999
        %v4002 = vadd.s32 %v4001, %v3991
        %v4003 = vadd.s32 %v4002, %v3993
        %v4004 = vand.u32 %v3981, 65535
        %v4005 = vshrl.u32 %v3981, 16
        %v4006 = vand.u32 %v3976, 65535
        %v4007 = vshrl.u32 %v3976, 16
        %v4008 = vmul.u32 %v4004, %v4006
        %v4009 = vmul.u32 %v4004, %v4007
        %v4010 = vmul.u32 %v4005, %v4006
        %v4011 = vmul.u32 %v4005, %v4007
        %v4012 = vshll.u32 %v4009, 16
        %v4013 = vshrl.u32 %v4009, 16
        %v4014 = vshll.u32 %v4010, 16
        %v4015 = vshrl.u32 %v4010, 16
        %vm4016 = vc.u32 %v4008, %v4012
        %v4017 = vsel %vm4016, 1, 0
        %v4018 = vadd.s32 %v4008, %v4012
        %v4019 = vadd.s32 %v4011, %v4017
        %vm4020 = vc.u32 %v4018, %v4014
        %v4021 = vsel %vm4020, 1, 0
        %v4022 = vadd.s32 %v4018, %v4014
        %v4023 = vadd.s32 %v4019, %v4021
        %v4024 = vadd.s32 %v4023, %v4013
        %v4025 = vadd.s32 %v4024, %v4015
        %v4026 = vmul.u32 %v3981, %v3972
        %v4027 = vadd.s32 %v4003, %v4022
        %vm4028 = vc.u32 %v4003, %v4022
        %v4029 = vadd.s32 %v4025, 1
        %v4030 = vsel %vm4028, %v4029, %v4025
        %v4031 = vadd.s32 %v4026, %v4030
        %v4032 = vadd.s32 %v4031, 536870912
        %v4033 = vshrl.u32 %v4032, 30
        %v4034 = vshll.u32 %v4033, 30
        %v4035 = vsub.s32 %v4031, %v4034
        %vm4036 = vcmp.lt.s32.totalorder %v4035, 0
        %v4037 = vsub.s32 0, %v4035
        %v4038 = vsel %vm4036, %v4037, %v4035
        %v4039 = vclz %v4038
        %v4040 = vsub.s32 %v4039, 2
        %vm4041 = vcmp.gt.s32.totalorder 0, %v4040
        %v4042 = vsel %vm4041, 0, %v4040
        %v4043 = vsub.s32 32, %v4042
        %v4044 = vshll.u32 %v4035, %v4042
        %v4045 = vshrl.u32 %v4027, %v4043
        %v4046 = vor.u32 %v4044, %v4045
        %v4047 = vsub.s32 4294967266, %v4042
        %v4048 = vadd.s32 %v4047, 127
        %v4049 = vshll.u32 %v4048, 23
        %v4050 = vor.u32 4788187, %v4049
        %v4051 = vand.u32 2147483647, %v4050
        %v4053 = vcvt.s32.f32 %v4046
        %v4054 = vmul.f32 %v4053, %v4051
        %v4055 = vxor.u32 %v4054, 2147483648
        %v4056 = vsel %vm3935, %v4055, %v4054
        %v4057 = vsub.s32 4, %v4033
        %v4058 = vsel %vm3935, %v4057, %v4033
        %v4059 = vsel %vm3934, %v667, %v4056
        %v4060 = vsel %vm3934, 0, %v4058
        %v4061 = vmul.f32 %v4059, %v4059
        %v4062 = vmul.f32 %v4061, -0.001358992
        %v4063 = vadd.f32 %v4062, 0.041655596
        %v4064 = vmul.f32 %v4061, %v4063
        %v4065 = vadd.f32 %v4064, -0.4999988
        %v4066 = vmul.f32 %v4061, %v4065
        %v4067 = vadd.f32 1.0, %v4066
        %v4068 = vmul.f32 %v4059, %v4059
        %v4069 = vmul.f32 %v4068, -0.00019511016
        %v4070 = vadd.f32 %v4069, 0.008332121
        %v4071 = vmul.f32 %v4068, %v4070
        %v4072 = vadd.f32 %v4071, -0.16666654
        %v4073 = vmul.f32 %v4068, %v4072
        %v4074 = vadd.f32 %v4073, 1.0
        %v4075 = vmul.f32 %v4074, %v4059
        %vm4076 = vweird.f32 %v667
        %v4077 = vadd.s32 %v4060, 3
        %v4078 = vand.u32 %v4077, 3
        %vm4079 = vcmp.lt.s32.totalorder %v4078, 2
        %vm4080 = vcmp.eq.s32.totalorder %v4078, 0
        %v4081 = vxor.u32 %v4075, 2147483648
        %v4082 = vsel %vm4080, %v4067, %v4081
        %vm4083 = vcmp.eq.s32.totalorder %v4078, 2
        %v4084 = vxor.u32 %v4067, 2147483648
        %v4085 = vsel %vm4083, %v4084, %v4075
        %v4086 = vsel %vm4079, %v4082, %v4085
        %v4087 = vsel %vm4076, nan, %v4086
        %v4088 = vand.u32 2147483647, %v668
        %vm4089 = vcmp.le.f32.partialorder %v4088, 0.7853982
        %vm4090 = vcmp.lt.s32.totalorder %v668, 0
        %v4091 = vand.u32 %v668, 2139095040
        %v4092 = vshrl.u32 %v4091, 23
        %v4093 = vsub.s32 %v4092, 127
        %v4094 = vand.u32 2147483647, %v668
        %v4095 = vand.u32 %v4094, 8388607
        %v4096 = vor.u32 %v4095, 8388608
        %v4097 = vsub.s32 0, %v4096
        %v4098 = vadd.s32 %v4093, 1
        %vm4099 = vcmp.gt.s32.totalorder %v4098, 0
        %v4100 = vsel %vm4099, %v4098, 0
        %v4101 = vshrl.u32 %v4100, 5
        %v4102 = vand.u32 %v4100, 31
        %v4103 = vsub.s32 32, %v4102
        %v4104 = vshrl.u32 683565275, %v4103
        %v4105 = vshll.u32 683565275, %v4102
        %v4106 = vshrl.u32 2475754826, %v4103
        %v4107 = vor.u32 %v4105, %v4106
        %v4108 = vshll.u32 2475754826, %v4102
        %v4109 = vshrl.u32 2131351028, %v4103
        %v4110 = vor.u32 %v4108, %v4109
        %v4111 = vshll.u32 2131351028, %v4102
        %v4112 = vshrl.u32 2102212464, %v4103
        %v4113 = vor.u32 %v4111, %v4112
        %v4114 = vshll.u32 2102212464, %v4102
        %v4115 = vshrl.u32 920167782, %v4103
        %v4116 = vor.u32 %v4114, %v4115
        %v4117 = vshll.u32 920167782, %v4102
        %v4118 = vshrl.u32 1326507024, %v4103
        %v4119 = vor.u32 %v4117, %v4118
        %vm4120 = vcmp.lt.s32.totalorder %v4101, 1
        %vm4121 = vcmp.lt.s32.totalorder %v4101, 2
        %vm4122 = vcmp.lt.s32.totalorder %v4101, 3
        %vm4123 = vcmp.lt.s32.totalorder %v4101, 4
        %v4124 = vsel %vm4120, %v4104, %v4107
        %v4125 = vsel %vm4123, %v4113, 2102212464
        %v4126 = vsel %vm4122, %v4110, %v4125
        %v4127 = vsel %vm4121, %v4124, %v4126
        %v4128 = vsel %vm4120, %v4107, %v4110
        %v4129 = vsel %vm4123, %v4116, 920167782
        %v4130 = vsel %vm4122, %v4113, %v4129
        %v4131 = vsel %vm4121, %v4128, %v4130
        %v4132 = vsel %vm4120, %v4110, %v4113
        %v4133 = vsel %vm4123, %v4119, 1326507024
        %v4134 = vsel %vm4122, %v4116, %v4133
        %v4135 = vsel %vm4121, %v4132, %v4134
        %v4136 = vshll.u32 %v4096, 8
        %v4137 = vand.u32 %v4136, 65535
        %v4138 = vshrl.u32 %v4136, 16
        %v4139 = vand.u32 %v4135, 65535
        %v4140 = vshrl.u32 %v4135, 16
        %v4141 = vmul.u32 %v4137, %v4139
        %v4142 = vmul.u32 %v4137, %v4140
        %v4143 = vmul.u32 %v4138, %v4139
        %v4144 = vmul.u32 %v4138, %v4140
        %v4145 = vshll.u32 %v4142, 16
        %v4146 = vshrl.u32 %v4142, 16
        %v4147 = vshll.u32 %v4143, 16
        %v4148 = vshrl.u32 %v4143, 16
        %vm4149 = vc.u32 %v4141, %v4145
        %v4150 = vsel %vm4149, 1, 0
        %v4151 = vadd.s32 %v4141, %v4145
        %v4152 = vadd.s32 %v4144, %v4150
        %vm4153 = vc.u32 %v4151, %v4147
        %v4154 = vsel %vm4153, 1, 0
        %v4155 = vadd.s32 %v4151, %v4147
        %v4156 = vadd.s32 %v4152, %v4154
        %v4157 = vadd.s32 %v4156, %v4146
        %v4158 = vadd.s32 %v4157, %v4148
        %v4159 = vand.u32 %v4136, 65535
        %v4160 = vshrl.u32 %v4136, 16
        %v4161 = vand.u32 %v4131, 65535
        %v4162 = vshrl.u32 %v4131, 16
        %v4163 = vmul.u32 %v4159, %v4161
        %v4164 = vmul.u32 %v4159, %v4162
        %v4165 = vmul.u32 %v4160, %v4161
        %v4166 = vmul.u32 %v4160, %v4162
        %v4167 = vshll.u32 %v4164, 16
        %v4168 = vshrl.u32 %v4164, 16
        %v4169 = vshll.u32 %v4165, 16
        %v4170 = vshrl.u32 %v4165, 16
        %vm4171 = vc.u32 %v4163, %v4167
        %v4172 = vsel %vm4171, 1, 0
        %v4173 = vadd.s32 %v4163, %v4167
        %v4174 = vadd.s32 %v4166, %v4172
        %vm4175 = vc.u32 %v4173, %v4169
        %v4176 = vsel %vm4175, 1, 0
        %v4177 = vadd.s32 %v4173, %v4169
        %v4178 = vadd.s32 %v4174, %v4176
        %v4179 = vadd.s32 %v4178, %v4168
        %v4180 = vadd.s32 %v4179, %v4170
        %v4181 = vmul.u32 %v4136, %v4127
        %v4182 = vadd.s32 %v4158, %v4177
        %vm4183 = vc.u32 %v4158, %v4177
        %v4184 = vadd.s32 %v4180, 1
        %v4185 = vsel %vm4183, %v4184, %v4180
        %v4186 = vadd.s32 %v4181, %v4185
        %v4187 = vadd.s32 %v4186, 536870912
        %v4188 = vshrl.u32 %v4187, 30
        %v4189 = vshll.u32 %v4188, 30
        %v4190 = vsub.s32 %v4186, %v4189
        %vm4191 = vcmp.lt.s32.totalorder %v4190, 0
        %v4192 = vsub.s32 0, %v4190
        %v4193 = vsel %vm4191, %v4192, %v4190
        %v4194 = vclz %v4193
        %v4195 = vsub.s32 %v4194, 2
        %vm4196 = vcmp.gt.s32.totalorder 0, %v4195
        %v4197 = vsel %vm4196, 0, %v4195
        %v4198 = vsub.s32 32, %v4197
        %v4199 = vshll.u32 %v4190, %v4197
        %v4200 = vshrl.u32 %v4182, %v4198
        %v4201 = vor.u32 %v4199, %v4200
        %v4202 = vsub.s32 4294967266, %v4197
        %v4203 = vadd.s32 %v4202, 127
        %v4204 = vshll.u32 %v4203, 23
        %v4205 = vor.u32 4788187, %v4204
        %v4206 = vand.u32 2147483647, %v4205
        %v4208 = vcvt.s32.f32 %v4201
        %v4209 = vmul.f32 %v4208, %v4206
        %v4210 = vxor.u32 %v4209, 2147483648
        %v4211 = vsel %vm4090, %v4210, %v4209
        %v4212 = vsub.s32 4, %v4188
        %v4213 = vsel %vm4090, %v4212, %v4188
        %v4214 = vsel %vm4089, %v668, %v4211
        %v4215 = vsel %vm4089, 0, %v4213
        %v4216 = vmul.f32 %v4214, %v4214
        %v4217 = vmul.f32 %v4216, -0.001358992
        %v4218 = vadd.f32 %v4217, 0.041655596
        %v4219 = vmul.f32 %v4216, %v4218
        %v4220 = vadd.f32 %v4219, -0.4999988
        %v4221 = vmul.f32 %v4216, %v4220
        %v4222 = vadd.f32 1.0, %v4221
        %v4223 = vmul.f32 %v4214, %v4214
        %v4224 = vmul.f32 %v4223, -0.00019511016
        %v4225 = vadd.f32 %v4224, 0.008332121
        %v4226 = vmul.f32 %v4223, %v4225
        %v4227 = vadd.f32 %v4226, -0.16666654
        %v4228 = vmul.f32 %v4223, %v4227
        %v4229 = vadd.f32 %v4228, 1.0
        %v4230 = vmul.f32 %v4229, %v4214
        %vm4231 = vweird.f32 %v668
        %v4232 = vadd.s32 %v4215, 3
        %v4233 = vand.u32 %v4232, 3
        %vm4234 = vcmp.lt.s32.totalorder %v4233, 2
        %vm4235 = vcmp.eq.s32.totalorder %v4233, 0
        %v4236 = vxor.u32 %v4230, 2147483648
        %v4237 = vsel %vm4235, %v4222, %v4236
        %vm4238 = vcmp.eq.s32.totalorder %v4233, 2
        %v4239 = vxor.u32 %v4222, 2147483648
        %v4240 = vsel %vm4238, %v4239, %v4230
        %v4241 = vsel %vm4234, %v4237, %v4240
        %v4242 = vsel %vm4231, nan, %v4241
        %v4243 = vand.u32 2147483647, %v669
        %vm4244 = vcmp.le.f32.partialorder %v4243, 0.7853982
        %vm4245 = vcmp.lt.s32.totalorder %v669, 0
        %v4246 = vand.u32 %v669, 2139095040
        %v4247 = vshrl.u32 %v4246, 23
        %v4248 = vsub.s32 %v4247, 127
        %v4249 = vand.u32 2147483647, %v669
        %v4250 = vand.u32 %v4249, 8388607
        %v4251 = vor.u32 %v4250, 8388608
        %v4252 = vsub.s32 0, %v4251
        %v4253 = vadd.s32 %v4248, 1
        %vm4254 = vcmp.gt.s32.totalorder %v4253, 0
        %v4255 = vsel %vm4254, %v4253, 0
        %v4256 = vshrl.u32 %v4255, 5
        %v4257 = vand.u32 %v4255, 31
        %v4258 = vsub.s32 32, %v4257
        %v4259 = vshrl.u32 683565275, %v4258
        %v4260 = vshll.u32 683565275, %v4257
        %v4261 = vshrl.u32 2475754826, %v4258
        %v4262 = vor.u32 %v4260, %v4261
        %v4263 = vshll.u32 2475754826, %v4257
        %v4264 = vshrl.u32 2131351028, %v4258
        %v4265 = vor.u32 %v4263, %v4264
        %v4266 = vshll.u32 2131351028, %v4257
        %v4267 = vshrl.u32 2102212464, %v4258
        %v4268 = vor.u32 %v4266, %v4267
        %v4269 = vshll.u32 2102212464, %v4257
        %v4270 = vshrl.u32 920167782, %v4258
        %v4271 = vor.u32 %v4269, %v4270
        %v4272 = vshll.u32 920167782, %v4257
        %v4273 = vshrl.u32 1326507024, %v4258
        %v4274 = vor.u32 %v4272, %v4273
        %vm4275 = vcmp.lt.s32.totalorder %v4256, 1
        %vm4276 = vcmp.lt.s32.totalorder %v4256, 2
        %vm4277 = vcmp.lt.s32.totalorder %v4256, 3
        %vm4278 = vcmp.lt.s32.totalorder %v4256, 4
        %v4279 = vsel %vm4275, %v4259, %v4262
        %v4280 = vsel %vm4278, %v4268, 2102212464
        %v4281 = vsel %vm4277, %v4265, %v4280
        %v4282 = vsel %vm4276, %v4279, %v4281
        %v4283 = vsel %vm4275, %v4262, %v4265
        %v4284 = vsel %vm4278, %v4271, 920167782
        %v4285 = vsel %vm4277, %v4268, %v4284
        %v4286 = vsel %vm4276, %v4283, %v4285
        %v4287 = vsel %vm4275, %v4265, %v4268
        %v4288 = vsel %vm4278, %v4274, 1326507024
        %v4289 = vsel %vm4277, %v4271, %v4288
        %v4290 = vsel %vm4276, %v4287, %v4289
        %v4291 = vshll.u32 %v4251, 8
        %v4292 = vand.u32 %v4291, 65535
        %v4293 = vshrl.u32 %v4291, 16
        %v4294 = vand.u32 %v4290, 65535
        %v4295 = vshrl.u32 %v4290, 16
        %v4296 = vmul.u32 %v4292, %v4294
        %v4297 = vmul.u32 %v4292, %v4295
        %v4298 = vmul.u32 %v4293, %v4294
        %v4299 = vmul.u32 %v4293, %v4295
        %v4300 = vshll.u32 %v4297, 16
        %v4301 = vshrl.u32 %v4297, 16
        %v4302 = vshll.u32 %v4298, 16
        %v4303 = vshrl.u32 %v4298, 16
        %vm4304 = vc.u32 %v4296, %v4300
        %v4305 = vsel %vm4304, 1, 0
        %v4306 = vadd.s32 %v4296, %v4300
        %v4307 = vadd.s32 %v4299, %v4305
        %vm4308 = vc.u32 %v4306, %v4302
        %v4309 = vsel %vm4308, 1, 0
        %v4310 = vadd.s32 %v4306, %v4302
        %v4311 = vadd.s32 %v4307, %v4309
        %v4312 = vadd.s32 %v4311, %v4301
        %v4313 = vadd.s32 %v4312, %v4303
        %v4314 = vand.u32 %v4291, 65535
        %v4315 = vshrl.u32 %v4291, 16
        %v4316 = vand.u32 %v4286, 65535
        %v4317 = vshrl.u32 %v4286, 16
        %v4318 = vmul.u32 %v4314, %v4316
        %v4319 = vmul.u32 %v4314, %v4317
        %v4320 = vmul.u32 %v4315, %v4316
        %v4321 = vmul.u32 %v4315, %v4317
        %v4322 = vshll.u32 %v4319, 16
        %v4323 = vshrl.u32 %v4319, 16
        %v4324 = vshll.u32 %v4320, 16
        %v4325 = vshrl.u32 %v4320, 16
        %vm4326 = vc.u32 %v4318, %v4322
        %v4327 = vsel %vm4326, 1, 0
        %v4328 = vadd.s32 %v4318, %v4322
        %v4329 = vadd.s32 %v4321, %v4327
        %vm4330 = vc.u32 %v4328, %v4324
        %v4331 = vsel %vm4330, 1, 0
        %v4332 = vadd.s32 %v4328, %v4324
        %v4333 = vadd.s32 %v4329, %v4331
        %v4334 = vadd.s32 %v4333, %v4323
        %v4335 = vadd.s32 %v4334, %v4325
        %v4336 = vmul.u32 %v4291, %v4282
        %v4337 = vadd.s32 %v4313, %v4332
        %vm4338 = vc.u32 %v4313, %v4332
        %v4339 = vadd.s32 %v4335, 1
        %v4340 = vsel %vm4338, %v4339, %v4335
        %v4341 = vadd.s32 %v4336, %v4340
        %v4342 = vadd.s32 %v4341, 536870912
        %v4343 = vshrl.u32 %v4342, 30
        %v4344 = vshll.u32 %v4343, 30
        %v4345 = vsub.s32 %v4341, %v4344
        %vm4346 = vcmp.lt.s32.totalorder %v4345, 0
        %v4347 = vsub.s32 0, %v4345
        %v4348 = vsel %vm4346, %v4347, %v4345
        %v4349 = vclz %v4348
        %v4350 = vsub.s32 %v4349, 2
        %vm4351 = vcmp.gt.s32.totalorder 0, %v4350
        %v4352 = vsel %vm4351, 0, %v4350
        %v4353 = vsub.s32 32, %v4352
        %v4354 = vshll.u32 %v4345, %v4352
        %v4355 = vshrl.u32 %v4337, %v4353
        %v4356 = vor.u32 %v4354, %v4355
        %v4357 = vsub.s32 4294967266, %v4352
        %v4358 = vadd.s32 %v4357, 127
        %v4359 = vshll.u32 %v4358, 23
        %v4360 = vor.u32 4788187, %v4359
        %v4361 = vand.u32 2147483647, %v4360
        %v4363 = vcvt.s32.f32 %v4356
        %v4364 = vmul.f32 %v4363, %v4361
        %v4365 = vxor.u32 %v4364, 2147483648
        %v4366 = vsel %vm4245, %v4365, %v4364
        %v4367 = vsub.s32 4, %v4343
        %v4368 = vsel %vm4245, %v4367, %v4343
        %v4369 = vsel %vm4244, %v669, %v4366
        %v4370 = vsel %vm4244, 0, %v4368
        %v4371 = vmul.f32 %v4369, %v4369
        %v4372 = vmul.f32 %v4371, -0.001358992
        %v4373 = vadd.f32 %v4372, 0.041655596
        %v4374 = vmul.f32 %v4371, %v4373
        %v4375 = vadd.f32 %v4374, -0.4999988
        %v4376 = vmul.f32 %v4371, %v4375
        %v4377 = vadd.f32 1.0, %v4376
        %v4378 = vmul.f32 %v4369, %v4369
        %v4379 = vmul.f32 %v4378, -0.00019511016
        %v4380 = vadd.f32 %v4379, 0.008332121
        %v4381 = vmul.f32 %v4378, %v4380
        %v4382 = vadd.f32 %v4381, -0.16666654
        %v4383 = vmul.f32 %v4378, %v4382
        %v4384 = vadd.f32 %v4383, 1.0
        %v4385 = vmul.f32 %v4384, %v4369
        %vm4386 = vweird.f32 %v669
        %v4387 = vadd.s32 %v4370, 3
        %v4388 = vand.u32 %v4387, 3
        %vm4389 = vcmp.lt.s32.totalorder %v4388, 2
        %vm4390 = vcmp.eq.s32.totalorder %v4388, 0
        %v4391 = vxor.u32 %v4385, 2147483648
        %v4392 = vsel %vm4390, %v4377, %v4391
        %vm4393 = vcmp.eq.s32.totalorder %v4388, 2
        %v4394 = vxor.u32 %v4377, 2147483648
        %v4395 = vsel %vm4393, %v4394, %v4385
        %v4396 = vsel %vm4389, %v4392, %v4395
        %v4397 = vsel %vm4386, nan, %v4396
        %v4398 = vand.u32 2147483647, %v670
        %vm4399 = vcmp.le.f32.partialorder %v4398, 0.7853982
        %vm4400 = vcmp.lt.s32.totalorder %v670, 0
        %v4401 = vand.u32 %v670, 2139095040
        %v4402 = vshrl.u32 %v4401, 23
        %v4403 = vsub.s32 %v4402, 127
        %v4404 = vand.u32 2147483647, %v670
        %v4405 = vand.u32 %v4404, 8388607
        %v4406 = vor.u32 %v4405, 8388608
        %v4407 = vsub.s32 0, %v4406
        %v4408 = vadd.s32 %v4403, 1
        %vm4409 = vcmp.gt.s32.totalorder %v4408, 0
        %v4410 = vsel %vm4409, %v4408, 0
        %v4411 = vshrl.u32 %v4410, 5
        %v4412 = vand.u32 %v4410, 31
        %v4413 = vsub.s32 32, %v4412
        %v4414 = vshrl.u32 683565275, %v4413
        %v4415 = vshll.u32 683565275, %v4412
        %v4416 = vshrl.u32 2475754826, %v4413
        %v4417 = vor.u32 %v4415, %v4416
        %v4418 = vshll.u32 2475754826, %v4412
        %v4419 = vshrl.u32 2131351028, %v4413
        %v4420 = vor.u32 %v4418, %v4419
        %v4421 = vshll.u32 2131351028, %v4412
        %v4422 = vshrl.u32 2102212464, %v4413
        %v4423 = vor.u32 %v4421, %v4422
        %v4424 = vshll.u32 2102212464, %v4412
        %v4425 = vshrl.u32 920167782, %v4413
        %v4426 = vor.u32 %v4424, %v4425
        %v4427 = vshll.u32 920167782, %v4412
        %v4428 = vshrl.u32 1326507024, %v4413
        %v4429 = vor.u32 %v4427, %v4428
        %vm4430 = vcmp.lt.s32.totalorder %v4411, 1
        %vm4431 = vcmp.lt.s32.totalorder %v4411, 2
        %vm4432 = vcmp.lt.s32.totalorder %v4411, 3
        %vm4433 = vcmp.lt.s32.totalorder %v4411, 4
        %v4434 = vsel %vm4430, %v4414, %v4417
        %v4435 = vsel %vm4433, %v4423, 2102212464
        %v4436 = vsel %vm4432, %v4420, %v4435
        %v4437 = vsel %vm4431, %v4434, %v4436
        %v4438 = vsel %vm4430, %v4417, %v4420
        %v4439 = vsel %vm4433, %v4426, 920167782
        %v4440 = vsel %vm4432, %v4423, %v4439
        %v4441 = vsel %vm4431, %v4438, %v4440
        %v4442 = vsel %vm4430, %v4420, %v4423
        %v4443 = vsel %vm4433, %v4429, 1326507024
        %v4444 = vsel %vm4432, %v4426, %v4443
        %v4445 = vsel %vm4431, %v4442, %v4444
        %v4446 = vshll.u32 %v4406, 8
        %v4447 = vand.u32 %v4446, 65535
        %v4448 = vshrl.u32 %v4446, 16
        %v4449 = vand.u32 %v4445, 65535
        %v4450 = vshrl.u32 %v4445, 16
        %v4451 = vmul.u32 %v4447, %v4449
        %v4452 = vmul.u32 %v4447, %v4450
        %v4453 = vmul.u32 %v4448, %v4449
        %v4454 = vmul.u32 %v4448, %v4450
        %v4455 = vshll.u32 %v4452, 16
        %v4456 = vshrl.u32 %v4452, 16
        %v4457 = vshll.u32 %v4453, 16
        %v4458 = vshrl.u32 %v4453, 16
        %vm4459 = vc.u32 %v4451, %v4455
        %v4460 = vsel %vm4459, 1, 0
        %v4461 = vadd.s32 %v4451, %v4455
        %v4462 = vadd.s32 %v4454, %v4460
        %vm4463 = vc.u32 %v4461, %v4457
        %v4464 = vsel %vm4463, 1, 0
        %v4465 = vadd.s32 %v4461, %v4457
        %v4466 = vadd.s32 %v4462, %v4464
        %v4467 = vadd.s32 %v4466, %v4456
        %v4468 = vadd.s32 %v4467, %v4458
        %v4469 = vand.u32 %v4446, 65535
        %v4470 = vshrl.u32 %v4446, 16
        %v4471 = vand.u32 %v4441, 65535
        %v4472 = vshrl.u32 %v4441, 16
        %v4473 = vmul.u32 %v4469, %v4471
        %v4474 = vmul.u32 %v4469, %v4472
        %v4475 = vmul.u32 %v4470, %v4471
        %v4476 = vmul.u32 %v4470, %v4472
        %v4477 = vshll.u32 %v4474, 16
        %v4478 = vshrl.u32 %v4474, 16
        %v4479 = vshll.u32 %v4475, 16
        %v4480 = vshrl.u32 %v4475, 16
        %vm4481 = vc.u32 %v4473, %v4477
        %v4482 = vsel %vm4481, 1, 0
        %v4483 = vadd.s32 %v4473, %v4477
        %v4484 = vadd.s32 %v4476, %v4482
        %vm4485 = vc.u32 %v4483, %v4479
        %v4486 = vsel %vm4485, 1, 0
        %v4487 = vadd.s32 %v4483, %v4479
        %v4488 = vadd.s32 %v4484, %v4486
        %v4489 = vadd.s32 %v4488, %v4478
        %v4490 = vadd.s32 %v4489, %v4480
        %v4491 = vmul.u32 %v4446, %v4437
        %v4492 = vadd.s32 %v4468, %v4487
        %vm4493 = vc.u32 %v4468, %v4487
        %v4494 = vadd.s32 %v4490, 1
        %v4495 = vsel %vm4493, %v4494, %v4490
        %v4496 = vadd.s32 %v4491, %v4495
        %v4497 = vadd.s32 %v4496, 536870912
        %v4498 = vshrl.u32 %v4497, 30
        %v4499 = vshll.u32 %v4498, 30
        %v4500 = vsub.s32 %v4496, %v4499
        %vm4501 = vcmp.lt.s32.totalorder %v4500, 0
        %v4502 = vsub.s32 0, %v4500
        %v4503 = vsel %vm4501, %v4502, %v4500
        %v4504 = vclz %v4503
        %v4505 = vsub.s32 %v4504, 2
        %vm4506 = vcmp.gt.s32.totalorder 0, %v4505
        %v4507 = vsel %vm4506, 0, %v4505
        %v4508 = vsub.s32 32, %v4507
        %v4509 = vshll.u32 %v4500, %v4507
        %v4510 = vshrl.u32 %v4492, %v4508
        %v4511 = vor.u32 %v4509, %v4510
        %v4512 = vsub.s32 4294967266, %v4507
        %v4513 = vadd.s32 %v4512, 127
        %v4514 = vshll.u32 %v4513, 23
        %v4515 = vor.u32 4788187, %v4514
        %v4516 = vand.u32 2147483647, %v4515
        %v4518 = vcvt.s32.f32 %v4511
        %v4519 = vmul.f32 %v4518, %v4516
        %v4520 = vxor.u32 %v4519, 2147483648
        %v4521 = vsel %vm4400, %v4520, %v4519
        %v4522 = vsub.s32 4, %v4498
        %v4523 = vsel %vm4400, %v4522, %v4498
        %v4524 = vsel %vm4399, %v670, %v4521
        %v4525 = vsel %vm4399, 0, %v4523
        %v4526 = vmul.f32 %v4524, %v4524
        %v4527 = vmul.f32 %v4526, -0.001358992
        %v4528 = vadd.f32 %v4527, 0.041655596
        %v4529 = vmul.f32 %v4526, %v4528
        %v4530 = vadd.f32 %v4529, -0.4999988
        %v4531 = vmul.f32 %v4526, %v4530
        %v4532 = vadd.f32 1.0, %v4531
        %v4533 = vmul.f32 %v4524, %v4524
        %v4534 = vmul.f32 %v4533, -0.00019511016
        %v4535 = vadd.f32 %v4534, 0.008332121
        %v4536 = vmul.f32 %v4533, %v4535
        %v4537 = vadd.f32 %v4536, -0.16666654
        %v4538 = vmul.f32 %v4533, %v4537
        %v4539 = vadd.f32 %v4538, 1.0
        %v4540 = vmul.f32 %v4539, %v4524
        %vm4541 = vweird.f32 %v670
        %v4542 = vadd.s32 %v4525, 3
        %v4543 = vand.u32 %v4542, 3
        %vm4544 = vcmp.lt.s32.totalorder %v4543, 2
        %vm4545 = vcmp.eq.s32.totalorder %v4543, 0
        %v4546 = vxor.u32 %v4540, 2147483648
        %v4547 = vsel %vm4545, %v4532, %v4546
        %vm4548 = vcmp.eq.s32.totalorder %v4543, 2
        %v4549 = vxor.u32 %v4532, 2147483648
        %v4550 = vsel %vm4548, %v4549, %v4540
        %v4551 = vsel %vm4544, %v4547, %v4550
        %v4552 = vsel %vm4541, nan, %v4551
        %v4553 = vand.u32 2147483647, %v671
        %vm4554 = vcmp.le.f32.partialorder %v4553, 0.7853982
        %vm4555 = vcmp.lt.s32.totalorder %v671, 0
        %v4556 = vand.u32 %v671, 2139095040
        %v4557 = vshrl.u32 %v4556, 23
        %v4558 = vsub.s32 %v4557, 127
        %v4559 = vand.u32 2147483647, %v671
        %v4560 = vand.u32 %v4559, 8388607
        %v4561 = vor.u32 %v4560, 8388608
        %v4562 = vsub.s32 0, %v4561
        %v4563 = vadd.s32 %v4558, 1
        %vm4564 = vcmp.gt.s32.totalorder %v4563, 0
        %v4565 = vsel %vm4564, %v4563, 0
        %v4566 = vshrl.u32 %v4565, 5
        %v4567 = vand.u32 %v4565, 31
        %v4568 = vsub.s32 32, %v4567
        %v4569 = vshrl.u32 683565275, %v4568
        %v4570 = vshll.u32 683565275, %v4567
        %v4571 = vshrl.u32 2475754826, %v4568
        %v4572 = vor.u32 %v4570, %v4571
        %v4573 = vshll.u32 2475754826, %v4567
        %v4574 = vshrl.u32 2131351028, %v4568
        %v4575 = vor.u32 %v4573, %v4574
        %v4576 = vshll.u32 2131351028, %v4567
        %v4577 = vshrl.u32 2102212464, %v4568
        %v4578 = vor.u32 %v4576, %v4577
        %v4579 = vshll.u32 2102212464, %v4567
        %v4580 = vshrl.u32 920167782, %v4568
        %v4581 = vor.u32 %v4579, %v4580
        %v4582 = vshll.u32 920167782, %v4567
        %v4583 = vshrl.u32 1326507024, %v4568
        %v4584 = vor.u32 %v4582, %v4583
        %vm4585 = vcmp.lt.s32.totalorder %v4566, 1
        %vm4586 = vcmp.lt.s32.totalorder %v4566, 2
        %vm4587 = vcmp.lt.s32.totalorder %v4566, 3
        %vm4588 = vcmp.lt.s32.totalorder %v4566, 4
        %v4589 = vsel %vm4585, %v4569, %v4572
        %v4590 = vsel %vm4588, %v4578, 2102212464
        %v4591 = vsel %vm4587, %v4575, %v4590
        %v4592 = vsel %vm4586, %v4589, %v4591
        %v4593 = vsel %vm4585, %v4572, %v4575
        %v4594 = vsel %vm4588, %v4581, 920167782
        %v4595 = vsel %vm4587, %v4578, %v4594
        %v4596 = vsel %vm4586, %v4593, %v4595
        %v4597 = vsel %vm4585, %v4575, %v4578
        %v4598 = vsel %vm4588, %v4584, 1326507024
        %v4599 = vsel %vm4587, %v4581, %v4598
        %v4600 = vsel %vm4586, %v4597, %v4599
        %v4601 = vshll.u32 %v4561, 8
        %v4602 = vand.u32 %v4601, 65535
        %v4603 = vshrl.u32 %v4601, 16
        %v4604 = vand.u32 %v4600, 65535
        %v4605 = vshrl.u32 %v4600, 16
        %v4606 = vmul.u32 %v4602, %v4604
        %v4607 = vmul.u32 %v4602, %v4605
        %v4608 = vmul.u32 %v4603, %v4604
        %v4609 = vmul.u32 %v4603, %v4605
        %v4610 = vshll.u32 %v4607, 16
        %v4611 = vshrl.u32 %v4607, 16
        %v4612 = vshll.u32 %v4608, 16
        %v4613 = vshrl.u32 %v4608, 16
        %vm4614 = vc.u32 %v4606, %v4610
        %v4615 = vsel %vm4614, 1, 0
        %v4616 = vadd.s32 %v4606, %v4610
        %v4617 = vadd.s32 %v4609, %v4615
        %vm4618 = vc.u32 %v4616, %v4612
        %v4619 = vsel %vm4618, 1, 0
        %v4620 = vadd.s32 %v4616, %v4612
        %v4621 = vadd.s32 %v4617, %v4619
        %v4622 = vadd.s32 %v4621, %v4611
        %v4623 = vadd.s32 %v4622, %v4613
        %v4624 = vand.u32 %v4601, 65535
        %v4625 = vshrl.u32 %v4601, 16
        %v4626 = vand.u32 %v4596, 65535
        %v4627 = vshrl.u32 %v4596, 16
        %v4628 = vmul.u32 %v4624, %v4626
        %v4629 = vmul.u32 %v4624, %v4627
        %v4630 = vmul.u32 %v4625, %v4626
        %v4631 = vmul.u32 %v4625, %v4627
        %v4632 = vshll.u32 %v4629, 16
        %v4633 = vshrl.u32 %v4629, 16
        %v4634 = vshll.u32 %v4630, 16
        %v4635 = vshrl.u32 %v4630, 16
        %vm4636 = vc.u32 %v4628, %v4632
        %v4637 = vsel %vm4636, 1, 0
        %v4638 = vadd.s32 %v4628, %v4632
        %v4639 = vadd.s32 %v4631, %v4637
        %vm4640 = vc.u32 %v4638, %v4634
        %v4641 = vsel %vm4640, 1, 0
        %v4642 = vadd.s32 %v4638, %v4634
        %v4643 = vadd.s32 %v4639, %v4641
        %v4644 = vadd.s32 %v4643, %v4633
        %v4645 = vadd.s32 %v4644, %v4635
        %v4646 = vmul.u32 %v4601, %v4592
        %v4647 = vadd.s32 %v4623, %v4642
        %vm4648 = vc.u32 %v4623, %v4642
        %v4649 = vadd.s32 %v4645, 1
        %v4650 = vsel %vm4648, %v4649, %v4645
        %v4651 = vadd.s32 %v4646, %v4650
        %v4652 = vadd.s32 %v4651, 536870912
        %v4653 = vshrl.u32 %v4652, 30
        %v4654 = vshll.u32 %v4653, 30
        %v4655 = vsub.s32 %v4651, %v4654
        %vm4656 = vcmp.lt.s32.totalorder %v4655, 0
        %v4657 = vsub.s32 0, %v4655
        %v4658 = vsel %vm4656, %v4657, %v4655
        %v4659 = vclz %v4658
        %v4660 = vsub.s32 %v4659, 2
        %vm4661 = vcmp.gt.s32.totalorder 0, %v4660
        %v4662 = vsel %vm4661, 0, %v4660
        %v4663 = vsub.s32 32, %v4662
        %v4664 = vshll.u32 %v4655, %v4662
        %v4665 = vshrl.u32 %v4647, %v4663
        %v4666 = vor.u32 %v4664, %v4665
        %v4667 = vsub.s32 4294967266, %v4662
        %v4668 = vadd.s32 %v4667, 127
        %v4669 = vshll.u32 %v4668, 23
        %v4670 = vor.u32 4788187, %v4669
        %v4671 = vand.u32 2147483647, %v4670
        %v4673 = vcvt.s32.f32 %v4666
        %v4674 = vmul.f32 %v4673, %v4671
        %v4675 = vxor.u32 %v4674, 2147483648
        %v4676 = vsel %vm4555, %v4675, %v4674
        %v4677 = vsub.s32 4, %v4653
        %v4678 = vsel %vm4555, %v4677, %v4653
        %v4679 = vsel %vm4554, %v671, %v4676
        %v4680 = vsel %vm4554, 0, %v4678
        %v4681 = vmul.f32 %v4679, %v4679
        %v4682 = vmul.f32 %v4681, -0.001358992
        %v4683 = vadd.f32 %v4682, 0.041655596
        %v4684 = vmul.f32 %v4681, %v4683
        %v4685 = vadd.f32 %v4684, -0.4999988
        %v4686 = vmul.f32 %v4681, %v4685
        %v4687 = vadd.f32 1.0, %v4686
        %v4688 = vmul.f32 %v4679, %v4679
        %v4689 = vmul.f32 %v4688, -0.00019511016
        %v4690 = vadd.f32 %v4689, 0.008332121
        %v4691 = vmul.f32 %v4688, %v4690
        %v4692 = vadd.f32 %v4691, -0.16666654
        %v4693 = vmul.f32 %v4688, %v4692
        %v4694 = vadd.f32 %v4693, 1.0
        %v4695 = vmul.f32 %v4694, %v4679
        %vm4696 = vweird.f32 %v671
        %v4697 = vadd.s32 %v4680, 3
        %v4698 = vand.u32 %v4697, 3
        %vm4699 = vcmp.lt.s32.totalorder %v4698, 2
        %vm4700 = vcmp.eq.s32.totalorder %v4698, 0
        %v4701 = vxor.u32 %v4695, 2147483648
        %v4702 = vsel %vm4700, %v4687, %v4701
        %vm4703 = vcmp.eq.s32.totalorder %v4698, 2
        %v4704 = vxor.u32 %v4687, 2147483648
        %v4705 = vsel %vm4703, %v4704, %v4695
        %v4706 = vsel %vm4699, %v4702, %v4705
        %v4707 = vsel %vm4696, nan, %v4706
        %v4708 = vand.u32 2147483647, %v672
        %vm4709 = vcmp.le.f32.partialorder %v4708, 0.7853982
        %vm4710 = vcmp.lt.s32.totalorder %v672, 0
        %v4711 = vand.u32 %v672, 2139095040
        %v4712 = vshrl.u32 %v4711, 23
        %v4713 = vsub.s32 %v4712, 127
        %v4714 = vand.u32 2147483647, %v672
        %v4715 = vand.u32 %v4714, 8388607
        %v4716 = vor.u32 %v4715, 8388608
        %v4717 = vsub.s32 0, %v4716
        %v4718 = vadd.s32 %v4713, 1
        %vm4719 = vcmp.gt.s32.totalorder %v4718, 0
        %v4720 = vsel %vm4719, %v4718, 0
        %v4721 = vshrl.u32 %v4720, 5
        %v4722 = vand.u32 %v4720, 31
        %v4723 = vsub.s32 32, %v4722
        %v4724 = vshrl.u32 683565275, %v4723
        %v4725 = vshll.u32 683565275, %v4722
        %v4726 = vshrl.u32 2475754826, %v4723
        %v4727 = vor.u32 %v4725, %v4726
        %v4728 = vshll.u32 2475754826, %v4722
        %v4729 = vshrl.u32 2131351028, %v4723
        %v4730 = vor.u32 %v4728, %v4729
        %v4731 = vshll.u32 2131351028, %v4722
        %v4732 = vshrl.u32 2102212464, %v4723
        %v4733 = vor.u32 %v4731, %v4732
        %v4734 = vshll.u32 2102212464, %v4722
        %v4735 = vshrl.u32 920167782, %v4723
        %v4736 = vor.u32 %v4734, %v4735
        %v4737 = vshll.u32 920167782, %v4722
        %v4738 = vshrl.u32 1326507024, %v4723
        %v4739 = vor.u32 %v4737, %v4738
        %vm4740 = vcmp.lt.s32.totalorder %v4721, 1
        %vm4741 = vcmp.lt.s32.totalorder %v4721, 2
        %vm4742 = vcmp.lt.s32.totalorder %v4721, 3
        %vm4743 = vcmp.lt.s32.totalorder %v4721, 4
        %v4744 = vsel %vm4740, %v4724, %v4727
        %v4745 = vsel %vm4743, %v4733, 2102212464
        %v4746 = vsel %vm4742, %v4730, %v4745
        %v4747 = vsel %vm4741, %v4744, %v4746
        %v4748 = vsel %vm4740, %v4727, %v4730
        %v4749 = vsel %vm4743, %v4736, 920167782
        %v4750 = vsel %vm4742, %v4733, %v4749
        %v4751 = vsel %vm4741, %v4748, %v4750
        %v4752 = vsel %vm4740, %v4730, %v4733
        %v4753 = vsel %vm4743, %v4739, 1326507024
        %v4754 = vsel %vm4742, %v4736, %v4753
        %v4755 = vsel %vm4741, %v4752, %v4754
        %v4756 = vshll.u32 %v4716, 8
        %v4757 = vand.u32 %v4756, 65535
        %v4758 = vshrl.u32 %v4756, 16
        %v4759 = vand.u32 %v4755, 65535
        %v4760 = vshrl.u32 %v4755, 16
        %v4761 = vmul.u32 %v4757, %v4759
        %v4762 = vmul.u32 %v4757, %v4760
        %v4763 = vmul.u32 %v4758, %v4759
        %v4764 = vmul.u32 %v4758, %v4760
        %v4765 = vshll.u32 %v4762, 16
        %v4766 = vshrl.u32 %v4762, 16
        %v4767 = vshll.u32 %v4763, 16
        %v4768 = vshrl.u32 %v4763, 16
        %vm4769 = vc.u32 %v4761, %v4765
        %v4770 = vsel %vm4769, 1, 0
        %v4771 = vadd.s32 %v4761, %v4765
        %v4772 = vadd.s32 %v4764, %v4770
        %vm4773 = vc.u32 %v4771, %v4767
        %v4774 = vsel %vm4773, 1, 0
        %v4775 = vadd.s32 %v4771, %v4767
        %v4776 = vadd.s32 %v4772, %v4774
        %v4777 = vadd.s32 %v4776, %v4766
        %v4778 = vadd.s32 %v4777, %v4768
        %v4779 = vand.u32 %v4756, 65535
        %v4780 = vshrl.u32 %v4756, 16
        %v4781 = vand.u32 %v4751, 65535
        %v4782 = vshrl.u32 %v4751, 16
        %v4783 = vmul.u32 %v4779, %v4781
        %v4784 = vmul.u32 %v4779, %v4782
        %v4785 = vmul.u32 %v4780, %v4781
        %v4786 = vmul.u32 %v4780, %v4782
        %v4787 = vshll.u32 %v4784, 16
        %v4788 = vshrl.u32 %v4784, 16
        %v4789 = vshll.u32 %v4785, 16
        %v4790 = vshrl.u32 %v4785, 16
        %vm4791 = vc.u32 %v4783, %v4787
        %v4792 = vsel %vm4791, 1, 0
        %v4793 = vadd.s32 %v4783, %v4787
        %v4794 = vadd.s32 %v4786, %v4792
        %vm4795 = vc.u32 %v4793, %v4789
        %v4796 = vsel %vm4795, 1, 0
        %v4797 = vadd.s32 %v4793, %v4789
        %v4798 = vadd.s32 %v4794, %v4796
        %v4799 = vadd.s32 %v4798, %v4788
        %v4800 = vadd.s32 %v4799, %v4790
        %v4801 = vmul.u32 %v4756, %v4747
        %v4802 = vadd.s32 %v4778, %v4797
        %vm4803 = vc.u32 %v4778, %v4797
        %v4804 = vadd.s32 %v4800, 1
        %v4805 = vsel %vm4803, %v4804, %v4800
        %v4806 = vadd.s32 %v4801, %v4805
        %v4807 = vadd.s32 %v4806, 536870912
        %v4808 = vshrl.u32 %v4807, 30
        %v4809 = vshll.u32 %v4808, 30
        %v4810 = vsub.s32 %v4806, %v4809
        %vm4811 = vcmp.lt.s32.totalorder %v4810, 0
        %v4812 = vsub.s32 0, %v4810
        %v4813 = vsel %vm4811, %v4812, %v4810
        %v4814 = vclz %v4813
        %v4815 = vsub.s32 %v4814, 2
        %vm4816 = vcmp.gt.s32.totalorder 0, %v4815
        %v4817 = vsel %vm4816, 0, %v4815
        %v4818 = vsub.s32 32, %v4817
        %v4819 = vshll.u32 %v4810, %v4817
        %v4820 = vshrl.u32 %v4802, %v4818
        %v4821 = vor.u32 %v4819, %v4820
        %v4822 = vsub.s32 4294967266, %v4817
        %v4823 = vadd.s32 %v4822, 127
        %v4824 = vshll.u32 %v4823, 23
        %v4825 = vor.u32 4788187, %v4824
        %v4826 = vand.u32 2147483647, %v4825
        %v4828 = vcvt.s32.f32 %v4821
        %v4829 = vmul.f32 %v4828, %v4826
        %v4830 = vxor.u32 %v4829, 2147483648
        %v4831 = vsel %vm4710, %v4830, %v4829
        %v4832 = vsub.s32 4, %v4808
        %v4833 = vsel %vm4710, %v4832, %v4808
        %v4834 = vsel %vm4709, %v672, %v4831
        %v4835 = vsel %vm4709, 0, %v4833
        %v4836 = vmul.f32 %v4834, %v4834
        %v4837 = vmul.f32 %v4836, -0.001358992
        %v4838 = vadd.f32 %v4837, 0.041655596
        %v4839 = vmul.f32 %v4836, %v4838
        %v4840 = vadd.f32 %v4839, -0.4999988
        %v4841 = vmul.f32 %v4836, %v4840
        %v4842 = vadd.f32 1.0, %v4841
        %v4843 = vmul.f32 %v4834, %v4834
        %v4844 = vmul.f32 %v4843, -0.00019511016
        %v4845 = vadd.f32 %v4844, 0.008332121
        %v4846 = vmul.f32 %v4843, %v4845
        %v4847 = vadd.f32 %v4846, -0.16666654
        %v4848 = vmul.f32 %v4843, %v4847
        %v4849 = vadd.f32 %v4848, 1.0
        %v4850 = vmul.f32 %v4849, %v4834
        %vm4851 = vweird.f32 %v672
        %v4852 = vadd.s32 %v4835, 3
        %v4853 = vand.u32 %v4852, 3
        %vm4854 = vcmp.lt.s32.totalorder %v4853, 2
        %vm4855 = vcmp.eq.s32.totalorder %v4853, 0
        %v4856 = vxor.u32 %v4850, 2147483648
        %v4857 = vsel %vm4855, %v4842, %v4856
        %vm4858 = vcmp.eq.s32.totalorder %v4853, 2
        %v4859 = vxor.u32 %v4842, 2147483648
        %v4860 = vsel %vm4858, %v4859, %v4850
        %v4861 = vsel %vm4854, %v4857, %v4860
        %v4862 = vsel %vm4851, nan, %v4861
        %v4863 = vand.u32 2147483647, %v673
        %vm4864 = vcmp.le.f32.partialorder %v4863, 0.7853982
        %vm4865 = vcmp.lt.s32.totalorder %v673, 0
        %v4866 = vand.u32 %v673, 2139095040
        %v4867 = vshrl.u32 %v4866, 23
        %v4868 = vsub.s32 %v4867, 127
        %v4869 = vand.u32 2147483647, %v673
        %v4870 = vand.u32 %v4869, 8388607
        %v4871 = vor.u32 %v4870, 8388608
        %v4872 = vsub.s32 0, %v4871
        %v4873 = vadd.s32 %v4868, 1
        %vm4874 = vcmp.gt.s32.totalorder %v4873, 0
        %v4875 = vsel %vm4874, %v4873, 0
        %v4876 = vshrl.u32 %v4875, 5
        %v4877 = vand.u32 %v4875, 31
        %v4878 = vsub.s32 32, %v4877
        %v4879 = vshrl.u32 683565275, %v4878
        %v4880 = vshll.u32 683565275, %v4877
        %v4881 = vshrl.u32 2475754826, %v4878
        %v4882 = vor.u32 %v4880, %v4881
        %v4883 = vshll.u32 2475754826, %v4877
        %v4884 = vshrl.u32 2131351028, %v4878
        %v4885 = vor.u32 %v4883, %v4884
        %v4886 = vshll.u32 2131351028, %v4877
        %v4887 = vshrl.u32 2102212464, %v4878
        %v4888 = vor.u32 %v4886, %v4887
        %v4889 = vshll.u32 2102212464, %v4877
        %v4890 = vshrl.u32 920167782, %v4878
        %v4891 = vor.u32 %v4889, %v4890
        %v4892 = vshll.u32 920167782, %v4877
        %v4893 = vshrl.u32 1326507024, %v4878
        %v4894 = vor.u32 %v4892, %v4893
        %vm4895 = vcmp.lt.s32.totalorder %v4876, 1
        %vm4896 = vcmp.lt.s32.totalorder %v4876, 2
        %vm4897 = vcmp.lt.s32.totalorder %v4876, 3
        %vm4898 = vcmp.lt.s32.totalorder %v4876, 4
        %v4899 = vsel %vm4895, %v4879, %v4882
        %v4900 = vsel %vm4898, %v4888, 2102212464
        %v4901 = vsel %vm4897, %v4885, %v4900
        %v4902 = vsel %vm4896, %v4899, %v4901
        %v4903 = vsel %vm4895, %v4882, %v4885
        %v4904 = vsel %vm4898, %v4891, 920167782
        %v4905 = vsel %vm4897, %v4888, %v4904
        %v4906 = vsel %vm4896, %v4903, %v4905
        %v4907 = vsel %vm4895, %v4885, %v4888
        %v4908 = vsel %vm4898, %v4894, 1326507024
        %v4909 = vsel %vm4897, %v4891, %v4908
        %v4910 = vsel %vm4896, %v4907, %v4909
        %v4911 = vshll.u32 %v4871, 8
        %v4912 = vand.u32 %v4911, 65535
        %v4913 = vshrl.u32 %v4911, 16
        %v4914 = vand.u32 %v4910, 65535
        %v4915 = vshrl.u32 %v4910, 16
        %v4916 = vmul.u32 %v4912, %v4914
        %v4917 = vmul.u32 %v4912, %v4915
        %v4918 = vmul.u32 %v4913, %v4914
        %v4919 = vmul.u32 %v4913, %v4915
        %v4920 = vshll.u32 %v4917, 16
        %v4921 = vshrl.u32 %v4917, 16
        %v4922 = vshll.u32 %v4918, 16
        %v4923 = vshrl.u32 %v4918, 16
        %vm4924 = vc.u32 %v4916, %v4920
        %v4925 = vsel %vm4924, 1, 0
        %v4926 = vadd.s32 %v4916, %v4920
        %v4927 = vadd.s32 %v4919, %v4925
        %vm4928 = vc.u32 %v4926, %v4922
        %v4929 = vsel %vm4928, 1, 0
        %v4930 = vadd.s32 %v4926, %v4922
        %v4931 = vadd.s32 %v4927, %v4929
        %v4932 = vadd.s32 %v4931, %v4921
        %v4933 = vadd.s32 %v4932, %v4923
        %v4934 = vand.u32 %v4911, 65535
        %v4935 = vshrl.u32 %v4911, 16
        %v4936 = vand.u32 %v4906, 65535
        %v4937 = vshrl.u32 %v4906, 16
        %v4938 = vmul.u32 %v4934, %v4936
        %v4939 = vmul.u32 %v4934, %v4937
        %v4940 = vmul.u32 %v4935, %v4936
        %v4941 = vmul.u32 %v4935, %v4937
        %v4942 = vshll.u32 %v4939, 16
        %v4943 = vshrl.u32 %v4939, 16
        %v4944 = vshll.u32 %v4940, 16
        %v4945 = vshrl.u32 %v4940, 16
        %vm4946 = vc.u32 %v4938, %v4942
        %v4947 = vsel %vm4946, 1, 0
        %v4948 = vadd.s32 %v4938, %v4942
        %v4949 = vadd.s32 %v4941, %v4947
        %vm4950 = vc.u32 %v4948, %v4944
        %v4951 = vsel %vm4950, 1, 0
        %v4952 = vadd.s32 %v4948, %v4944
        %v4953 = vadd.s32 %v4949, %v4951
        %v4954 = vadd.s32 %v4953, %v4943
        %v4955 = vadd.s32 %v4954, %v4945
        %v4956 = vmul.u32 %v4911, %v4902
        %v4957 = vadd.s32 %v4933, %v4952
        %vm4958 = vc.u32 %v4933, %v4952
        %v4959 = vadd.s32 %v4955, 1
        %v4960 = vsel %vm4958, %v4959, %v4955
        %v4961 = vadd.s32 %v4956, %v4960
        %v4962 = vadd.s32 %v4961, 536870912
        %v4963 = vshrl.u32 %v4962, 30
        %v4964 = vshll.u32 %v4963, 30
        %v4965 = vsub.s32 %v4961, %v4964
        %vm4966 = vcmp.lt.s32.totalorder %v4965, 0
        %v4967 = vsub.s32 0, %v4965
        %v4968 = vsel %vm4966, %v4967, %v4965
        %v4969 = vclz %v4968
        %v4970 = vsub.s32 %v4969, 2
        %vm4971 = vcmp.gt.s32.totalorder 0, %v4970
        %v4972 = vsel %vm4971, 0, %v4970
        %v4973 = vsub.s32 32, %v4972
        %v4974 = vshll.u32 %v4965, %v4972
        %v4975 = vshrl.u32 %v4957, %v4973
        %v4976 = vor.u32 %v4974, %v4975
        %v4977 = vsub.s32 4294967266, %v4972
        %v4978 = vadd.s32 %v4977, 127
        %v4979 = vshll.u32 %v4978, 23
        %v4980 = vor.u32 4788187, %v4979
        %v4981 = vand.u32 2147483647, %v4980
        %v4983 = vcvt.s32.f32 %v4976
        %v4984 = vmul.f32 %v4983, %v4981
        %v4985 = vxor.u32 %v4984, 2147483648
        %v4986 = vsel %vm4865, %v4985, %v4984
        %v4987 = vsub.s32 4, %v4963
        %v4988 = vsel %vm4865, %v4987, %v4963
        %v4989 = vsel %vm4864, %v673, %v4986
        %v4990 = vsel %vm4864, 0, %v4988
        %v4991 = vmul.f32 %v4989, %v4989
        %v4992 = vmul.f32 %v4991, -0.001358992
        %v4993 = vadd.f32 %v4992, 0.041655596
        %v4994 = vmul.f32 %v4991, %v4993
        %v4995 = vadd.f32 %v4994, -0.4999988
        %v4996 = vmul.f32 %v4991, %v4995
        %v4997 = vadd.f32 1.0, %v4996
        %v4998 = vmul.f32 %v4989, %v4989
        %v4999 = vmul.f32 %v4998, -0.00019511016
        %v5000 = vadd.f32 %v4999, 0.008332121
        %v5001 = vmul.f32 %v4998, %v5000
        %v5002 = vadd.f32 %v5001, -0.16666654
        %v5003 = vmul.f32 %v4998, %v5002
        %v5004 = vadd.f32 %v5003, 1.0
        %v5005 = vmul.f32 %v5004, %v4989
        %vm5006 = vweird.f32 %v673
        %v5007 = vadd.s32 %v4990, 3
        %v5008 = vand.u32 %v5007, 3
        %vm5009 = vcmp.lt.s32.totalorder %v5008, 2
        %vm5010 = vcmp.eq.s32.totalorder %v5008, 0
        %v5011 = vxor.u32 %v5005, 2147483648
        %v5012 = vsel %vm5010, %v4997, %v5011
        %vm5013 = vcmp.eq.s32.totalorder %v5008, 2
        %v5014 = vxor.u32 %v4997, 2147483648
        %v5015 = vsel %vm5013, %v5014, %v5005
        %v5016 = vsel %vm5009, %v5012, %v5015
        %v5017 = vsel %vm5006, nan, %v5016
        %v5018 = vand.u32 2147483647, %v674
        %vm5019 = vcmp.le.f32.partialorder %v5018, 0.7853982
        %vm5020 = vcmp.lt.s32.totalorder %v674, 0
        %v5021 = vand.u32 %v674, 2139095040
        %v5022 = vshrl.u32 %v5021, 23
        %v5023 = vsub.s32 %v5022, 127
        %v5024 = vand.u32 2147483647, %v674
        %v5025 = vand.u32 %v5024, 8388607
        %v5026 = vor.u32 %v5025, 8388608
        %v5027 = vsub.s32 0, %v5026
        %v5028 = vadd.s32 %v5023, 1
        %vm5029 = vcmp.gt.s32.totalorder %v5028, 0
        %v5030 = vsel %vm5029, %v5028, 0
        %v5031 = vshrl.u32 %v5030, 5
        %v5032 = vand.u32 %v5030, 31
        %v5033 = vsub.s32 32, %v5032
        %v5034 = vshrl.u32 683565275, %v5033
        %v5035 = vshll.u32 683565275, %v5032
        %v5036 = vshrl.u32 2475754826, %v5033
        %v5037 = vor.u32 %v5035, %v5036
        %v5038 = vshll.u32 2475754826, %v5032
        %v5039 = vshrl.u32 2131351028, %v5033
        %v5040 = vor.u32 %v5038, %v5039
        %v5041 = vshll.u32 2131351028, %v5032
        %v5042 = vshrl.u32 2102212464, %v5033
        %v5043 = vor.u32 %v5041, %v5042
        %v5044 = vshll.u32 2102212464, %v5032
        %v5045 = vshrl.u32 920167782, %v5033
        %v5046 = vor.u32 %v5044, %v5045
        %v5047 = vshll.u32 920167782, %v5032
        %v5048 = vshrl.u32 1326507024, %v5033
        %v5049 = vor.u32 %v5047, %v5048
        %vm5050 = vcmp.lt.s32.totalorder %v5031, 1
        %vm5051 = vcmp.lt.s32.totalorder %v5031, 2
        %vm5052 = vcmp.lt.s32.totalorder %v5031, 3
        %vm5053 = vcmp.lt.s32.totalorder %v5031, 4
        %v5054 = vsel %vm5050, %v5034, %v5037
        %v5055 = vsel %vm5053, %v5043, 2102212464
        %v5056 = vsel %vm5052, %v5040, %v5055
        %v5057 = vsel %vm5051, %v5054, %v5056
        %v5058 = vsel %vm5050, %v5037, %v5040
        %v5059 = vsel %vm5053, %v5046, 920167782
        %v5060 = vsel %vm5052, %v5043, %v5059
        %v5061 = vsel %vm5051, %v5058, %v5060
        %v5062 = vsel %vm5050, %v5040, %v5043
        %v5063 = vsel %vm5053, %v5049, 1326507024
        %v5064 = vsel %vm5052, %v5046, %v5063
        %v5065 = vsel %vm5051, %v5062, %v5064
        %v5066 = vshll.u32 %v5026, 8
        %v5067 = vand.u32 %v5066, 65535
        %v5068 = vshrl.u32 %v5066, 16
        %v5069 = vand.u32 %v5065, 65535
        %v5070 = vshrl.u32 %v5065, 16
        %v5071 = vmul.u32 %v5067, %v5069
        %v5072 = vmul.u32 %v5067, %v5070
        %v5073 = vmul.u32 %v5068, %v5069
        %v5074 = vmul.u32 %v5068, %v5070
        %v5075 = vshll.u32 %v5072, 16
        %v5076 = vshrl.u32 %v5072, 16
        %v5077 = vshll.u32 %v5073, 16
        %v5078 = vshrl.u32 %v5073, 16
        %vm5079 = vc.u32 %v5071, %v5075
        %v5080 = vsel %vm5079, 1, 0
        %v5081 = vadd.s32 %v5071, %v5075
        %v5082 = vadd.s32 %v5074, %v5080
        %vm5083 = vc.u32 %v5081, %v5077
        %v5084 = vsel %vm5083, 1, 0
        %v5085 = vadd.s32 %v5081, %v5077
        %v5086 = vadd.s32 %v5082, %v5084
        %v5087 = vadd.s32 %v5086, %v5076
        %v5088 = vadd.s32 %v5087, %v5078
        %v5089 = vand.u32 %v5066, 65535
        %v5090 = vshrl.u32 %v5066, 16
        %v5091 = vand.u32 %v5061, 65535
        %v5092 = vshrl.u32 %v5061, 16
        %v5093 = vmul.u32 %v5089, %v5091
        %v5094 = vmul.u32 %v5089, %v5092
        %v5095 = vmul.u32 %v5090, %v5091
        %v5096 = vmul.u32 %v5090, %v5092
        %v5097 = vshll.u32 %v5094, 16
        %v5098 = vshrl.u32 %v5094, 16
        %v5099 = vshll.u32 %v5095, 16
        %v5100 = vshrl.u32 %v5095, 16
        %vm5101 = vc.u32 %v5093, %v5097
        %v5102 = vsel %vm5101, 1, 0
        %v5103 = vadd.s32 %v5093, %v5097
        %v5104 = vadd.s32 %v5096, %v5102
        %vm5105 = vc.u32 %v5103, %v5099
        %v5106 = vsel %vm5105, 1, 0
        %v5107 = vadd.s32 %v5103, %v5099
        %v5108 = vadd.s32 %v5104, %v5106
        %v5109 = vadd.s32 %v5108, %v5098
        %v5110 = vadd.s32 %v5109, %v5100
        %v5111 = vmul.u32 %v5066, %v5057
        %v5112 = vadd.s32 %v5088, %v5107
        %vm5113 = vc.u32 %v5088, %v5107
        %v5114 = vadd.s32 %v5110, 1
        %v5115 = vsel %vm5113, %v5114, %v5110
        %v5116 = vadd.s32 %v5111, %v5115
        %v5117 = vadd.s32 %v5116, 536870912
        %v5118 = vshrl.u32 %v5117, 30
        %v5119 = vshll.u32 %v5118, 30
        %v5120 = vsub.s32 %v5116, %v5119
        %vm5121 = vcmp.lt.s32.totalorder %v5120, 0
        %v5122 = vsub.s32 0, %v5120
        %v5123 = vsel %vm5121, %v5122, %v5120
        %v5124 = vclz %v5123
        %v5125 = vsub.s32 %v5124, 2
        %vm5126 = vcmp.gt.s32.totalorder 0, %v5125
        %v5127 = vsel %vm5126, 0, %v5125
        %v5128 = vsub.s32 32, %v5127
        %v5129 = vshll.u32 %v5120, %v5127
        %v5130 = vshrl.u32 %v5112, %v5128
        %v5131 = vor.u32 %v5129, %v5130
        %v5132 = vsub.s32 4294967266, %v5127
        %v5133 = vadd.s32 %v5132, 127
        %v5134 = vshll.u32 %v5133, 23
        %v5135 = vor.u32 4788187, %v5134
        %v5136 = vand.u32 2147483647, %v5135
        %v5138 = vcvt.s32.f32 %v5131
        %v5139 = vmul.f32 %v5138, %v5136
        %v5140 = vxor.u32 %v5139, 2147483648
        %v5141 = vsel %vm5020, %v5140, %v5139
        %v5142 = vsub.s32 4, %v5118
        %v5143 = vsel %vm5020, %v5142, %v5118
        %v5144 = vsel %vm5019, %v674, %v5141
        %v5145 = vsel %vm5019, 0, %v5143
        %v5146 = vmul.f32 %v5144, %v5144
        %v5147 = vmul.f32 %v5146, -0.001358992
        %v5148 = vadd.f32 %v5147, 0.041655596
        %v5149 = vmul.f32 %v5146, %v5148
        %v5150 = vadd.f32 %v5149, -0.4999988
        %v5151 = vmul.f32 %v5146, %v5150
        %v5152 = vadd.f32 1.0, %v5151
        %v5153 = vmul.f32 %v5144, %v5144
        %v5154 = vmul.f32 %v5153, -0.00019511016
        %v5155 = vadd.f32 %v5154, 0.008332121
        %v5156 = vmul.f32 %v5153, %v5155
        %v5157 = vadd.f32 %v5156, -0.16666654
        %v5158 = vmul.f32 %v5153, %v5157
        %v5159 = vadd.f32 %v5158, 1.0
        %v5160 = vmul.f32 %v5159, %v5144
        %vm5161 = vweird.f32 %v674
        %v5162 = vadd.s32 %v5145, 3
        %v5163 = vand.u32 %v5162, 3
        %vm5164 = vcmp.lt.s32.totalorder %v5163, 2
        %vm5165 = vcmp.eq.s32.totalorder %v5163, 0
        %v5166 = vxor.u32 %v5160, 2147483648
        %v5167 = vsel %vm5165, %v5152, %v5166
        %vm5168 = vcmp.eq.s32.totalorder %v5163, 2
        %v5169 = vxor.u32 %v5152, 2147483648
        %v5170 = vsel %vm5168, %v5169, %v5160
        %v5171 = vsel %vm5164, %v5167, %v5170
        %v5172 = vsel %vm5161, nan, %v5171
        %v5173 = vand.u32 2147483647, %v675
        %vm5174 = vcmp.le.f32.partialorder %v5173, 0.7853982
        %vm5175 = vcmp.lt.s32.totalorder %v675, 0
        %v5176 = vand.u32 %v675, 2139095040
        %v5177 = vshrl.u32 %v5176, 23
        %v5178 = vsub.s32 %v5177, 127
        %v5179 = vand.u32 2147483647, %v675
        %v5180 = vand.u32 %v5179, 8388607
        %v5181 = vor.u32 %v5180, 8388608
        %v5182 = vsub.s32 0, %v5181
        %v5183 = vadd.s32 %v5178, 1
        %vm5184 = vcmp.gt.s32.totalorder %v5183, 0
        %v5185 = vsel %vm5184, %v5183, 0
        %v5186 = vshrl.u32 %v5185, 5
        %v5187 = vand.u32 %v5185, 31
        %v5188 = vsub.s32 32, %v5187
        %v5189 = vshrl.u32 683565275, %v5188
        %v5190 = vshll.u32 683565275, %v5187
        %v5191 = vshrl.u32 2475754826, %v5188
        %v5192 = vor.u32 %v5190, %v5191
        %v5193 = vshll.u32 2475754826, %v5187
        %v5194 = vshrl.u32 2131351028, %v5188
        %v5195 = vor.u32 %v5193, %v5194
        %v5196 = vshll.u32 2131351028, %v5187
        %v5197 = vshrl.u32 2102212464, %v5188
        %v5198 = vor.u32 %v5196, %v5197
        %v5199 = vshll.u32 2102212464, %v5187
        %v5200 = vshrl.u32 920167782, %v5188
        %v5201 = vor.u32 %v5199, %v5200
        %v5202 = vshll.u32 920167782, %v5187
        %v5203 = vshrl.u32 1326507024, %v5188
        %v5204 = vor.u32 %v5202, %v5203
        %vm5205 = vcmp.lt.s32.totalorder %v5186, 1
        %vm5206 = vcmp.lt.s32.totalorder %v5186, 2
        %vm5207 = vcmp.lt.s32.totalorder %v5186, 3
        %vm5208 = vcmp.lt.s32.totalorder %v5186, 4
        %v5209 = vsel %vm5205, %v5189, %v5192
        %v5210 = vsel %vm5208, %v5198, 2102212464
        %v5211 = vsel %vm5207, %v5195, %v5210
        %v5212 = vsel %vm5206, %v5209, %v5211
        %v5213 = vsel %vm5205, %v5192, %v5195
        %v5214 = vsel %vm5208, %v5201, 920167782
        %v5215 = vsel %vm5207, %v5198, %v5214
        %v5216 = vsel %vm5206, %v5213, %v5215
        %v5217 = vsel %vm5205, %v5195, %v5198
        %v5218 = vsel %vm5208, %v5204, 1326507024
        %v5219 = vsel %vm5207, %v5201, %v5218
        %v5220 = vsel %vm5206, %v5217, %v5219
        %v5221 = vshll.u32 %v5181, 8
        %v5222 = vand.u32 %v5221, 65535
        %v5223 = vshrl.u32 %v5221, 16
        %v5224 = vand.u32 %v5220, 65535
        %v5225 = vshrl.u32 %v5220, 16
        %v5226 = vmul.u32 %v5222, %v5224
        %v5227 = vmul.u32 %v5222, %v5225
        %v5228 = vmul.u32 %v5223, %v5224
        %v5229 = vmul.u32 %v5223, %v5225
        %v5230 = vshll.u32 %v5227, 16
        %v5231 = vshrl.u32 %v5227, 16
        %v5232 = vshll.u32 %v5228, 16
        %v5233 = vshrl.u32 %v5228, 16
        %vm5234 = vc.u32 %v5226, %v5230
        %v5235 = vsel %vm5234, 1, 0
        %v5236 = vadd.s32 %v5226, %v5230
        %v5237 = vadd.s32 %v5229, %v5235
        %vm5238 = vc.u32 %v5236, %v5232
        %v5239 = vsel %vm5238, 1, 0
        %v5240 = vadd.s32 %v5236, %v5232
        %v5241 = vadd.s32 %v5237, %v5239
        %v5242 = vadd.s32 %v5241, %v5231
        %v5243 = vadd.s32 %v5242, %v5233
        %v5244 = vand.u32 %v5221, 65535
        %v5245 = vshrl.u32 %v5221, 16
        %v5246 = vand.u32 %v5216, 65535
        %v5247 = vshrl.u32 %v5216, 16
        %v5248 = vmul.u32 %v5244, %v5246
        %v5249 = vmul.u32 %v5244, %v5247
        %v5250 = vmul.u32 %v5245, %v5246
        %v5251 = vmul.u32 %v5245, %v5247
        %v5252 = vshll.u32 %v5249, 16
        %v5253 = vshrl.u32 %v5249, 16
        %v5254 = vshll.u32 %v5250, 16
        %v5255 = vshrl.u32 %v5250, 16
        %vm5256 = vc.u32 %v5248, %v5252
        %v5257 = vsel %vm5256, 1, 0
        %v5258 = vadd.s32 %v5248, %v5252
        %v5259 = vadd.s32 %v5251, %v5257
        %vm5260 = vc.u32 %v5258, %v5254
        %v5261 = vsel %vm5260, 1, 0
        %v5262 = vadd.s32 %v5258, %v5254
        %v5263 = vadd.s32 %v5259, %v5261
        %v5264 = vadd.s32 %v5263, %v5253
        %v5265 = vadd.s32 %v5264, %v5255
        %v5266 = vmul.u32 %v5221, %v5212
        %v5267 = vadd.s32 %v5243, %v5262
        %vm5268 = vc.u32 %v5243, %v5262
        %v5269 = vadd.s32 %v5265, 1
        %v5270 = vsel %vm5268, %v5269, %v5265
        %v5271 = vadd.s32 %v5266, %v5270
        %v5272 = vadd.s32 %v5271, 536870912
        %v5273 = vshrl.u32 %v5272, 30
        %v5274 = vshll.u32 %v5273, 30
        %v5275 = vsub.s32 %v5271, %v5274
        %vm5276 = vcmp.lt.s32.totalorder %v5275, 0
        %v5277 = vsub.s32 0, %v5275
        %v5278 = vsel %vm5276, %v5277, %v5275
        %v5279 = vclz %v5278
        %v5280 = vsub.s32 %v5279, 2
        %vm5281 = vcmp.gt.s32.totalorder 0, %v5280
        %v5282 = vsel %vm5281, 0, %v5280
        %v5283 = vsub.s32 32, %v5282
        %v5284 = vshll.u32 %v5275, %v5282
        %v5285 = vshrl.u32 %v5267, %v5283
        %v5286 = vor.u32 %v5284, %v5285
        %v5287 = vsub.s32 4294967266, %v5282
        %v5288 = vadd.s32 %v5287, 127
        %v5289 = vshll.u32 %v5288, 23
        %v5290 = vor.u32 4788187, %v5289
        %v5291 = vand.u32 2147483647, %v5290
        %v5293 = vcvt.s32.f32 %v5286
        %v5294 = vmul.f32 %v5293, %v5291
        %v5295 = vxor.u32 %v5294, 2147483648
        %v5296 = vsel %vm5175, %v5295, %v5294
        %v5297 = vsub.s32 4, %v5273
        %v5298 = vsel %vm5175, %v5297, %v5273
        %v5299 = vsel %vm5174, %v675, %v5296
        %v5300 = vsel %vm5174, 0, %v5298
        %v5301 = vmul.f32 %v5299, %v5299
        %v5302 = vmul.f32 %v5301, -0.001358992
        %v5303 = vadd.f32 %v5302, 0.041655596
        %v5304 = vmul.f32 %v5301, %v5303
        %v5305 = vadd.f32 %v5304, -0.4999988
        %v5306 = vmul.f32 %v5301, %v5305
        %v5307 = vadd.f32 1.0, %v5306
        %v5308 = vmul.f32 %v5299, %v5299
        %v5309 = vmul.f32 %v5308, -0.00019511016
        %v5310 = vadd.f32 %v5309, 0.008332121
        %v5311 = vmul.f32 %v5308, %v5310
        %v5312 = vadd.f32 %v5311, -0.16666654
        %v5313 = vmul.f32 %v5308, %v5312
        %v5314 = vadd.f32 %v5313, 1.0
        %v5315 = vmul.f32 %v5314, %v5299
        %vm5316 = vweird.f32 %v675
        %v5317 = vadd.s32 %v5300, 3
        %v5318 = vand.u32 %v5317, 3
        %vm5319 = vcmp.lt.s32.totalorder %v5318, 2
        %vm5320 = vcmp.eq.s32.totalorder %v5318, 0
        %v5321 = vxor.u32 %v5315, 2147483648
        %v5322 = vsel %vm5320, %v5307, %v5321
        %vm5323 = vcmp.eq.s32.totalorder %v5318, 2
        %v5324 = vxor.u32 %v5307, 2147483648
        %v5325 = vsel %vm5323, %v5324, %v5315
        %v5326 = vsel %vm5319, %v5322, %v5325
        %v5327 = vsel %vm5316, nan, %v5326
        %v5328 = vand.u32 2147483647, %v676
        %vm5329 = vcmp.le.f32.partialorder %v5328, 0.7853982
        %vm5330 = vcmp.lt.s32.totalorder %v676, 0
        %v5331 = vand.u32 %v676, 2139095040
        %v5332 = vshrl.u32 %v5331, 23
        %v5333 = vsub.s32 %v5332, 127
        %v5334 = vand.u32 2147483647, %v676
        %v5335 = vand.u32 %v5334, 8388607
        %v5336 = vor.u32 %v5335, 8388608
        %v5337 = vsub.s32 0, %v5336
        %v5338 = vadd.s32 %v5333, 1
        %vm5339 = vcmp.gt.s32.totalorder %v5338, 0
        %v5340 = vsel %vm5339, %v5338, 0
        %v5341 = vshrl.u32 %v5340, 5
        %v5342 = vand.u32 %v5340, 31
        %v5343 = vsub.s32 32, %v5342
        %v5344 = vshrl.u32 683565275, %v5343
        %v5345 = vshll.u32 683565275, %v5342
        %v5346 = vshrl.u32 2475754826, %v5343
        %v5347 = vor.u32 %v5345, %v5346
        %v5348 = vshll.u32 2475754826, %v5342
        %v5349 = vshrl.u32 2131351028, %v5343
        %v5350 = vor.u32 %v5348, %v5349
        %v5351 = vshll.u32 2131351028, %v5342
        %v5352 = vshrl.u32 2102212464, %v5343
        %v5353 = vor.u32 %v5351, %v5352
        %v5354 = vshll.u32 2102212464, %v5342
        %v5355 = vshrl.u32 920167782, %v5343
        %v5356 = vor.u32 %v5354, %v5355
        %v5357 = vshll.u32 920167782, %v5342
        %v5358 = vshrl.u32 1326507024, %v5343
        %v5359 = vor.u32 %v5357, %v5358
        %vm5360 = vcmp.lt.s32.totalorder %v5341, 1
        %vm5361 = vcmp.lt.s32.totalorder %v5341, 2
        %vm5362 = vcmp.lt.s32.totalorder %v5341, 3
        %vm5363 = vcmp.lt.s32.totalorder %v5341, 4
        %v5364 = vsel %vm5360, %v5344, %v5347
        %v5365 = vsel %vm5363, %v5353, 2102212464
        %v5366 = vsel %vm5362, %v5350, %v5365
        %v5367 = vsel %vm5361, %v5364, %v5366
        %v5368 = vsel %vm5360, %v5347, %v5350
        %v5369 = vsel %vm5363, %v5356, 920167782
        %v5370 = vsel %vm5362, %v5353, %v5369
        %v5371 = vsel %vm5361, %v5368, %v5370
        %v5372 = vsel %vm5360, %v5350, %v5353
        %v5373 = vsel %vm5363, %v5359, 1326507024
        %v5374 = vsel %vm5362, %v5356, %v5373
        %v5375 = vsel %vm5361, %v5372, %v5374
        %v5376 = vshll.u32 %v5336, 8
        %v5377 = vand.u32 %v5376, 65535
        %v5378 = vshrl.u32 %v5376, 16
        %v5379 = vand.u32 %v5375, 65535
        %v5380 = vshrl.u32 %v5375, 16
        %v5381 = vmul.u32 %v5377, %v5379
        %v5382 = vmul.u32 %v5377, %v5380
        %v5383 = vmul.u32 %v5378, %v5379
        %v5384 = vmul.u32 %v5378, %v5380
        %v5385 = vshll.u32 %v5382, 16
        %v5386 = vshrl.u32 %v5382, 16
        %v5387 = vshll.u32 %v5383, 16
        %v5388 = vshrl.u32 %v5383, 16
        %vm5389 = vc.u32 %v5381, %v5385
        %v5390 = vsel %vm5389, 1, 0
        %v5391 = vadd.s32 %v5381, %v5385
        %v5392 = vadd.s32 %v5384, %v5390
        %vm5393 = vc.u32 %v5391, %v5387
        %v5394 = vsel %vm5393, 1, 0
        %v5395 = vadd.s32 %v5391, %v5387
        %v5396 = vadd.s32 %v5392, %v5394
        %v5397 = vadd.s32 %v5396, %v5386
        %v5398 = vadd.s32 %v5397, %v5388
        %v5399 = vand.u32 %v5376, 65535
        %v5400 = vshrl.u32 %v5376, 16
        %v5401 = vand.u32 %v5371, 65535
        %v5402 = vshrl.u32 %v5371, 16
        %v5403 = vmul.u32 %v5399, %v5401
        %v5404 = vmul.u32 %v5399, %v5402
        %v5405 = vmul.u32 %v5400, %v5401
        %v5406 = vmul.u32 %v5400, %v5402
        %v5407 = vshll.u32 %v5404, 16
        %v5408 = vshrl.u32 %v5404, 16
        %v5409 = vshll.u32 %v5405, 16
        %v5410 = vshrl.u32 %v5405, 16
        %vm5411 = vc.u32 %v5403, %v5407
        %v5412 = vsel %vm5411, 1, 0
        %v5413 = vadd.s32 %v5403, %v5407
        %v5414 = vadd.s32 %v5406, %v5412
        %vm5415 = vc.u32 %v5413, %v5409
        %v5416 = vsel %vm5415, 1, 0
        %v5417 = vadd.s32 %v5413, %v5409
        %v5418 = vadd.s32 %v5414, %v5416
        %v5419 = vadd.s32 %v5418, %v5408
        %v5420 = vadd.s32 %v5419, %v5410
        %v5421 = vmul.u32 %v5376, %v5367
        %v5422 = vadd.s32 %v5398, %v5417
        %vm5423 = vc.u32 %v5398, %v5417
        %v5424 = vadd.s32 %v5420, 1
        %v5425 = vsel %vm5423, %v5424, %v5420
        %v5426 = vadd.s32 %v5421, %v5425
        %v5427 = vadd.s32 %v5426, 536870912
        %v5428 = vshrl.u32 %v5427, 30
        %v5429 = vshll.u32 %v5428, 30
        %v5430 = vsub.s32 %v5426, %v5429
        %vm5431 = vcmp.lt.s32.totalorder %v5430, 0
        %v5432 = vsub.s32 0, %v5430
        %v5433 = vsel %vm5431, %v5432, %v5430
        %v5434 = vclz %v5433
        %v5435 = vsub.s32 %v5434, 2
        %vm5436 = vcmp.gt.s32.totalorder 0, %v5435
        %v5437 = vsel %vm5436, 0, %v5435
        %v5438 = vsub.s32 32, %v5437
        %v5439 = vshll.u32 %v5430, %v5437
        %v5440 = vshrl.u32 %v5422, %v5438
        %v5441 = vor.u32 %v5439, %v5440
        %v5442 = vsub.s32 4294967266, %v5437
        %v5443 = vadd.s32 %v5442, 127
        %v5444 = vshll.u32 %v5443, 23
        %v5445 = vor.u32 4788187, %v5444
        %v5446 = vand.u32 2147483647, %v5445
        %v5448 = vcvt.s32.f32 %v5441
        %v5449 = vmul.f32 %v5448, %v5446
        %v5450 = vxor.u32 %v5449, 2147483648
        %v5451 = vsel %vm5330, %v5450, %v5449
        %v5452 = vsub.s32 4, %v5428
        %v5453 = vsel %vm5330, %v5452, %v5428
        %v5454 = vsel %vm5329, %v676, %v5451
        %v5455 = vsel %vm5329, 0, %v5453
        %v5456 = vmul.f32 %v5454, %v5454
        %v5457 = vmul.f32 %v5456, -0.001358992
        %v5458 = vadd.f32 %v5457, 0.041655596
        %v5459 = vmul.f32 %v5456, %v5458
        %v5460 = vadd.f32 %v5459, -0.4999988
        %v5461 = vmul.f32 %v5456, %v5460
        %v5462 = vadd.f32 1.0, %v5461
        %v5463 = vmul.f32 %v5454, %v5454
        %v5464 = vmul.f32 %v5463, -0.00019511016
        %v5465 = vadd.f32 %v5464, 0.008332121
        %v5466 = vmul.f32 %v5463, %v5465
        %v5467 = vadd.f32 %v5466, -0.16666654
        %v5468 = vmul.f32 %v5463, %v5467
        %v5469 = vadd.f32 %v5468, 1.0
        %v5470 = vmul.f32 %v5469, %v5454
        %vm5471 = vweird.f32 %v676
        %v5472 = vadd.s32 %v5455, 3
        %v5473 = vand.u32 %v5472, 3
        %vm5474 = vcmp.lt.s32.totalorder %v5473, 2
        %vm5475 = vcmp.eq.s32.totalorder %v5473, 0
        %v5476 = vxor.u32 %v5470, 2147483648
        %v5477 = vsel %vm5475, %v5462, %v5476
        %vm5478 = vcmp.eq.s32.totalorder %v5473, 2
        %v5479 = vxor.u32 %v5462, 2147483648
        %v5480 = vsel %vm5478, %v5479, %v5470
        %v5481 = vsel %vm5474, %v5477, %v5480
        %v5482 = vsel %vm5471, nan, %v5481
        %v5483 = vand.u32 2147483647, %v677
        %vm5484 = vcmp.le.f32.partialorder %v5483, 0.7853982
        %vm5485 = vcmp.lt.s32.totalorder %v677, 0
        %v5486 = vand.u32 %v677, 2139095040
        %v5487 = vshrl.u32 %v5486, 23
        %v5488 = vsub.s32 %v5487, 127
        %v5489 = vand.u32 2147483647, %v677
        %v5490 = vand.u32 %v5489, 8388607
        %v5491 = vor.u32 %v5490, 8388608
        %v5492 = vsub.s32 0, %v5491
        %v5493 = vadd.s32 %v5488, 1
        %vm5494 = vcmp.gt.s32.totalorder %v5493, 0
        %v5495 = vsel %vm5494, %v5493, 0
        %v5496 = vshrl.u32 %v5495, 5
        %v5497 = vand.u32 %v5495, 31
        %v5498 = vsub.s32 32, %v5497
        %v5499 = vshrl.u32 683565275, %v5498
        %v5500 = vshll.u32 683565275, %v5497
        %v5501 = vshrl.u32 2475754826, %v5498
        %v5502 = vor.u32 %v5500, %v5501
        %v5503 = vshll.u32 2475754826, %v5497
        %v5504 = vshrl.u32 2131351028, %v5498
        %v5505 = vor.u32 %v5503, %v5504
        %v5506 = vshll.u32 2131351028, %v5497
        %v5507 = vshrl.u32 2102212464, %v5498
        %v5508 = vor.u32 %v5506, %v5507
        %v5509 = vshll.u32 2102212464, %v5497
        %v5510 = vshrl.u32 920167782, %v5498
        %v5511 = vor.u32 %v5509, %v5510
        %v5512 = vshll.u32 920167782, %v5497
        %v5513 = vshrl.u32 1326507024, %v5498
        %v5514 = vor.u32 %v5512, %v5513
        %vm5515 = vcmp.lt.s32.totalorder %v5496, 1
        %vm5516 = vcmp.lt.s32.totalorder %v5496, 2
        %vm5517 = vcmp.lt.s32.totalorder %v5496, 3
        %vm5518 = vcmp.lt.s32.totalorder %v5496, 4
        %v5519 = vsel %vm5515, %v5499, %v5502
        %v5520 = vsel %vm5518, %v5508, 2102212464
        %v5521 = vsel %vm5517, %v5505, %v5520
        %v5522 = vsel %vm5516, %v5519, %v5521
        %v5523 = vsel %vm5515, %v5502, %v5505
        %v5524 = vsel %vm5518, %v5511, 920167782
        %v5525 = vsel %vm5517, %v5508, %v5524
        %v5526 = vsel %vm5516, %v5523, %v5525
        %v5527 = vsel %vm5515, %v5505, %v5508
        %v5528 = vsel %vm5518, %v5514, 1326507024
        %v5529 = vsel %vm5517, %v5511, %v5528
        %v5530 = vsel %vm5516, %v5527, %v5529
        %v5531 = vshll.u32 %v5491, 8
        %v5532 = vand.u32 %v5531, 65535
        %v5533 = vshrl.u32 %v5531, 16
        %v5534 = vand.u32 %v5530, 65535
        %v5535 = vshrl.u32 %v5530, 16
        %v5536 = vmul.u32 %v5532, %v5534
        %v5537 = vmul.u32 %v5532, %v5535
        %v5538 = vmul.u32 %v5533, %v5534
        %v5539 = vmul.u32 %v5533, %v5535
        %v5540 = vshll.u32 %v5537, 16
        %v5541 = vshrl.u32 %v5537, 16
        %v5542 = vshll.u32 %v5538, 16
        %v5543 = vshrl.u32 %v5538, 16
        %vm5544 = vc.u32 %v5536, %v5540
        %v5545 = vsel %vm5544, 1, 0
        %v5546 = vadd.s32 %v5536, %v5540
        %v5547 = vadd.s32 %v5539, %v5545
        %vm5548 = vc.u32 %v5546, %v5542
        %v5549 = vsel %vm5548, 1, 0
        %v5550 = vadd.s32 %v5546, %v5542
        %v5551 = vadd.s32 %v5547, %v5549
        %v5552 = vadd.s32 %v5551, %v5541
        %v5553 = vadd.s32 %v5552, %v5543
        %v5554 = vand.u32 %v5531, 65535
        %v5555 = vshrl.u32 %v5531, 16
        %v5556 = vand.u32 %v5526, 65535
        %v5557 = vshrl.u32 %v5526, 16
        %v5558 = vmul.u32 %v5554, %v5556
        %v5559 = vmul.u32 %v5554, %v5557
        %v5560 = vmul.u32 %v5555, %v5556
        %v5561 = vmul.u32 %v5555, %v5557
        %v5562 = vshll.u32 %v5559, 16
        %v5563 = vshrl.u32 %v5559, 16
        %v5564 = vshll.u32 %v5560, 16
        %v5565 = vshrl.u32 %v5560, 16
        %vm5566 = vc.u32 %v5558, %v5562
        %v5567 = vsel %vm5566, 1, 0
        %v5568 = vadd.s32 %v5558, %v5562
        %v5569 = vadd.s32 %v5561, %v5567
        %vm5570 = vc.u32 %v5568, %v5564
        %v5571 = vsel %vm5570, 1, 0
        %v5572 = vadd.s32 %v5568, %v5564
        %v5573 = vadd.s32 %v5569, %v5571
        %v5574 = vadd.s32 %v5573, %v5563
        %v5575 = vadd.s32 %v5574, %v5565
        %v5576 = vmul.u32 %v5531, %v5522
        %v5577 = vadd.s32 %v5553, %v5572
        %vm5578 = vc.u32 %v5553, %v5572
        %v5579 = vadd.s32 %v5575, 1
        %v5580 = vsel %vm5578, %v5579, %v5575
        %v5581 = vadd.s32 %v5576, %v5580
        %v5582 = vadd.s32 %v5581, 536870912
        %v5583 = vshrl.u32 %v5582, 30
        %v5584 = vshll.u32 %v5583, 30
        %v5585 = vsub.s32 %v5581, %v5584
        %vm5586 = vcmp.lt.s32.totalorder %v5585, 0
        %v5587 = vsub.s32 0, %v5585
        %v5588 = vsel %vm5586, %v5587, %v5585
        %v5589 = vclz %v5588
        %v5590 = vsub.s32 %v5589, 2
        %vm5591 = vcmp.gt.s32.totalorder 0, %v5590
        %v5592 = vsel %vm5591, 0, %v5590
        %v5593 = vsub.s32 32, %v5592
        %v5594 = vshll.u32 %v5585, %v5592
        %v5595 = vshrl.u32 %v5577, %v5593
        %v5596 = vor.u32 %v5594, %v5595
        %v5597 = vsub.s32 4294967266, %v5592
        %v5598 = vadd.s32 %v5597, 127
        %v5599 = vshll.u32 %v5598, 23
        %v5600 = vor.u32 4788187, %v5599
        %v5601 = vand.u32 2147483647, %v5600
        %v5603 = vcvt.s32.f32 %v5596
        %v5604 = vmul.f32 %v5603, %v5601
        %v5605 = vxor.u32 %v5604, 2147483648
        %v5606 = vsel %vm5485, %v5605, %v5604
        %v5607 = vsub.s32 4, %v5583
        %v5608 = vsel %vm5485, %v5607, %v5583
        %v5609 = vsel %vm5484, %v677, %v5606
        %v5610 = vsel %vm5484, 0, %v5608
        %v5611 = vmul.f32 %v5609, %v5609
        %v5612 = vmul.f32 %v5611, -0.001358992
        %v5613 = vadd.f32 %v5612, 0.041655596
        %v5614 = vmul.f32 %v5611, %v5613
        %v5615 = vadd.f32 %v5614, -0.4999988
        %v5616 = vmul.f32 %v5611, %v5615
        %v5617 = vadd.f32 1.0, %v5616
        %v5618 = vmul.f32 %v5609, %v5609
        %v5619 = vmul.f32 %v5618, -0.00019511016
        %v5620 = vadd.f32 %v5619, 0.008332121
        %v5621 = vmul.f32 %v5618, %v5620
        %v5622 = vadd.f32 %v5621, -0.16666654
        %v5623 = vmul.f32 %v5618, %v5622
        %v5624 = vadd.f32 %v5623, 1.0
        %v5625 = vmul.f32 %v5624, %v5609
        %vm5626 = vweird.f32 %v677
        %v5627 = vadd.s32 %v5610, 3
        %v5628 = vand.u32 %v5627, 3
        %vm5629 = vcmp.lt.s32.totalorder %v5628, 2
        %vm5630 = vcmp.eq.s32.totalorder %v5628, 0
        %v5631 = vxor.u32 %v5625, 2147483648
        %v5632 = vsel %vm5630, %v5617, %v5631
        %vm5633 = vcmp.eq.s32.totalorder %v5628, 2
        %v5634 = vxor.u32 %v5617, 2147483648
        %v5635 = vsel %vm5633, %v5634, %v5625
        %v5636 = vsel %vm5629, %v5632, %v5635
        %v5637 = vsel %vm5626, nan, %v5636
        %v5638 = vld [vmem:[%s3] sm:$0xff]
        %v5639 = vld [vmem:[%s3 + $0x8] sm:$0xff]
        %v5640 = vld [vmem:[%s3 + $0x10] sm:$0xff]
        %v5641 = vld [vmem:[%s3 + $0x18] sm:$0xff]
        %v5642 = vld [vmem:[%s4] sm:$0xff]
        %v5643 = vld [vmem:[%s4 + $0x8] sm:$0xff]
        %v5644 = vld [vmem:[%s4 + $0x10] sm:$0xff]
        %v5645 = vld [vmem:[%s4 + $0x18] sm:$0xff]
        %5647 = vset.pattern.permute.xlu0 0
        %5648 = vperm.xlu0 %5647, %v5642
        %v5649 = vpop.permute.xlu0 %5648
        %5652 = vset.pattern.permute.xlu0 0
        %5653 = vperm.xlu0 %5652, %v5643
        %v5654 = vpop.permute.xlu0 %5653
        %5657 = vset.pattern.permute.xlu0 0
        %5658 = vperm.xlu0 %5657, %v5644
        %v5659 = vpop.permute.xlu0 %5658
        %5662 = vset.pattern.permute.xlu0 0
        %5663 = vperm.xlu0 %5662, %v5645
        %v5664 = vpop.permute.xlu0 %5663
        %vm5666 = vcmask 261120
        %v5668 = vsel %vm5666, %v5638, 0
        %v5671 = vsel %vm5666, %v5639, 0
        %v5674 = vsel %vm5666, %v5640, 0
        %v5677 = vsel %vm5666, %v5641, 0
        %5679 = vmatpush.msra.mxu0 0.0
        %5680 = vmatpush.msra.mxu0 0.0
        %5681 = vmatpush.msra.mxu0 0.0
        %5682 = vmatpush.msra.mxu0 0.0
        %5683 = vmatpush.msra.mxu0 0.0
        %5684 = vmatpush.msra.mxu0 0.0
        %5685 = vmatpush.msra.mxu0 0.0
        %5686 = vmatpush.msra.mxu0 0.0
        %5687 = vmatpush.msra.mxu0 0.0
        %5688 = vmatpush.msra.mxu0 0.0
        %5689 = vmatpush.msra.mxu0 0.0
        %5690 = vmatpush.msra.mxu0 0.0
        %5691 = vmatpush.msra.mxu0 %v1762
        %5692 = vmatpush.msra.mxu0 %v1452
        %5693 = vmatpush.msra.mxu0 %v1142
        %5694 = vmatpush.msra.mxu0 %v832
        %5695 = vmatmul.f32.gmra.mxu0 %v5668
        %v5696 = vpop.f32.mrf.mxu0
        %v5697 = vadd.f32 %v5649, %v5696
        %5698 = vmatmul.f32.gmra.mxu0 %v5671
        %v5699 = vpop.f32.mrf.mxu0
        %v5700 = vadd.f32 %v5654, %v5699
        %5701 = vmatmul.f32.gmra.mxu0 %v5674
        %v5702 = vpop.f32.mrf.mxu0
        %v5703 = vadd.f32 %v5659, %v5702
        %5704 = vmatmul.f32.gmra.mxu0 %v5677
        %v5705 = vpop.f32.mrf.mxu0
        %v5706 = vadd.f32 %v5664, %v5705
        %5707 = vdwg.mxu0
        %5708 = vmatpush.msra.mxu0 0.0
        %5709 = vmatpush.msra.mxu0 0.0
        %5710 = vmatpush.msra.mxu0 0.0
        %5711 = vmatpush.msra.mxu0 0.0
        %5712 = vmatpush.msra.mxu0 0.0
        %5713 = vmatpush.msra.mxu0 0.0
        %5714 = vmatpush.msra.mxu0 0.0
        %5715 = vmatpush.msra.mxu0 0.0
        %5716 = vmatpush.msra.mxu0 0.0
        %5717 = vmatpush.msra.mxu0 0.0
        %5718 = vmatpush.msra.mxu0 0.0
        %5719 = vmatpush.msra.mxu0 0.0
        %5720 = vmatpush.msra.mxu0 %v1917
        %5721 = vmatpush.msra.mxu0 %v1607
        %5722 = vmatpush.msra.mxu0 %v1297
        %5723 = vmatpush.msra.mxu0 %v987
        %5724 = vmatmul.f32.gmra.mxu0 %v5668
        %v5725 = vpop.f32.mrf.mxu0
        %v5726 = vadd.f32 %v5649, %v5725
        %5727 = vmatmul.f32.gmra.mxu0 %v5671
        %v5728 = vpop.f32.mrf.mxu0
        %v5729 = vadd.f32 %v5654, %v5728
        %5730 = vmatmul.f32.gmra.mxu0 %v5674
        %v5731 = vpop.f32.mrf.mxu0
        %v5732 = vadd.f32 %v5659, %v5731
        %5733 = vmatmul.f32.gmra.mxu0 %v5677
        %v5734 = vpop.f32.mrf.mxu0
        %v5735 = vadd.f32 %v5664, %v5734
        %5736 = vdwg.mxu0
        %v5737 = vmul.f32 %v2072, %v5697
        %v5738 = vmul.f32 %v2227, %v5726
        %v5739 = vmul.f32 %v2382, %v5700
        %v5740 = vmul.f32 %v2537, %v5729
        %v5741 = vmul.f32 %v2692, %v5703
        %v5742 = vmul.f32 %v2847, %v5732
        %v5743 = vmul.f32 %v3002, %v5706
        %v5744 = vmul.f32 %v3157, %v5735
        %s5745 = scalar_lea.vmem %s3, 32
        %v5746 = vld [vmem:[%s5745] sm:$0xff]
        %v5747 = vld [vmem:[%s5745 + $0x8] sm:$0xff]
        %v5748 = vld [vmem:[%s5745 + $0x10] sm:$0xff]
        %v5749 = vld [vmem:[%s5745 + $0x18] sm:$0xff]
        %s5750 = scalar_lea.vmem %s4, 32
        %v5751 = vld [vmem:[%s5750] sm:$0xff]
        %v5752 = vld [vmem:[%s5750 + $0x8] sm:$0xff]
        %v5753 = vld [vmem:[%s5750 + $0x10] sm:$0xff]
        %v5754 = vld [vmem:[%s5750 + $0x18] sm:$0xff]
        %5756 = vset.pattern.permute.xlu0 0
        %5757 = vperm.xlu0 %5756, %v5751
        %v5758 = vpop.permute.xlu0 %5757
        %5761 = vset.pattern.permute.xlu0 0
        %5762 = vperm.xlu0 %5761, %v5752
        %v5763 = vpop.permute.xlu0 %5762
        %5766 = vset.pattern.permute.xlu0 0
        %5767 = vperm.xlu0 %5766, %v5753
        %v5768 = vpop.permute.xlu0 %5767
        %5771 = vset.pattern.permute.xlu0 0
        %5772 = vperm.xlu0 %5771, %v5754
        %v5773 = vpop.permute.xlu0 %5772
        %v5776 = vsel %vm5666, %v5746, 0
        %v5779 = vsel %vm5666, %v5747, 0
        %v5782 = vsel %vm5666, %v5748, 0
        %v5785 = vsel %vm5666, %v5749, 0
        %5787 = vmatpush.msra.mxu0 0.0
        %5788 = vmatpush.msra.mxu0 0.0
        %5789 = vmatpush.msra.mxu0 0.0
        %5790 = vmatpush.msra.mxu0 0.0
        %5791 = vmatpush.msra.mxu0 0.0
        %5792 = vmatpush.msra.mxu0 0.0
        %5793 = vmatpush.msra.mxu0 0.0
        %5794 = vmatpush.msra.mxu0 0.0
        %5795 = vmatpush.msra.mxu0 0.0
        %5796 = vmatpush.msra.mxu0 0.0
        %5797 = vmatpush.msra.mxu0 0.0
        %5798 = vmatpush.msra.mxu0 0.0
        %5799 = vmatpush.msra.mxu0 %v5743
        %5800 = vmatpush.msra.mxu0 %v5741
        %5801 = vmatpush.msra.mxu0 %v5739
        %5802 = vmatpush.msra.mxu0 %v5737
        %5803 = vmatmul.f32.gmra.mxu0 %v5776
        %v5804 = vpop.f32.mrf.mxu0
        %v5805 = vadd.f32 %v5758, %v5804
        %5806 = vmatmul.f32.gmra.mxu0 %v5779
        %v5807 = vpop.f32.mrf.mxu0
        %v5808 = vadd.f32 %v5763, %v5807
        %5809 = vmatmul.f32.gmra.mxu0 %v5782
        %v5810 = vpop.f32.mrf.mxu0
        %v5811 = vadd.f32 %v5768, %v5810
        %5812 = vmatmul.f32.gmra.mxu0 %v5785
        %v5813 = vpop.f32.mrf.mxu0
        %v5814 = vadd.f32 %v5773, %v5813
        %5815 = vdwg.mxu0
        %5816 = vmatpush.msra.mxu0 0.0
        %5817 = vmatpush.msra.mxu0 0.0
        %5818 = vmatpush.msra.mxu0 0.0
        %5819 = vmatpush.msra.mxu0 0.0
        %5820 = vmatpush.msra.mxu0 0.0
        %5821 = vmatpush.msra.mxu0 0.0
        %5822 = vmatpush.msra.mxu0 0.0
        %5823 = vmatpush.msra.mxu0 0.0
        %5824 = vmatpush.msra.mxu0 0.0
        %5825 = vmatpush.msra.mxu0 0.0
        %5826 = vmatpush.msra.mxu0 0.0
        %5827 = vmatpush.msra.mxu0 0.0
        %5828 = vmatpush.msra.mxu0 %v5744
        %5829 = vmatpush.msra.mxu0 %v5742
        %5830 = vmatpush.msra.mxu0 %v5740
        %5831 = vmatpush.msra.mxu0 %v5738
        %5832 = vmatmul.f32.gmra.mxu0 %v5776
        %v5833 = vpop.f32.mrf.mxu0
        %v5834 = vadd.f32 %v5758, %v5833
        %5835 = vmatmul.f32.gmra.mxu0 %v5779
        %v5836 = vpop.f32.mrf.mxu0
        %v5837 = vadd.f32 %v5763, %v5836
        %5838 = vmatmul.f32.gmra.mxu0 %v5782
        %v5839 = vpop.f32.mrf.mxu0
        %v5840 = vadd.f32 %v5768, %v5839
        %5841 = vmatmul.f32.gmra.mxu0 %v5785
        %v5842 = vpop.f32.mrf.mxu0
        %v5843 = vadd.f32 %v5773, %v5842
        %5844 = vdwg.mxu0
        %v5845 = vmul.f32 %v3312, %v5805
        %v5846 = vmul.f32 %v3467, %v5834
        %v5847 = vmul.f32 %v3622, %v5808
        %v5848 = vmul.f32 %v3777, %v5837
        %v5849 = vmul.f32 %v3932, %v5811
        %v5850 = vmul.f32 %v4087, %v5840
        %v5851 = vmul.f32 %v4242, %v5814
        %v5852 = vmul.f32 %v4397, %v5843
        %s5853 = scalar_lea.vmem %s3, 64
        %v5854 = vld [vmem:[%s5853] sm:$0xff]
        %v5855 = vld [vmem:[%s5853 + $0x8] sm:$0xff]
        %v5856 = vld [vmem:[%s5853 + $0x10] sm:$0xff]
        %v5857 = vld [vmem:[%s5853 + $0x18] sm:$0xff]
        %s5858 = scalar_lea.vmem %s4, 64
        %v5859 = vld [vmem:[%s5858] sm:$0xff]
        %v5860 = vld [vmem:[%s5858 + $0x8] sm:$0xff]
        %v5861 = vld [vmem:[%s5858 + $0x10] sm:$0xff]
        %v5862 = vld [vmem:[%s5858 + $0x18] sm:$0xff]
        %5864 = vset.pattern.permute.xlu0 0
        %5865 = vperm.xlu0 %5864, %v5859
        %v5866 = vpop.permute.xlu0 %5865
        %5869 = vset.pattern.permute.xlu0 0
        %5870 = vperm.xlu0 %5869, %v5860
        %v5871 = vpop.permute.xlu0 %5870
        %5874 = vset.pattern.permute.xlu0 0
        %5875 = vperm.xlu0 %5874, %v5861
        %v5876 = vpop.permute.xlu0 %5875
        %5879 = vset.pattern.permute.xlu0 0
        %5880 = vperm.xlu0 %5879, %v5862
        %v5881 = vpop.permute.xlu0 %5880
        %v5884 = vsel %vm5666, %v5854, 0
        %v5887 = vsel %vm5666, %v5855, 0
        %v5890 = vsel %vm5666, %v5856, 0
        %v5893 = vsel %vm5666, %v5857, 0
        %5895 = vmatpush.msra.mxu0 0.0
        %5896 = vmatpush.msra.mxu0 0.0
        %5897 = vmatpush.msra.mxu0 0.0
        %5898 = vmatpush.msra.mxu0 0.0
        %5899 = vmatpush.msra.mxu0 0.0
        %5900 = vmatpush.msra.mxu0 0.0
        %5901 = vmatpush.msra.mxu0 0.0
        %5902 = vmatpush.msra.mxu0 0.0
        %5903 = vmatpush.msra.mxu0 0.0
        %5904 = vmatpush.msra.mxu0 0.0
        %5905 = vmatpush.msra.mxu0 0.0
        %5906 = vmatpush.msra.mxu0 0.0
        %5907 = vmatpush.msra.mxu0 %v5851
        %5908 = vmatpush.msra.mxu0 %v5849
        %5909 = vmatpush.msra.mxu0 %v5847
        %5910 = vmatpush.msra.mxu0 %v5845
        %5911 = vmatmul.f32.gmra.mxu0 %v5884
        %v5912 = vpop.f32.mrf.mxu0
        %v5913 = vadd.f32 %v5866, %v5912
        %5914 = vmatmul.f32.gmra.mxu0 %v5887
        %v5915 = vpop.f32.mrf.mxu0
        %v5916 = vadd.f32 %v5871, %v5915
        %5917 = vmatmul.f32.gmra.mxu0 %v5890
        %v5918 = vpop.f32.mrf.mxu0
        %v5919 = vadd.f32 %v5876, %v5918
        %5920 = vmatmul.f32.gmra.mxu0 %v5893
        %v5921 = vpop.f32.mrf.mxu0
        %v5922 = vadd.f32 %v5881, %v5921
        %5923 = vdwg.mxu0
        %5924 = vmatpush.msra.mxu0 0.0
        %5925 = vmatpush.msra.mxu0 0.0
        %5926 = vmatpush.msra.mxu0 0.0
        %5927 = vmatpush.msra.mxu0 0.0
        %5928 = vmatpush.msra.mxu0 0.0
        %5929 = vmatpush.msra.mxu0 0.0
        %5930 = vmatpush.msra.mxu0 0.0
        %5931 = vmatpush.msra.mxu0 0.0
        %5932 = vmatpush.msra.mxu0 0.0
        %5933 = vmatpush.msra.mxu0 0.0
        %5934 = vmatpush.msra.mxu0 0.0
        %5935 = vmatpush.msra.mxu0 0.0
        %5936 = vmatpush.msra.mxu0 %v5852
        %5937 = vmatpush.msra.mxu0 %v5850
        %5938 = vmatpush.msra.mxu0 %v5848
        %5939 = vmatpush.msra.mxu0 %v5846
        %5940 = vmatmul.f32.gmra.mxu0 %v5884
        %v5941 = vpop.f32.mrf.mxu0
        %v5942 = vadd.f32 %v5866, %v5941
        %5943 = vmatmul.f32.gmra.mxu0 %v5887
        %v5944 = vpop.f32.mrf.mxu0
        %v5945 = vadd.f32 %v5871, %v5944
        %5946 = vmatmul.f32.gmra.mxu0 %v5890
        %v5947 = vpop.f32.mrf.mxu0
        %v5948 = vadd.f32 %v5876, %v5947
        %5949 = vmatmul.f32.gmra.mxu0 %v5893
        %v5950 = vpop.f32.mrf.mxu0
        %v5951 = vadd.f32 %v5881, %v5950
        %5952 = vdwg.mxu0
        %v5953 = vmul.f32 %v4552, %v5913
        %v5954 = vmul.f32 %v4707, %v5942
        %v5955 = vmul.f32 %v4862, %v5916
        %v5956 = vmul.f32 %v5017, %v5945
        %v5957 = vmul.f32 %v5172, %v5919
        %v5958 = vmul.f32 %v5327, %v5948
        %v5959 = vmul.f32 %v5482, %v5922
        %v5960 = vmul.f32 %v5637, %v5951
        %v5961 = vld [vmem:[%s5] sm:$0x7]
        %v5962 = vld [vmem:[%s6] sm:$0x7]
        %5964 = vset.pattern.permute.xlu0 0
        %5965 = vperm.xlu0 %5964, %v5962
        %v5966 = vpop.permute.xlu0 %5965
        %v5969 = vsel %vm5666, %v5961, 0
        %5971 = vmatpush.msra.mxu0 0.0
        %5972 = vmatpush.msra.mxu0 0.0
        %5973 = vmatpush.msra.mxu0 0.0
        %5974 = vmatpush.msra.mxu0 0.0
        %5975 = vmatpush.msra.mxu0 0.0
        %5976 = vmatpush.msra.mxu0 0.0
        %5977 = vmatpush.msra.mxu0 0.0
        %5978 = vmatpush.msra.mxu0 0.0
        %5979 = vmatpush.msra.mxu0 0.0
        %5980 = vmatpush.msra.mxu0 0.0
        %5981 = vmatpush.msra.mxu0 0.0
        %5982 = vmatpush.msra.mxu0 0.0
        %5983 = vmatpush.msra.mxu0 %v5959
        %5984 = vmatpush.msra.mxu0 %v5957
        %5985 = vmatpush.msra.mxu0 %v5955
        %5986 = vmatpush.msra.mxu0 %v5953
        %5987 = vmatmul.f32.gmra.mxu0 %v5969
        %v5988 = vpop.f32.mrf.mxu0
        %v5989 = vadd.f32 %v5966, %v5988
        %5990 = vdwg.mxu0
        %5991 = vmatpush.msra.mxu0 0.0
        %5992 = vmatpush.msra.mxu0 0.0
        %5993 = vmatpush.msra.mxu0 0.0
        %5994 = vmatpush.msra.mxu0 0.0
        %5995 = vmatpush.msra.mxu0 0.0
        %5996 = vmatpush.msra.mxu0 0.0
        %5997 = vmatpush.msra.mxu0 0.0
        %5998 = vmatpush.msra.mxu0 0.0
        %5999 = vmatpush.msra.mxu0 0.0
        %6000 = vmatpush.msra.mxu0 0.0
        %6001 = vmatpush.msra.mxu0 0.0
        %6002 = vmatpush.msra.mxu0 0.0
        %6003 = vmatpush.msra.mxu0 %v5960
        %6004 = vmatpush.msra.mxu0 %v5958
        %6005 = vmatpush.msra.mxu0 %v5956
        %6006 = vmatpush.msra.mxu0 %v5954
        %6007 = vmatmul.f32.gmra.mxu0 %v5969
        %v6008 = vpop.f32.mrf.mxu0
        %v6009 = vadd.f32 %v5966, %v6008
        %6010 = vdwg.mxu0
        %v6013 = vrot.slane %v6009, 4
        %vm6014 = vcmask 1043456
        %v6015 = vsel %vm6014, %v5989, %v6013
        %6017 = vst [vmem:[%s272] sm:$0x77] %v6015
        %s6018 = sand.u32 %s181, 1
        %s6019 = scalar_lea.sflag [#allocation3], %s6018
        %s6020 = sand.u32 %s181, 1
        %s6021 = smul.addr %s6020, 8
        %s6022 = scalar_lea.vmem [#allocation2], %s6021
        // Predicated region
        $region49: #{tpu_custom_call.1} parent=47 // pred_check
          %p6023 = pneg %p191
        $region50: #{tpu_custom_call.1} parent=47 // pred_check_branch
          %6025 = sbr.rel (%p6023) target = $region52
        $region51: #{tpu_custom_call.1} parent=47 // pred_region
          %s6026 = smul.u32 2, %s21
          %6028 = vsyncadd %s6019, 0
          %s6029 = smul.addr %s6026, 4
          %s6030 = scalar_lea.hbm %s7, %s6029
          %s6032 = sshll.u32 %s6022, 4
          %s6033 = int_to_ptr.vmem [resolvable:$true] %s6032
          %s6034 = sshll.u32 %s6030, 4
          %s6035 = int_to_ptr.hbm [resolvable:$true] %s6034
          %6037 = dma.vmem_to_hbm [thread:$0]  %s6033, 128, %s6035, %s6019
        $region52: #{tpu_custom_call.1} parent=47 // pred_fallthru
          _
      $region48: #{tpu_custom_call.1} parent=5 // pred_fallthru
        _
      %p6038 = scmp.le.s32.totalorder 2, %s16
      // Predicated region
      $region53: #{tpu_custom_call.1} parent=5 // pred_check
        %p6039 = pneg %p6038
      $region54: #{tpu_custom_call.1} parent=5 // pred_check_branch
        %6041 = sbr.rel (%p6039) target = $region56
      $region55: #{tpu_custom_call.1} parent=5 // pred_region
        %s6042 = ssub.s32 %s16, 2
        // Predicated region
        $region57: #{tpu_custom_call.1} parent=55 // pred_check
          %p6043 = pneg %p197
        $region58: #{tpu_custom_call.1} parent=55 // pred_check_branch
          %6045 = sbr.rel (%p6043) target = $region60
        $region59: #{tpu_custom_call.1} parent=55 // pred_region
          %s6046 = sand.u32 %s182, 1
          %s6047 = scalar_lea.sflag [#allocation3], %s6046
          %s6048 = sand.u32 %s182, 1
          %s6049 = smul.addr %s6048, 8
          %s6050 = scalar_lea.vmem [#allocation2], %s6049
          %6052 = dma.done %s6047, 128
        $region60: #{tpu_custom_call.1} parent=55 // pred_fallthru
          _
      $region56: #{tpu_custom_call.1} parent=5 // pred_fallthru
        _
    $region6: #{tpu_custom_call.1} parent=1 // loop_footer
      %s20 = sadd.s32 1, %s16
    $region7: #{tpu_custom_call.1} parent=1 // loop_footer_branch
      %15 = sbr.rel target = $region3
    $region8: #{tpu_custom_call.1} parent=1 // loop_exit
      _
    %6053 = vsyncpa [#allocation3], 1
    %s6054 = scalar_lea.sflag [#allocation3], 1
    %6055 = vsyncpa %s6054, 1

</llo_original>
